<compile_context>
chip_gen: v6e
topology: v6e:2x2x1
jax: 0.10.0
libtpu: 0.0.40
codegen_flags: <defaults>
</compile_context>

<pallas_src>
import functools

import jax
import jax.numpy as jnp
from jax.experimental import pallas as pl
from jax.experimental.pallas import tpu as pltpu


# ----------------------------------------------------------------------------
# model-size constants (synthetic small SiamRPN++-shaped network)
# ----------------------------------------------------------------------------
FEAT1, FEAT2, NECK_CH, HEAD_CH = 8, 16, 16, 16
ANCHOR_NUM = 5
CLS_OUT = 2 * ANCHOR_NUM          # 10
LOC_OUT = 4 * ANCHOR_NUM          # 20
OUT_CH = CLS_OUT + LOC_OUT        # 30 (fused cls||loc output)
C2 = 2 * HEAD_CH                  # 32 (fused cls||loc head width)
CIN = 4
CIN_PAD = 8                       # pad input channels to a sublane-friendly K


def _round_up(x, m):
    return (x + m - 1) // m * m


# ----------------------------------------------------------------------------
# Kernel 1: fused backbone + neck   (3x3 conv -> 3x3 conv -> 1x1 conv)
# ----------------------------------------------------------------------------
def _features_neck_kernel(x_ref, w1_ref, b1_ref, w2_ref, b2_ref, wn_ref, bn_ref,
                          out_ref, buf1, buf2, *, W, HW):
    """Activations are flat [rows, C] (row = h*W + w), channels on lanes.

    Border rows whose windows wrap around the grid hold finite garbage; any
    *valid* position of a later stage only ever reads *valid* positions of the
    previous stage, and the wrapper crops the final valid region.
    """
    cin = x_ref.shape[1]
    f1 = buf1.shape[1]
    f2 = buf2.shape[1]

    # zero scratch once so pad rows read by later stages are defined/finite
    buf1[...] = jnp.zeros_like(buf1)
    buf2[...] = jnp.zeros_like(buf2)

    # ---- stage 1: 3x3 conv (cin -> f1) + ReLU (im2col fused: 9 tap dots) ----
    acc = jnp.zeros((HW, f1), jnp.float32)
    for i in range(3):
        for j in range(3):
            a = x_ref[pl.ds(i * W + j, HW), :].astype(jnp.bfloat16)
            wt = w1_ref[pl.ds((i * 3 + j) * cin, cin), :].astype(jnp.bfloat16)
            acc += jnp.dot(a, wt, preferred_element_type=jnp.float32)
    buf1[0:HW, :] = jnp.maximum(acc + b1_ref[...], 0.0)

    # ---- stage 2: 3x3 conv (f1 -> f2) + ReLU -------------------------------
    acc = jnp.zeros((HW, f2), jnp.float32)
    for i in range(3):
        for j in range(3):
            a = buf1[pl.ds(i * W + j, HW), :].astype(jnp.bfloat16)
            wt = w2_ref[pl.ds((i * 3 + j) * f1, f1), :].astype(jnp.bfloat16)
            acc += jnp.dot(a, wt, preferred_element_type=jnp.float32)
    buf2[0:HW, :] = jnp.maximum(acc + b2_ref[...], 0.0)

    # ---- neck: 1x1 conv (f2 -> neck), no ReLU (all rows, pad rows -> bias) --
    out_ref[...] = jnp.dot(buf2[...].astype(jnp.bfloat16),
                           wn_ref[...].astype(jnp.bfloat16),
                           preferred_element_type=jnp.float32) + bn_ref[...]


# ----------------------------------------------------------------------------
# Kernel 2: fused RPN head (conv_kernel || conv_search || dw-xcorr || 1x1 head)
# ----------------------------------------------------------------------------
def _rpn_head_kernel(zf_ref, xf_ref, wzk_ref, bzk_ref, wxs_ref, bxs_ref,
                     wh_ref, bh_ref, wo_ref, bo_ref,
                     out_ref, zk_buf, xs_buf,
                     *, WZ, HWZ, WX, HWX, KH, KW, MOUT):
    neck = zf_ref.shape[1]
    c2 = zk_buf.shape[1]          # fused cls||loc channel width

    # fused conv_kernel on the template features: 3x3 + ReLU -> zk
    acc = jnp.zeros((HWZ, c2), jnp.float32)
    for i in range(3):
        for j in range(3):
            a = zf_ref[pl.ds(i * WZ + j, HWZ), :].astype(jnp.bfloat16)
            wt = wzk_ref[pl.ds((i * 3 + j) * neck, neck), :].astype(jnp.bfloat16)
            acc += jnp.dot(a, wt, preferred_element_type=jnp.float32)
    zk_buf[...] = jnp.maximum(acc + bzk_ref[...], 0.0)

    # fused conv_search on the search features: 3x3 + ReLU -> xs
    acc = jnp.zeros((HWX, c2), jnp.float32)
    for i in range(3):
        for j in range(3):
            a = xf_ref[pl.ds(i * WX + j, HWX), :].astype(jnp.bfloat16)
            wt = wxs_ref[pl.ds((i * 3 + j) * neck, neck), :].astype(jnp.bfloat16)
            acc += jnp.dot(a, wt, preferred_element_type=jnp.float32)
    xs_buf[...] = jnp.maximum(acc + bxs_ref[...], 0.0)

    # depthwise cross-correlation: channels on lanes, accumulate over the
    # KH*KW template taps with VPU FMAs (no XLU reduction, no patch tensor)
    feat = jnp.zeros((MOUT, c2), jnp.float32)
    for i in range(KH):
        for j in range(KW):
            feat += (xs_buf[pl.ds(i * WX + j, MOUT), :] *
                     zk_buf[pl.ds(i * WZ + j, 1), :])

    # fused 1x1 head convs (block-diagonal weights keep cls/loc independent)
    h = jnp.maximum(
        jnp.dot(feat.astype(jnp.bfloat16), wh_ref[...].astype(jnp.bfloat16),
                preferred_element_type=jnp.float32) + bh_ref[...], 0.0)
    out_ref[...] = jnp.dot(h.astype(jnp.bfloat16), wo_ref[...].astype(jnp.bfloat16),
                           preferred_element_type=jnp.float32) + bo_ref[...]


# ----------------------------------------------------------------------------
# pallas_call wrappers (jitted so the thin layout glue fuses into one program)
# ----------------------------------------------------------------------------
@jax.jit
def _features_neck_call(w1, b1, w2, b2, wn, bn, x_nchw):
    B, C, H, W = x_nchw.shape
    HW = H * W
    rows = _round_up(HW + 2 * W + 2, 8)          # room for the max tap offset
    x = jnp.transpose(x_nchw, (0, 2, 3, 1)).reshape(B, HW, C)
    x = jnp.pad(x, ((0, 0), (0, rows - HW), (0, CIN_PAD - C)))

    kernel = functools.partial(_features_neck_kernel, W=W, HW=HW)
    flops = 2 * B * HW * (9 * CIN_PAD * FEAT1 + 9 * FEAT1 * FEAT2
                          + FEAT2 * NECK_CH)
    return pl.pallas_call(
        kernel,
        out_shape=jax.ShapeDtypeStruct((B, rows, NECK_CH), jnp.float32),
        grid=(B,),
        in_specs=[
            pl.BlockSpec((None, rows, CIN_PAD), lambda b: (b, 0, 0)),
            pl.BlockSpec(w1.shape, lambda b: (0, 0)),
            pl.BlockSpec(b1.shape, lambda b: (0, 0)),
            pl.BlockSpec(w2.shape, lambda b: (0, 0)),
            pl.BlockSpec(b2.shape, lambda b: (0, 0)),
            pl.BlockSpec(wn.shape, lambda b: (0, 0)),
            pl.BlockSpec(bn.shape, lambda b: (0, 0)),
        ],
        out_specs=pl.BlockSpec((None, rows, NECK_CH), lambda b: (b, 0, 0)),
        scratch_shapes=[pltpu.VMEM((rows, FEAT1), jnp.float32),
                        pltpu.VMEM((rows, FEAT2), jnp.float32)],
        compiler_params=pltpu.CompilerParams(
            dimension_semantics=("parallel",)),
        cost_estimate=pl.CostEstimate(
            flops=flops, transcendentals=0,
            bytes_accessed=4 * (x.size + B * rows * NECK_CH)),
    )(x, w1, b1, w2, b2, wn, bn)


@functools.partial(jax.jit, static_argnames=("hz", "wz", "hx", "wx"))
def _rpn_head_call(wzk, bzk, wxs, bxs, wh, bh, wo, bo, zf, xf,
                   *, hz, wz, hx, wx):
    B = zf.shape[0]
    rows_z, rows_x = zf.shape[1], xf.shape[1]
    hwz, hwx = hz * wz, hx * wx
    kh, kw = hz - 6, wz - 6                # dw-xcorr template extent (6x6 here)
    ho, wo_sp = hx - hz + 1, wx - wz + 1   # final correlation map size (5x5)
    mout = ho * wx                         # rows computed so the crop reshapes

    kernel = functools.partial(_rpn_head_kernel, WZ=wz, HWZ=hwz, WX=wx,
                               HWX=hwx, KH=kh, KW=kw, MOUT=mout)
    flops = 2 * B * (hwz * 9 * NECK_CH * C2 + hwx * 9 * NECK_CH * C2
                     + mout * kh * kw * C2 + mout * C2 * C2 + mout * C2 * OUT_CH)
    out = pl.pallas_call(
        kernel,
        out_shape=jax.ShapeDtypeStruct((B, mout, OUT_CH), jnp.float32),
        grid=(B,),
        in_specs=[
            pl.BlockSpec((None, rows_z, NECK_CH), lambda b: (b, 0, 0)),
            pl.BlockSpec((None, rows_x, NECK_CH), lambda b: (b, 0, 0)),
            pl.BlockSpec(wzk.shape, lambda b: (0, 0)),
            pl.BlockSpec(bzk.shape, lambda b: (0, 0)),
            pl.BlockSpec(wxs.shape, lambda b: (0, 0)),
            pl.BlockSpec(bxs.shape, lambda b: (0, 0)),
            pl.BlockSpec(wh.shape, lambda b: (0, 0)),
            pl.BlockSpec(bh.shape, lambda b: (0, 0)),
            pl.BlockSpec(wo.shape, lambda b: (0, 0)),
            pl.BlockSpec(bo.shape, lambda b: (0, 0)),
        ],
        out_specs=pl.BlockSpec((None, mout, OUT_CH), lambda b: (b, 0, 0)),
        scratch_shapes=[pltpu.VMEM((hwz, C2), jnp.float32),
                        pltpu.VMEM((hwx, C2), jnp.float32)],
        compiler_params=pltpu.CompilerParams(
            dimension_semantics=("parallel",)),
        cost_estimate=pl.CostEstimate(
            flops=flops, transcendentals=0,
            bytes_accessed=4 * (zf.size + xf.size + B * mout * OUT_CH)),
    )(zf, xf, wzk, bzk, wxs, bxs, wh, bh, wo, bo)

    # crop the valid HoxWo region, split fused channels, return NCHW
    out = out.reshape(B, ho, wx, OUT_CH)[:, :, :wo_sp, :]
    cls = jnp.transpose(out[..., :CLS_OUT], (0, 3, 1, 2))
    loc = jnp.transpose(out[..., CLS_OUT:], (0, 3, 1, 2))
    return cls, loc


# ----------------------------------------------------------------------------
# parameter construction / packing
# ----------------------------------------------------------------------------
def _conv_params(key, cout, cin, kh, kw):
    kw_, kb_ = jax.random.split(key)
    w = 0.1 * jax.random.normal(kw_, (cout, cin, kh, kw), dtype=jnp.float32)
    b = 0.01 * jax.random.normal(kb_, (cout,), dtype=jnp.float32)
    return w, b


def _prep_conv_w(w, cin_pad=None):
    """[Cout, Cin, kh, kw] -> [kh*kw*Cin(_pad), Cout] matmul weight (tap-major)."""
    cout, cin, kh, kw = w.shape
    if cin_pad is not None and cin_pad != cin:
        w = jnp.pad(w, ((0, 0), (0, cin_pad - cin), (0, 0), (0, 0)))
    return jnp.transpose(w, (2, 3, 1, 0)).reshape(kh * kw * w.shape[1], cout)


class SiamRPNPP:
    # TODO(synk): full SiamRPN++ uses a ResNet-50 multi-level backbone with BN
    # and a weighted multi-branch head; a small single-level model with the
    # same dataflow (features -> neck -> depthwise-xcorr RPN head) is used.
    def __init__(self, key, in_ch=CIN):
        ks = jax.random.split(key, 11)
        self.raw = {
            "f1": _conv_params(ks[0], FEAT1, in_ch, 3, 3),
            "f2": _conv_params(ks[1], FEAT2, FEAT1, 3, 3),
            "nk": _conv_params(ks[2], NECK_CH, FEAT2, 1, 1),
            "cls_k": _conv_params(ks[3], HEAD_CH, NECK_CH, 3, 3),
            "cls_s": _conv_params(ks[4], HEAD_CH, NECK_CH, 3, 3),
            "cls_h": _conv_params(ks[5], HEAD_CH, HEAD_CH, 1, 1),
            "cls_o": _conv_params(ks[6], CLS_OUT, HEAD_CH, 1, 1),
            "loc_k": _conv_params(ks[7], HEAD_CH, NECK_CH, 3, 3),
            "loc_s": _conv_params(ks[8], HEAD_CH, NECK_CH, 3, 3),
            "loc_h": _conv_params(ks[9], HEAD_CH, HEAD_CH, 1, 1),
            "loc_o": _conv_params(ks[10], LOC_OUT, HEAD_CH, 1, 1),
        }
        r = self.raw
        # weights pre-reshaped to [K, N] once at init (no per-call reshapes)
        self.w1 = _prep_conv_w(r["f1"][0], CIN_PAD)
        self.b1 = r["f1"][1].reshape(1, -1)
        self.w2 = _prep_conv_w(r["f2"][0])
        self.b2 = r["f2"][1].reshape(1, -1)
        self.wn = _prep_conv_w(r["nk"][0])
        self.bn = r["nk"][1].reshape(1, -1)
        # cls/loc fused along Cout (shared input) ...
        self.wzk = jnp.concatenate([_prep_conv_w(r["cls_k"][0]),
                                    _prep_conv_w(r["loc_k"][0])], axis=1)
        self.bzk = jnp.concatenate([r["cls_k"][1], r["loc_k"][1]]).reshape(1, -1)
        self.wxs = jnp.concatenate([_prep_conv_w(r["cls_s"][0]),
                                    _prep_conv_w(r["loc_s"][0])], axis=1)
        self.bxs = jnp.concatenate([r["cls_s"][1], r["loc_s"][1]]).reshape(1, -1)
        # ... block-diagonal for the per-branch 1x1 head convs
        wh = jnp.zeros((C2, C2), jnp.float32)
        wh = wh.at[:HEAD_CH, :HEAD_CH].set(_prep_conv_w(r["cls_h"][0]))
        wh = wh.at[HEAD_CH:, HEAD_CH:].set(_prep_conv_w(r["loc_h"][0]))
        self.wh = wh
        self.bh = jnp.concatenate([r["cls_h"][1], r["loc_h"][1]]).reshape(1, -1)
        wo = jnp.zeros((C2, OUT_CH), jnp.float32)
        wo = wo.at[:HEAD_CH, :CLS_OUT].set(_prep_conv_w(r["cls_o"][0]))
        wo = wo.at[HEAD_CH:, CLS_OUT:].set(_prep_conv_w(r["loc_o"][0]))
        self.wo = wo
        self.bo = jnp.concatenate([r["cls_o"][1], r["loc_o"][1]]).reshape(1, -1)

    # features + neck are fused into a single pallas_call
    def features_neck(self, x_nchw):
        out = _features_neck_call(self.w1, self.b1, self.w2, self.b2,
                                  self.wn, self.bn, x_nchw)
        return out, (int(x_nchw.shape[2]), int(x_nchw.shape[3]))

    def head(self, zf_pack, xf_pack):
        zf, (hz, wz) = zf_pack
        xf, (hx, wx) = xf_pack
        return _rpn_head_call(self.wzk, self.bzk, self.wxs, self.bxs,
                              self.wh, self.bh, self.wo, self.bo,
                              zf, xf, hz=hz, wz=wz, hx=hx, wx=wx)


class SiamRPNPP_N:
    def __init__(self, tracker_name):
        self.tracker_name = tracker_name
        self.model = SiamRPNPP(jax.random.PRNGKey(0))
        self.zf = None

    def temple(self, z):
        self.zf = self.model.features_neck(z)      # features -> neck

    def forward(self, x):
        xf = self.model.features_neck(x)           # features -> neck
        cls, loc = self.model.head(self.zf, xf)
        return (loc, cls)


# ----------------------------------------------------------------------------
# pure-JAX (XLA) reference, used only for a loose correctness check in main
# ----------------------------------------------------------------------------
def _ref_conv(x, wb, relu):
    w, b = wb
    y = jax.lax.conv_general_dilated(
        x, w, (1, 1), "VALID", dimension_numbers=("NCHW", "OIHW", "NCHW"))
    y = y + b.reshape(1, -1, 1, 1)
    return jnp.maximum(y, 0.0) if relu else y


def _ref_xcorr_depthwise(x, k):
    B, C = x.shape[:2]
    outs = []
    for i in range(B):
        outs.append(jax.lax.conv_general_dilated(
            x[i:i + 1], k[i][:, None], (1, 1), "VALID",
            dimension_numbers=("NCHW", "OIHW", "NCHW"),
            feature_group_count=C))
    return jnp.concatenate(outs, axis=0)


def _ref_forward(raw, z, x):
    def feat_neck(t):
        t = _ref_conv(t, raw["f1"], True)
        t = _ref_conv(t, raw["f2"], True)
        return _ref_conv(t, raw["nk"], False)

    zf, xf = feat_neck(z), feat_neck(x)

    def branch(pk, ps, ph, po):
        zk = _ref_conv(zf, raw[pk], True)
        xs = _ref_conv(xf, raw[ps], True)
        f = _ref_xcorr_depthwise(xs, zk)
        h = _ref_conv(f, raw[ph], True)
        return _ref_conv(h, raw[po], False)

    cls = branch("cls_k", "cls_s", "cls_h", "cls_o")
    loc = branch("loc_k", "loc_s", "loc_h", "loc_o")
    return loc, cls


# ----------------------------------------------------------------------------
if __name__ == "__main__":
    key = jax.random.PRNGKey(0)
    kz, kx = jax.random.split(key)
    z = jax.random.normal(kz, (2, CIN, 12, 12), dtype=jnp.float32)  # template
    x = jax.random.normal(kx, (2, CIN, 16, 16), dtype=jnp.float32)  # search

    tracker = SiamRPNPP_N("SiamRPNpp")
    tracker.temple(z)
    loc, cls = tracker.forward(x)
    loc = jax.block_until_ready(loc)
    cls = jax.block_until_ready(cls)

    assert loc.shape == (2, LOC_OUT, 5, 5), loc.shape
    assert cls.shape == (2, CLS_OUT, 5, 5), cls.shape
    assert bool(jnp.all(jnp.isfinite(loc))) and bool(jnp.all(jnp.isfinite(cls)))

    # loose tolerance: Pallas kernels feed the MXU with bf16 operands
    # (f32 accumulation), the reference is plain XLA convs.
    loc_ref, cls_ref = _ref_forward(tracker.model.raw, z, x)
    err = max(float(jnp.max(jnp.abs(loc - loc_ref))),
              float(jnp.max(jnp.abs(cls - cls_ref))))
    assert err < 1e-1, f"max abs diff vs reference too large: {err}"

    print("KERNEL_OK")
</pallas_src>

<mosaic_0001>
module attributes {stable_mosaic.version = 11 : i64} {
  func.func @_features_neck_kernel(%arg0: i32, %arg1: memref<1x176x8xf32, #tpu.memory_space<vmem>>, %arg2: memref<72x8xf32, #tpu.memory_space<vmem>>, %arg3: memref<1x8xf32, #tpu.memory_space<vmem>>, %arg4: memref<72x16xf32, #tpu.memory_space<vmem>>, %arg5: memref<1x16xf32, #tpu.memory_space<vmem>>, %arg6: memref<16x16xf32, #tpu.memory_space<vmem>>, %arg7: memref<1x16xf32, #tpu.memory_space<vmem>>, %arg8: memref<1x176x16xf32, #tpu.memory_space<vmem>>, %arg9: memref<176x8xf32, #tpu.memory_space<vmem>>, %arg10: memref<176x16xf32, #tpu.memory_space<vmem>>) attributes {dimension_semantics = [#tpu.dimension_semantics<parallel>], iteration_bounds = array<i64: 2>, scalar_prefetch = 0 : i64, scratch_operands = 2 : i64, tpu.core_type = #tpu.core_type<tc>, window_params = [{transform_indices = @transform_0, window_bounds = array<i64: 1, 176, 8>}, {pipeline_mode = #tpu.pipeline_mode<synchronous>, transform_indices = @transform_1, window_bounds = array<i64: 72, 8>}, {pipeline_mode = #tpu.pipeline_mode<synchronous>, transform_indices = @transform_2, window_bounds = array<i64: 1, 8>}, {pipeline_mode = #tpu.pipeline_mode<synchronous>, transform_indices = @transform_3, window_bounds = array<i64: 72, 16>}, {pipeline_mode = #tpu.pipeline_mode<synchronous>, transform_indices = @transform_4, window_bounds = array<i64: 1, 16>}, {pipeline_mode = #tpu.pipeline_mode<synchronous>, transform_indices = @transform_5, window_bounds = array<i64: 16, 16>}, {pipeline_mode = #tpu.pipeline_mode<synchronous>, transform_indices = @transform_6, window_bounds = array<i64: 1, 16>}, {transform_indices = @transform_7, window_bounds = array<i64: 1, 176, 16>}]} {
    %cst = arith.constant 0.000000e+00 : f32
    %0 = vector.broadcast %cst : f32 to vector<176x8xf32>
    %c0 = arith.constant 0 : index
    %c0_0 = arith.constant 0 : index
    %1 = vector.load %arg9[%c0, %c0_0] : memref<176x8xf32, #tpu.memory_space<vmem>>, vector<176x8xf32>
    tpu.vector_store %arg9[%c0, %c0_0], %0 {strides = array<i32>} : memref<176x8xf32, #tpu.memory_space<vmem>>, vector<176x8xf32>,
    %cst_1 = arith.constant 0.000000e+00 : f32
    %2 = vector.broadcast %cst_1 : f32 to vector<176x16xf32>
    %c0_2 = arith.constant 0 : index
    %c0_3 = arith.constant 0 : index
    %3 = vector.load %arg10[%c0_2, %c0_3] : memref<176x16xf32, #tpu.memory_space<vmem>>, vector<176x16xf32>
    tpu.vector_store %arg10[%c0_2, %c0_3], %2 {strides = array<i32>} : memref<176x16xf32, #tpu.memory_space<vmem>>, vector<176x16xf32>,
    %cst_4 = arith.constant 0.000000e+00 : f32
    %4 = vector.broadcast %cst_4 : f32 to vector<144x8xf32>
    %c0_5 = arith.constant 0 : index
    %c0_6 = arith.constant 0 : index
    %c0_7 = arith.constant 0 : index
    %5 = vector.load %arg1[%c0_5, %c0_6, %c0_7] : memref<1x176x8xf32, #tpu.memory_space<vmem>>, vector<1x144x8xf32>
    %6 = vector.shape_cast %5 : vector<1x144x8xf32> to vector<144x8xf32>
    %7 = arith.truncf %6 : vector<144x8xf32> to vector<144x8xbf16>
    %c0_8 = arith.constant 0 : index
    %c0_9 = arith.constant 0 : index
    %8 = vector.load %arg2[%c0_8, %c0_9] : memref<72x8xf32, #tpu.memory_space<vmem>>, vector<8x8xf32>
    %9 = arith.truncf %8 : vector<8x8xf32> to vector<8x8xbf16>
    %cst_10 = arith.constant dense<0.000000e+00> : vector<144x8xf32>
    %10 = tpu.matmul %7, %9, %cst_10 {dimension_numbers = #tpu.dot_dimension_numbers<[1], [0], [0], [1], [0, 0, 1, 1], [], []>} : vector<144x8xbf16>, vector<8x8xbf16>, vector<144x8xf32> -> vector<144x8xf32>
    %11 = arith.addf %4, %10 : vector<144x8xf32>
    %c0_11 = arith.constant 0 : index
    %c1 = arith.constant 1 : index
    %c0_12 = arith.constant 0 : index
    %12 = vector.load %arg1[%c0_11, %c1, %c0_12] : memref<1x176x8xf32, #tpu.memory_space<vmem>>, vector<1x144x8xf32>
    %13 = vector.shape_cast %12 : vector<1x144x8xf32> to vector<144x8xf32>
    %14 = arith.truncf %13 : vector<144x8xf32> to vector<144x8xbf16>
    %c8 = arith.constant 8 : index
    %c0_13 = arith.constant 0 : index
    %15 = vector.load %arg2[%c8, %c0_13] : memref<72x8xf32, #tpu.memory_space<vmem>>, vector<8x8xf32>
    %16 = arith.truncf %15 : vector<8x8xf32> to vector<8x8xbf16>
    %cst_14 = arith.constant dense<0.000000e+00> : vector<144x8xf32>
    %17 = tpu.matmul %14, %16, %cst_14 {dimension_numbers = #tpu.dot_dimension_numbers<[1], [0], [0], [1], [0, 0, 1, 1], [], []>} : vector<144x8xbf16>, vector<8x8xbf16>, vector<144x8xf32> -> vector<144x8xf32>
    %18 = arith.addf %11, %17 : vector<144x8xf32>
    %c0_15 = arith.constant 0 : index
    %c2 = arith.constant 2 : index
    %c0_16 = arith.constant 0 : index
    %19 = vector.load %arg1[%c0_15, %c2, %c0_16] : memref<1x176x8xf32, #tpu.memory_space<vmem>>, vector<1x144x8xf32>
    %20 = vector.shape_cast %19 : vector<1x144x8xf32> to vector<144x8xf32>
    %21 = arith.truncf %20 : vector<144x8xf32> to vector<144x8xbf16>
    %c16 = arith.constant 16 : index
    %c0_17 = arith.constant 0 : index
    %22 = vector.load %arg2[%c16, %c0_17] : memref<72x8xf32, #tpu.memory_space<vmem>>, vector<8x8xf32>
    %23 = arith.truncf %22 : vector<8x8xf32> to vector<8x8xbf16>
    %cst_18 = arith.constant dense<0.000000e+00> : vector<144x8xf32>
    %24 = tpu.matmul %21, %23, %cst_18 {dimension_numbers = #tpu.dot_dimension_numbers<[1], [0], [0], [1], [0, 0, 1, 1], [], []>} : vector<144x8xbf16>, vector<8x8xbf16>, vector<144x8xf32> -> vector<144x8xf32>
    %25 = arith.addf %18, %24 : vector<144x8xf32>
    %c0_19 = arith.constant 0 : index
    %c12 = arith.constant 12 : index
    %c0_20 = arith.constant 0 : index
    %26 = vector.load %arg1[%c0_19, %c12, %c0_20] : memref<1x176x8xf32, #tpu.memory_space<vmem>>, vector<1x144x8xf32>
    %27 = vector.shape_cast %26 : vector<1x144x8xf32> to vector<144x8xf32>
    %28 = arith.truncf %27 : vector<144x8xf32> to vector<144x8xbf16>
    %c24 = arith.constant 24 : index
    %c0_21 = arith.constant 0 : index
    %29 = vector.load %arg2[%c24, %c0_21] : memref<72x8xf32, #tpu.memory_space<vmem>>, vector<8x8xf32>
    %30 = arith.truncf %29 : vector<8x8xf32> to vector<8x8xbf16>
    %cst_22 = arith.constant dense<0.000000e+00> : vector<144x8xf32>
    %31 = tpu.matmul %28, %30, %cst_22 {dimension_numbers = #tpu.dot_dimension_numbers<[1], [0], [0], [1], [0, 0, 1, 1], [], []>} : vector<144x8xbf16>, vector<8x8xbf16>, vector<144x8xf32> -> vector<144x8xf32>
    %32 = arith.addf %25, %31 : vector<144x8xf32>
    %c0_23 = arith.constant 0 : index
    %c13 = arith.constant 13 : index
    %c0_24 = arith.constant 0 : index
    %33 = vector.load %arg1[%c0_23, %c13, %c0_24] : memref<1x176x8xf32, #tpu.memory_space<vmem>>, vector<1x144x8xf32>
    %34 = vector.shape_cast %33 : vector<1x144x8xf32> to vector<144x8xf32>
    %35 = arith.truncf %34 : vector<144x8xf32> to vector<144x8xbf16>
    %c32 = arith.constant 32 : index
    %c0_25 = arith.constant 0 : index
    %36 = vector.load %arg2[%c32, %c0_25] : memref<72x8xf32, #tpu.memory_space<vmem>>, vector<8x8xf32>
    %37 = arith.truncf %36 : vector<8x8xf32> to vector<8x8xbf16>
    %cst_26 = arith.constant dense<0.000000e+00> : vector<144x8xf32>
    %38 = tpu.matmul %35, %37, %cst_26 {dimension_numbers = #tpu.dot_dimension_numbers<[1], [0], [0], [1], [0, 0, 1, 1], [], []>} : vector<144x8xbf16>, vector<8x8xbf16>, vector<144x8xf32> -> vector<144x8xf32>
    %39 = arith.addf %32, %38 : vector<144x8xf32>
    %c0_27 = arith.constant 0 : index
    %c14 = arith.constant 14 : index
    %c0_28 = arith.constant 0 : index
    %40 = vector.load %arg1[%c0_27, %c14, %c0_28] : memref<1x176x8xf32, #tpu.memory_space<vmem>>, vector<1x144x8xf32>
    %41 = vector.shape_cast %40 : vector<1x144x8xf32> to vector<144x8xf32>
    %42 = arith.truncf %41 : vector<144x8xf32> to vector<144x8xbf16>
    %c40 = arith.constant 40 : index
    %c0_29 = arith.constant 0 : index
    %43 = vector.load %arg2[%c40, %c0_29] : memref<72x8xf32, #tpu.memory_space<vmem>>, vector<8x8xf32>
    %44 = arith.truncf %43 : vector<8x8xf32> to vector<8x8xbf16>
    %cst_30 = arith.constant dense<0.000000e+00> : vector<144x8xf32>
    %45 = tpu.matmul %42, %44, %cst_30 {dimension_numbers = #tpu.dot_dimension_numbers<[1], [0], [0], [1], [0, 0, 1, 1], [], []>} : vector<144x8xbf16>, vector<8x8xbf16>, vector<144x8xf32> -> vector<144x8xf32>
    %46 = arith.addf %39, %45 : vector<144x8xf32>
    %c0_31 = arith.constant 0 : index
    %c24_32 = arith.constant 24 : index
    %c0_33 = arith.constant 0 : index
    %47 = vector.load %arg1[%c0_31, %c24_32, %c0_33] : memref<1x176x8xf32, #tpu.memory_space<vmem>>, vector<1x144x8xf32>
    %48 = vector.shape_cast %47 : vector<1x144x8xf32> to vector<144x8xf32>
    %49 = arith.truncf %48 : vector<144x8xf32> to vector<144x8xbf16>
    %c48 = arith.constant 48 : index
    %c0_34 = arith.constant 0 : index
    %50 = vector.load %arg2[%c48, %c0_34] : memref<72x8xf32, #tpu.memory_space<vmem>>, vector<8x8xf32>
    %51 = arith.truncf %50 : vector<8x8xf32> to vector<8x8xbf16>
    %cst_35 = arith.constant dense<0.000000e+00> : vector<144x8xf32>
    %52 = tpu.matmul %49, %51, %cst_35 {dimension_numbers = #tpu.dot_dimension_numbers<[1], [0], [0], [1], [0, 0, 1, 1], [], []>} : vector<144x8xbf16>, vector<8x8xbf16>, vector<144x8xf32> -> vector<144x8xf32>
    %53 = arith.addf %46, %52 : vector<144x8xf32>
    %c0_36 = arith.constant 0 : index
    %c25 = arith.constant 25 : index
    %c0_37 = arith.constant 0 : index
    %54 = vector.load %arg1[%c0_36, %c25, %c0_37] : memref<1x176x8xf32, #tpu.memory_space<vmem>>, vector<1x144x8xf32>
    %55 = vector.shape_cast %54 : vector<1x144x8xf32> to vector<144x8xf32>
    %56 = arith.truncf %55 : vector<144x8xf32> to vector<144x8xbf16>
    %c56 = arith.constant 56 : index
    %c0_38 = arith.constant 0 : index
    %57 = vector.load %arg2[%c56, %c0_38] : memref<72x8xf32, #tpu.memory_space<vmem>>, vector<8x8xf32>
    %58 = arith.truncf %57 : vector<8x8xf32> to vector<8x8xbf16>
    %cst_39 = arith.constant dense<0.000000e+00> : vector<144x8xf32>
    %59 = tpu.matmul %56, %58, %cst_39 {dimension_numbers = #tpu.dot_dimension_numbers<[1], [0], [0], [1], [0, 0, 1, 1], [], []>} : vector<144x8xbf16>, vector<8x8xbf16>, vector<144x8xf32> -> vector<144x8xf32>
    %60 = arith.addf %53, %59 : vector<144x8xf32>
    %c0_40 = arith.constant 0 : index
    %c26 = arith.constant 26 : index
    %c0_41 = arith.constant 0 : index
    %61 = vector.load %arg1[%c0_40, %c26, %c0_41] : memref<1x176x8xf32, #tpu.memory_space<vmem>>, vector<1x144x8xf32>
    %62 = vector.shape_cast %61 : vector<1x144x8xf32> to vector<144x8xf32>
    %63 = arith.truncf %62 : vector<144x8xf32> to vector<144x8xbf16>
    %c64 = arith.constant 64 : index
    %c0_42 = arith.constant 0 : index
    %64 = vector.load %arg2[%c64, %c0_42] : memref<72x8xf32, #tpu.memory_space<vmem>>, vector<8x8xf32>
    %65 = arith.truncf %64 : vector<8x8xf32> to vector<8x8xbf16>
    %cst_43 = arith.constant dense<0.000000e+00> : vector<144x8xf32>
    %66 = tpu.matmul %63, %65, %cst_43 {dimension_numbers = #tpu.dot_dimension_numbers<[1], [0], [0], [1], [0, 0, 1, 1], [], []>} : vector<144x8xbf16>, vector<8x8xbf16>, vector<144x8xf32> -> vector<144x8xf32>
    %67 = arith.addf %60, %66 : vector<144x8xf32>
    %c0_44 = arith.constant 0 : index
    %c0_45 = arith.constant 0 : index
    %68 = vector.load %arg3[%c0_44, %c0_45] : memref<1x8xf32, #tpu.memory_space<vmem>>, vector<1x8xf32>
    %69 = vector.broadcast %68 : vector<1x8xf32> to vector<144x8xf32>
    %70 = arith.addf %67, %69 : vector<144x8xf32>
    %cst_46 = arith.constant 0.000000e+00 : f32
    %71 = vector.broadcast %cst_46 : f32 to vector<144x8xf32>
    %72 = arith.maximumf %70, %71 : vector<144x8xf32>
    %c0_47 = arith.constant 0 : index
    %c0_48 = arith.constant 0 : index
    %73 = vector.load %arg9[%c0_47, %c0_48] : memref<176x8xf32, #tpu.memory_space<vmem>>, vector<144x8xf32>
    tpu.vector_store %arg9[%c0_47, %c0_48], %72 {strides = array<i32>} : memref<176x8xf32, #tpu.memory_space<vmem>>, vector<144x8xf32>,
    %cst_49 = arith.constant 0.000000e+00 : f32
    %74 = vector.broadcast %cst_49 : f32 to vector<144x16xf32>
    %c0_50 = arith.constant 0 : index
    %c0_51 = arith.constant 0 : index
    %75 = vector.load %arg9[%c0_50, %c0_51] : memref<176x8xf32, #tpu.memory_space<vmem>>, vector<144x8xf32>
    %76 = arith.truncf %75 : vector<144x8xf32> to vector<144x8xbf16>
    %c0_52 = arith.constant 0 : index
    %c0_53 = arith.constant 0 : index
    %77 = vector.load %arg4[%c0_52, %c0_53] : memref<72x16xf32, #tpu.memory_space<vmem>>, vector<8x16xf32>
    %78 = arith.truncf %77 : vector<8x16xf32> to vector<8x16xbf16>
    %cst_54 = arith.constant dense<0.000000e+00> : vector<144x16xf32>
    %79 = tpu.matmul %76, %78, %cst_54 {dimension_numbers = #tpu.dot_dimension_numbers<[1], [0], [0], [1], [0, 0, 1, 1], [], []>} : vector<144x8xbf16>, vector<8x16xbf16>, vector<144x16xf32> -> vector<144x16xf32>
    %80 = arith.addf %74, %79 : vector<144x16xf32>
    %c1_55 = arith.constant 1 : index
    %c0_56 = arith.constant 0 : index
    %81 = vector.load %arg9[%c1_55, %c0_56] : memref<176x8xf32, #tpu.memory_space<vmem>>, vector<144x8xf32>
    %82 = arith.truncf %81 : vector<144x8xf32> to vector<144x8xbf16>
    %c8_57 = arith.constant 8 : index
    %c0_58 = arith.constant 0 : index
    %83 = vector.load %arg4[%c8_57, %c0_58] : memref<72x16xf32, #tpu.memory_space<vmem>>, vector<8x16xf32>
    %84 = arith.truncf %83 : vector<8x16xf32> to vector<8x16xbf16>
    %cst_59 = arith.constant dense<0.000000e+00> : vector<144x16xf32>
    %85 = tpu.matmul %82, %84, %cst_59 {dimension_numbers = #tpu.dot_dimension_numbers<[1], [0], [0], [1], [0, 0, 1, 1], [], []>} : vector<144x8xbf16>, vector<8x16xbf16>, vector<144x16xf32> -> vector<144x16xf32>
    %86 = arith.addf %80, %85 : vector<144x16xf32>
    %c2_60 = arith.constant 2 : index
    %c0_61 = arith.constant 0 : index
    %87 = vector.load %arg9[%c2_60, %c0_61] : memref<176x8xf32, #tpu.memory_space<vmem>>, vector<144x8xf32>
    %88 = arith.truncf %87 : vector<144x8xf32> to vector<144x8xbf16>
    %c16_62 = arith.constant 16 : index
    %c0_63 = arith.constant 0 : index
    %89 = vector.load %arg4[%c16_62, %c0_63] : memref<72x16xf32, #tpu.memory_space<vmem>>, vector<8x16xf32>
    %90 = arith.truncf %89 : vector<8x16xf32> to vector<8x16xbf16>
    %cst_64 = arith.constant dense<0.000000e+00> : vector<144x16xf32>
    %91 = tpu.matmul %88, %90, %cst_64 {dimension_numbers = #tpu.dot_dimension_numbers<[1], [0], [0], [1], [0, 0, 1, 1], [], []>} : vector<144x8xbf16>, vector<8x16xbf16>, vector<144x16xf32> -> vector<144x16xf32>
    %92 = arith.addf %86, %91 : vector<144x16xf32>
    %c12_65 = arith.constant 12 : index
    %c0_66 = arith.constant 0 : index
    %93 = vector.load %arg9[%c12_65, %c0_66] : memref<176x8xf32, #tpu.memory_space<vmem>>, vector<144x8xf32>
    %94 = arith.truncf %93 : vector<144x8xf32> to vector<144x8xbf16>
    %c24_67 = arith.constant 24 : index
    %c0_68 = arith.constant 0 : index
    %95 = vector.load %arg4[%c24_67, %c0_68] : memref<72x16xf32, #tpu.memory_space<vmem>>, vector<8x16xf32>
    %96 = arith.truncf %95 : vector<8x16xf32> to vector<8x16xbf16>
    %cst_69 = arith.constant dense<0.000000e+00> : vector<144x16xf32>
    %97 = tpu.matmul %94, %96, %cst_69 {dimension_numbers = #tpu.dot_dimension_numbers<[1], [0], [0], [1], [0, 0, 1, 1], [], []>} : vector<144x8xbf16>, vector<8x16xbf16>, vector<144x16xf32> -> vector<144x16xf32>
    %98 = arith.addf %92, %97 : vector<144x16xf32>
    %c13_70 = arith.constant 13 : index
    %c0_71 = arith.constant 0 : index
    %99 = vector.load %arg9[%c13_70, %c0_71] : memref<176x8xf32, #tpu.memory_space<vmem>>, vector<144x8xf32>
    %100 = arith.truncf %99 : vector<144x8xf32> to vector<144x8xbf16>
    %c32_72 = arith.constant 32 : index
    %c0_73 = arith.constant 0 : index
    %101 = vector.load %arg4[%c32_72, %c0_73] : memref<72x16xf32, #tpu.memory_space<vmem>>, vector<8x16xf32>
    %102 = arith.truncf %101 : vector<8x16xf32> to vector<8x16xbf16>
    %cst_74 = arith.constant dense<0.000000e+00> : vector<144x16xf32>
    %103 = tpu.matmul %100, %102, %cst_74 {dimension_numbers = #tpu.dot_dimension_numbers<[1], [0], [0], [1], [0, 0, 1, 1], [], []>} : vector<144x8xbf16>, vector<8x16xbf16>, vector<144x16xf32> -> vector<144x16xf32>
    %104 = arith.addf %98, %103 : vector<144x16xf32>
    %c14_75 = arith.constant 14 : index
    %c0_76 = arith.constant 0 : index
    %105 = vector.load %arg9[%c14_75, %c0_76] : memref<176x8xf32, #tpu.memory_space<vmem>>, vector<144x8xf32>
    %106 = arith.truncf %105 : vector<144x8xf32> to vector<144x8xbf16>
    %c40_77 = arith.constant 40 : index
    %c0_78 = arith.constant 0 : index
    %107 = vector.load %arg4[%c40_77, %c0_78] : memref<72x16xf32, #tpu.memory_space<vmem>>, vector<8x16xf32>
    %108 = arith.truncf %107 : vector<8x16xf32> to vector<8x16xbf16>
    %cst_79 = arith.constant dense<0.000000e+00> : vector<144x16xf32>
    %109 = tpu.matmul %106, %108, %cst_79 {dimension_numbers = #tpu.dot_dimension_numbers<[1], [0], [0], [1], [0, 0, 1, 1], [], []>} : vector<144x8xbf16>, vector<8x16xbf16>, vector<144x16xf32> -> vector<144x16xf32>
    %110 = arith.addf %104, %109 : vector<144x16xf32>
    %c24_80 = arith.constant 24 : index
    %c0_81 = arith.constant 0 : index
    %111 = vector.load %arg9[%c24_80, %c0_81] : memref<176x8xf32, #tpu.memory_space<vmem>>, vector<144x8xf32>
    %112 = arith.truncf %111 : vector<144x8xf32> to vector<144x8xbf16>
    %c48_82 = arith.constant 48 : index
    %c0_83 = arith.constant 0 : index
    %113 = vector.load %arg4[%c48_82, %c0_83] : memref<72x16xf32, #tpu.memory_space<vmem>>, vector<8x16xf32>
    %114 = arith.truncf %113 : vector<8x16xf32> to vector<8x16xbf16>
    %cst_84 = arith.constant dense<0.000000e+00> : vector<144x16xf32>
    %115 = tpu.matmul %112, %114, %cst_84 {dimension_numbers = #tpu.dot_dimension_numbers<[1], [0], [0], [1], [0, 0, 1, 1], [], []>} : vector<144x8xbf16>, vector<8x16xbf16>, vector<144x16xf32> -> vector<144x16xf32>
    %116 = arith.addf %110, %115 : vector<144x16xf32>
    %c25_85 = arith.constant 25 : index
    %c0_86 = arith.constant 0 : index
    %117 = vector.load %arg9[%c25_85, %c0_86] : memref<176x8xf32, #tpu.memory_space<vmem>>, vector<144x8xf32>
    %118 = arith.truncf %117 : vector<144x8xf32> to vector<144x8xbf16>
    %c56_87 = arith.constant 56 : index
    %c0_88 = arith.constant 0 : index
    %119 = vector.load %arg4[%c56_87, %c0_88] : memref<72x16xf32, #tpu.memory_space<vmem>>, vector<8x16xf32>
    %120 = arith.truncf %119 : vector<8x16xf32> to vector<8x16xbf16>
    %cst_89 = arith.constant dense<0.000000e+00> : vector<144x16xf32>
    %121 = tpu.matmul %118, %120, %cst_89 {dimension_numbers = #tpu.dot_dimension_numbers<[1], [0], [0], [1], [0, 0, 1, 1], [], []>} : vector<144x8xbf16>, vector<8x16xbf16>, vector<144x16xf32> -> vector<144x16xf32>
    %122 = arith.addf %116, %121 : vector<144x16xf32>
    %c26_90 = arith.constant 26 : index
    %c0_91 = arith.constant 0 : index
    %123 = vector.load %arg9[%c26_90, %c0_91] : memref<176x8xf32, #tpu.memory_space<vmem>>, vector<144x8xf32>
    %124 = arith.truncf %123 : vector<144x8xf32> to vector<144x8xbf16>
    %c64_92 = arith.constant 64 : index
    %c0_93 = arith.constant 0 : index
    %125 = vector.load %arg4[%c64_92, %c0_93] : memref<72x16xf32, #tpu.memory_space<vmem>>, vector<8x16xf32>
    %126 = arith.truncf %125 : vector<8x16xf32> to vector<8x16xbf16>
    %cst_94 = arith.constant dense<0.000000e+00> : vector<144x16xf32>
    %127 = tpu.matmul %124, %126, %cst_94 {dimension_numbers = #tpu.dot_dimension_numbers<[1], [0], [0], [1], [0, 0, 1, 1], [], []>} : vector<144x8xbf16>, vector<8x16xbf16>, vector<144x16xf32> -> vector<144x16xf32>
    %128 = arith.addf %122, %127 : vector<144x16xf32>
    %c0_95 = arith.constant 0 : index
    %c0_96 = arith.constant 0 : index
    %129 = vector.load %arg5[%c0_95, %c0_96] : memref<1x16xf32, #tpu.memory_space<vmem>>, vector<1x16xf32>
    %130 = vector.broadcast %129 : vector<1x16xf32> to vector<144x16xf32>
    %131 = arith.addf %128, %130 : vector<144x16xf32>
    %cst_97 = arith.constant 0.000000e+00 : f32
    %132 = vector.broadcast %cst_97 : f32 to vector<144x16xf32>
    %133 = arith.maximumf %131, %132 : vector<144x16xf32>
    %c0_98 = arith.constant 0 : index
    %c0_99 = arith.constant 0 : index
    %134 = vector.load %arg10[%c0_98, %c0_99] : memref<176x16xf32, #tpu.memory_space<vmem>>, vector<144x16xf32>
    tpu.vector_store %arg10[%c0_98, %c0_99], %133 {strides = array<i32>} : memref<176x16xf32, #tpu.memory_space<vmem>>, vector<144x16xf32>,
    %c0_100 = arith.constant 0 : index
    %c0_101 = arith.constant 0 : index
    %135 = vector.load %arg10[%c0_100, %c0_101] : memref<176x16xf32, #tpu.memory_space<vmem>>, vector<176x16xf32>
    %136 = arith.truncf %135 : vector<176x16xf32> to vector<176x16xbf16>
    %c0_102 = arith.constant 0 : index
    %c0_103 = arith.constant 0 : index
    %137 = vector.load %arg6[%c0_102, %c0_103] : memref<16x16xf32, #tpu.memory_space<vmem>>, vector<16x16xf32>
    %138 = arith.truncf %137 : vector<16x16xf32> to vector<16x16xbf16>
    %cst_104 = arith.constant dense<0.000000e+00> : vector<176x16xf32>
    %139 = tpu.matmul %136, %138, %cst_104 {dimension_numbers = #tpu.dot_dimension_numbers<[1], [0], [0], [1], [0, 0, 1, 1], [], []>} : vector<176x16xbf16>, vector<16x16xbf16>, vector<176x16xf32> -> vector<176x16xf32>
    %c0_105 = arith.constant 0 : index
    %c0_106 = arith.constant 0 : index
    %140 = vector.load %arg7[%c0_105, %c0_106] : memref<1x16xf32, #tpu.memory_space<vmem>>, vector<1x16xf32>
    %141 = vector.broadcast %140 : vector<1x16xf32> to vector<176x16xf32>
    %142 = arith.addf %139, %141 : vector<176x16xf32>
    %c0_107 = arith.constant 0 : index
    %c0_108 = arith.constant 0 : index
    %c0_109 = arith.constant 0 : index
    %143 = vector.load %arg8[%c0_107, %c0_108, %c0_109] : memref<1x176x16xf32, #tpu.memory_space<vmem>>, vector<1x176x16xf32>
    %144 = vector.shape_cast %143 : vector<1x176x16xf32> to vector<176x16xf32>
    %145 = vector.shape_cast %142 : vector<176x16xf32> to vector<1x176x16xf32>
    tpu.vector_store %arg8[%c0_107, %c0_108, %c0_109], %145 {strides = array<i32>} : memref<1x176x16xf32, #tpu.memory_space<vmem>>, vector<1x176x16xf32>,
    return
  }
  func.func @transform_0(%arg0: i32) -> (i32, i32, i32) {
    %c0_i32 = arith.constant 0 : i32
    %c0_i32_0 = arith.constant 0 : i32
    %c0_i32_1 = arith.constant 0 : i32
    return %arg0, %c0_i32, %c0_i32_0 : i32, i32, i32
  }
  func.func @transform_1(%arg0: i32) -> (i32, i32) {
    %c0_i32 = arith.constant 0 : i32
    %c0_i32_0 = arith.constant 0 : i32
    %c0_i32_1 = arith.constant 0 : i32
    return %c0_i32, %c0_i32_0 : i32, i32
  }
  func.func @transform_2(%arg0: i32) -> (i32, i32) {
    %c0_i32 = arith.constant 0 : i32
    %c0_i32_0 = arith.constant 0 : i32
    %c0_i32_1 = arith.constant 0 : i32
    return %c0_i32, %c0_i32_0 : i32, i32
  }
  func.func @transform_3(%arg0: i32) -> (i32, i32) {
    %c0_i32 = arith.constant 0 : i32
    %c0_i32_0 = arith.constant 0 : i32
    %c0_i32_1 = arith.constant 0 : i32
    return %c0_i32, %c0_i32_0 : i32, i32
  }
  func.func @transform_4(%arg0: i32) -> (i32, i32) {
    %c0_i32 = arith.constant 0 : i32
    %c0_i32_0 = arith.constant 0 : i32
    %c0_i32_1 = arith.constant 0 : i32
    return %c0_i32, %c0_i32_0 : i32, i32
  }
  func.func @transform_5(%arg0: i32) -> (i32, i32) {
    %c0_i32 = arith.constant 0 : i32
    %c0_i32_0 = arith.constant 0 : i32
    %c0_i32_1 = arith.constant 0 : i32
    return %c0_i32, %c0_i32_0 : i32, i32
  }
  func.func @transform_6(%arg0: i32) -> (i32, i32) {
    %c0_i32 = arith.constant 0 : i32
    %c0_i32_0 = arith.constant 0 : i32
    %c0_i32_1 = arith.constant 0 : i32
    return %c0_i32, %c0_i32_0 : i32, i32
  }
  func.func @transform_7(%arg0: i32) -> (i32, i32, i32) {
    %c0_i32 = arith.constant 0 : i32
    %c0_i32_0 = arith.constant 0 : i32
    %c0_i32_1 = arith.constant 0 : i32
    return %arg0, %c0_i32, %c0_i32_0 : i32, i32, i32
  }
}

</mosaic_0001>

<llo_original>
// kernel: _features_neck_call.1
$region0: #{_features_neck_call.1}
  #allocation0 [shape = 'u32[]', space=smem, size = 0x4, offset = 0x4, fixed_abs, tag = 'smem constant byte address 0x4 - core index']
  #allocation1 [shape = 'u32[144,128]{1,0:T(1,128)}', space=vmem, size = 0x12000, scoped, tag = 'internal scratch']
  #allocation2 [shape = 'f32[176,8]{1,0:T(8,128)}', space=vmem, size = 0x16000, scoped, tag = 'scratch operand']
  #allocation3 [shape = 'f32[176,16]{1,0:T(8,128)}', space=vmem, size = 0x16000, scoped, tag = 'scratch operand']
  %s0 = inlined_call_operand.vmem [shape: f32[2,176,8], index: 0, kind: input, shape index: {}]
  %s1 = inlined_call_operand.vmem [shape: f32[72,8], index: 1, kind: input, shape index: {}]
  %s2 = inlined_call_operand.vmem [shape: f32[1,8], index: 2, kind: input, shape index: {}]
  %s3 = inlined_call_operand.vmem [shape: f32[72,16], index: 3, kind: input, shape index: {}]
  %s4 = inlined_call_operand.vmem [shape: f32[1,16], index: 4, kind: input, shape index: {}]
  %s5 = inlined_call_operand.vmem [shape: f32[16,16], index: 5, kind: input, shape index: {}]
  %s6 = inlined_call_operand.vmem [shape: f32[1,16], index: 6, kind: input, shape index: {}]
  %s7 = inlined_call_operand.vmem [shape: f32[2,176,16], index: 7, kind: output, shape index: {}]
  %s8 = sld [smem:[#allocation0]]
  $region61: #{_features_neck_call.1} parent=0
    _
  %s10 = ssub.s32 1, %s8
  %s11 = scalar_select 0, %s10, %s8
  loop: start=0, step=1, limit=4
  $region2: #{_features_neck_call.1} parent=0 // loop_pre_header
    _
  $region3: #{_features_neck_call.1} parent=0 // loop_header
    %s13 = sphi 0, %s17
    %p14 = scmp.ge.s32.totalorder %s13, 4
    %s23 = sphi 0, %s25
    %s26 = sphi 0, %s23
    %s27 = sphi 0, %s26
    %s43 = sphi 0, %s27
    %s47 = sphi 0, %s47
    %s49 = sphi 0, %s47
    %s50 = sphi 0, %s49
    %s64 = sphi 0, %s50
    %s68 = sphi 0, %s68
    %s70 = sphi 0, %s68
    %s71 = sphi 0, %s70
    %s85 = sphi 0, %s71
    %s89 = sphi 0, %s89
    %s91 = sphi 0, %s89
    %s92 = sphi 0, %s91
    %s106 = sphi 0, %s92
    %s110 = sphi 0, %s110
    %s112 = sphi 0, %s110
    %s113 = sphi 0, %s112
    %s127 = sphi 0, %s113
    %s131 = sphi 0, %s131
    %s133 = sphi 0, %s131
    %s134 = sphi 0, %s133
    %s148 = sphi 0, %s134
    %s152 = sphi 0, %s152
    %s154 = sphi 0, %s152
    %s155 = sphi 0, %s154
    %s169 = sphi 0, %s155
    %s175 = sphi 0, %s177
    %s178 = sphi 0, %s175
    %s179 = sphi 0, %s178
    %s195 = sphi 0, %s179
  $region4: #{_features_neck_call.1} parent=0 // loop_header_branch
    %16 = sbr.rel (%p14) target = $region8
  $region5: #{_features_neck_call.1} parent=0 // loop_body
    %s18 = ssub.s32 %s13, 1
    %s19 = ssub.s32 %s13, 2
    %s20 = sadd.s32 %s13, 1
    %s21 = ssub.s32 %s13, %s20
    %p22 = scmp.eq.s32.totalorder %s21, 0
    %s24 = sadd.s32 %s23, 1
    %s25 = scalar_select %p22, %s23, %s24
    %p28 = pneg %p22
    %p29 = scmp.eq.s32.totalorder %s13, 1
    %p30 = por %p28, %p29
    %p31 = scmp.ne.s32.totalorder %s23, %s26
    %p32 = scmp.eq.s32.totalorder %s13, 0
    %p33 = por %p31, %p32
    %p34 = scmp.ne.s32.totalorder %s23, %s26
    %p35 = scmp.eq.s32.totalorder %s18, 1
    %p36 = por %p34, %p35
    %p37 = scmp.ne.s32.totalorder %s26, %s27
    %p38 = scmp.eq.s32.totalorder %s18, 0
    %p39 = por %p37, %p38
    %p40 = scmp.ne.s32.totalorder %s26, %s27
    %p41 = scmp.eq.s32.totalorder %s19, 1
    %p42 = por %p40, %p41
    %p44 = scmp.ne.s32.totalorder %s27, %s43
    %p45 = scmp.eq.s32.totalorder %s19, 0
    %p46 = por %p44, %p45
    %s48 = sadd.s32 %s47, 1
    %p51 = scmp.eq.s32.totalorder %s13, 1
    %p52 = scmp.ne.s32.totalorder %s47, %s49
    %p53 = scmp.eq.s32.totalorder %s13, 0
    %p54 = por %p52, %p53
    %p55 = scmp.ne.s32.totalorder %s47, %s49
    %p56 = scmp.eq.s32.totalorder %s18, 1
    %p57 = por %p55, %p56
    %p58 = scmp.ne.s32.totalorder %s49, %s50
    %p59 = scmp.eq.s32.totalorder %s18, 0
    %p60 = por %p58, %p59
    %p61 = scmp.ne.s32.totalorder %s49, %s50
    %p62 = scmp.eq.s32.totalorder %s19, 1
    %p63 = por %p61, %p62
    %p65 = scmp.ne.s32.totalorder %s50, %s64
    %p66 = scmp.eq.s32.totalorder %s19, 0
    %p67 = por %p65, %p66
    %s69 = sadd.s32 %s68, 1
    %p72 = scmp.eq.s32.totalorder %s13, 1
    %p73 = scmp.ne.s32.totalorder %s68, %s70
    %p74 = scmp.eq.s32.totalorder %s13, 0
    %p75 = por %p73, %p74
    %p76 = scmp.ne.s32.totalorder %s68, %s70
    %p77 = scmp.eq.s32.totalorder %s18, 1
    %p78 = por %p76, %p77
    %p79 = scmp.ne.s32.totalorder %s70, %s71
    %p80 = scmp.eq.s32.totalorder %s18, 0
    %p81 = por %p79, %p80
    %p82 = scmp.ne.s32.totalorder %s70, %s71
    %p83 = scmp.eq.s32.totalorder %s19, 1
    %p84 = por %p82, %p83
    %p86 = scmp.ne.s32.totalorder %s71, %s85
    %p87 = scmp.eq.s32.totalorder %s19, 0
    %p88 = por %p86, %p87
    %s90 = sadd.s32 %s89, 1
    %p93 = scmp.eq.s32.totalorder %s13, 1
    %p94 = scmp.ne.s32.totalorder %s89, %s91
    %p95 = scmp.eq.s32.totalorder %s13, 0
    %p96 = por %p94, %p95
    %p97 = scmp.ne.s32.totalorder %s89, %s91
    %p98 = scmp.eq.s32.totalorder %s18, 1
    %p99 = por %p97, %p98
    %p100 = scmp.ne.s32.totalorder %s91, %s92
    %p101 = scmp.eq.s32.totalorder %s18, 0
    %p102 = por %p100, %p101
    %p103 = scmp.ne.s32.totalorder %s91, %s92
    %p104 = scmp.eq.s32.totalorder %s19, 1
    %p105 = por %p103, %p104
    %p107 = scmp.ne.s32.totalorder %s92, %s106
    %p108 = scmp.eq.s32.totalorder %s19, 0
    %p109 = por %p107, %p108
    %s111 = sadd.s32 %s110, 1
    %p114 = scmp.eq.s32.totalorder %s13, 1
    %p115 = scmp.ne.s32.totalorder %s110, %s112
    %p116 = scmp.eq.s32.totalorder %s13, 0
    %p117 = por %p115, %p116
    %p118 = scmp.ne.s32.totalorder %s110, %s112
    %p119 = scmp.eq.s32.totalorder %s18, 1
    %p120 = por %p118, %p119
    %p121 = scmp.ne.s32.totalorder %s112, %s113
    %p122 = scmp.eq.s32.totalorder %s18, 0
    %p123 = por %p121, %p122
    %p124 = scmp.ne.s32.totalorder %s112, %s113
    %p125 = scmp.eq.s32.totalorder %s19, 1
    %p126 = por %p124, %p125
    %p128 = scmp.ne.s32.totalorder %s113, %s127
    %p129 = scmp.eq.s32.totalorder %s19, 0
    %p130 = por %p128, %p129
    %s132 = sadd.s32 %s131, 1
    %p135 = scmp.eq.s32.totalorder %s13, 1
    %p136 = scmp.ne.s32.totalorder %s131, %s133
    %p137 = scmp.eq.s32.totalorder %s13, 0
    %p138 = por %p136, %p137
    %p139 = scmp.ne.s32.totalorder %s131, %s133
    %p140 = scmp.eq.s32.totalorder %s18, 1
    %p141 = por %p139, %p140
    %p142 = scmp.ne.s32.totalorder %s133, %s134
    %p143 = scmp.eq.s32.totalorder %s18, 0
    %p144 = por %p142, %p143
    %p145 = scmp.ne.s32.totalorder %s133, %s134
    %p146 = scmp.eq.s32.totalorder %s19, 1
    %p147 = por %p145, %p146
    %p149 = scmp.ne.s32.totalorder %s134, %s148
    %p150 = scmp.eq.s32.totalorder %s19, 0
    %p151 = por %p149, %p150
    %s153 = sadd.s32 %s152, 1
    %p156 = scmp.eq.s32.totalorder %s13, 1
    %p157 = scmp.ne.s32.totalorder %s152, %s154
    %p158 = scmp.eq.s32.totalorder %s13, 0
    %p159 = por %p157, %p158
    %p160 = scmp.ne.s32.totalorder %s152, %s154
    %p161 = scmp.eq.s32.totalorder %s18, 1
    %p162 = por %p160, %p161
    %p163 = scmp.ne.s32.totalorder %s154, %s155
    %p164 = scmp.eq.s32.totalorder %s18, 0
    %p165 = por %p163, %p164
    %p166 = scmp.ne.s32.totalorder %s154, %s155
    %p167 = scmp.eq.s32.totalorder %s19, 1
    %p168 = por %p166, %p167
    %p170 = scmp.ne.s32.totalorder %s155, %s169
    %p171 = scmp.eq.s32.totalorder %s19, 0
    %p172 = por %p170, %p171
    %s173 = ssub.s32 %s13, %s20
    %p174 = scmp.eq.s32.totalorder %s173, 0
    %s176 = sadd.s32 %s175, 1
    %s177 = scalar_select %p174, %s175, %s176
    %p180 = pneg %p174
    %p181 = scmp.eq.s32.totalorder %s13, 1
    %p182 = por %p180, %p181
    %p183 = scmp.ne.s32.totalorder %s175, %s178
    %p184 = scmp.eq.s32.totalorder %s13, 0
    %p185 = por %p183, %p184
    %p186 = scmp.ne.s32.totalorder %s175, %s178
    %p187 = scmp.eq.s32.totalorder %s18, 1
    %p188 = por %p186, %p187
    %p189 = scmp.ne.s32.totalorder %s178, %s179
    %p190 = scmp.eq.s32.totalorder %s18, 0
    %p191 = por %p189, %p190
    %p192 = scmp.ne.s32.totalorder %s178, %s179
    %p193 = scmp.eq.s32.totalorder %s19, 1
    %p194 = por %p192, %p193
    %p196 = scmp.ne.s32.totalorder %s179, %s195
    %p197 = scmp.eq.s32.totalorder %s19, 0
    %p198 = por %p196, %p197
    %p199 = scmp.le.s32.totalorder 1, %s13
    %p200 = scmp.lt.s32.totalorder %s13, 3
    %p201 = pnand %p199, %p200
    %p202 = pneg %p201
    // Predicated region
    $region9: #{_features_neck_call.1} parent=5 // pred_check
      _
    $region10: #{_features_neck_call.1} parent=5 // pred_check_branch
      %204 = sbr.rel (%p201) target = $region12
    $region11: #{_features_neck_call.1} parent=5 // pred_region
      %s205 = ssub.s32 %s13, 1
      // Predicated region
      $region13: #{_features_neck_call.1} parent=11 // pred_check
        %p206 = pneg %p60
      $region14: #{_features_neck_call.1} parent=11 // pred_check_branch
        %208 = sbr.rel (%p206) target = $region16
      $region15: #{_features_neck_call.1} parent=11 // pred_region
        _
      $region16: #{_features_neck_call.1} parent=11 // pred_fallthru
        _
      // Predicated region
      $region17: #{_features_neck_call.1} parent=11 // pred_check
        %p209 = pneg %p81
      $region18: #{_features_neck_call.1} parent=11 // pred_check_branch
        %211 = sbr.rel (%p209) target = $region20
      $region19: #{_features_neck_call.1} parent=11 // pred_region
        _
      $region20: #{_features_neck_call.1} parent=11 // pred_fallthru
        _
      // Predicated region
      $region21: #{_features_neck_call.1} parent=11 // pred_check
        %p212 = pneg %p102
      $region22: #{_features_neck_call.1} parent=11 // pred_check_branch
        %214 = sbr.rel (%p212) target = $region24
      $region23: #{_features_neck_call.1} parent=11 // pred_region
        _
      $region24: #{_features_neck_call.1} parent=11 // pred_fallthru
        _
      // Predicated region
      $region25: #{_features_neck_call.1} parent=11 // pred_check
        %p215 = pneg %p123
      $region26: #{_features_neck_call.1} parent=11 // pred_check_branch
        %217 = sbr.rel (%p215) target = $region28
      $region27: #{_features_neck_call.1} parent=11 // pred_region
        _
      $region28: #{_features_neck_call.1} parent=11 // pred_fallthru
        _
      // Predicated region
      $region29: #{_features_neck_call.1} parent=11 // pred_check
        %p218 = pneg %p144
      $region30: #{_features_neck_call.1} parent=11 // pred_check_branch
        %220 = sbr.rel (%p218) target = $region32
      $region31: #{_features_neck_call.1} parent=11 // pred_region
        _
      $region32: #{_features_neck_call.1} parent=11 // pred_fallthru
        _
      // Predicated region
      $region33: #{_features_neck_call.1} parent=11 // pred_check
        %p221 = pneg %p165
      $region34: #{_features_neck_call.1} parent=11 // pred_check_branch
        %223 = sbr.rel (%p221) target = $region36
      $region35: #{_features_neck_call.1} parent=11 // pred_region
        _
      $region36: #{_features_neck_call.1} parent=11 // pred_fallthru
        _
    $region12: #{_features_neck_call.1} parent=5 // pred_fallthru
      _
    %p224 = scmp.lt.s32.totalorder %s13, 2
    // Predicated region
    $region37: #{_features_neck_call.1} parent=5 // pred_check
      %p225 = pneg %p224
    $region38: #{_features_neck_call.1} parent=5 // pred_check_branch
      %227 = sbr.rel (%p225) target = $region40
    $region39: #{_features_neck_call.1} parent=5 // pred_region
      // Predicated region
      $region41: #{_features_neck_call.1} parent=39 // pred_check
        %p228 = pneg %p33
      $region42: #{_features_neck_call.1} parent=39 // pred_check_branch
        %230 = sbr.rel (%p228) target = $region44
      $region43: #{_features_neck_call.1} parent=39 // pred_region
        %p231 = scmp.lt.s32.totalorder %s13, 1
        %s232 = scalar_select %p231, %s13, 1
        %s233 = smul.addr %s232, 22
        %s234 = smul.addr %s233, 8
        %s235 = scalar_lea.vmem %s0, %s234
      $region44: #{_features_neck_call.1} parent=39 // pred_fallthru
        _
    $region40: #{_features_neck_call.1} parent=5 // pred_fallthru
      _
    %p236 = scmp.le.s32.totalorder 1, %s13
    %p237 = scmp.lt.s32.totalorder %s13, 3
    %p238 = pnand %p236, %p237
    %p239 = pneg %p238
    // Predicated region
    $region45: #{_features_neck_call.1} parent=5 // pred_check
      _
    $region46: #{_features_neck_call.1} parent=5 // pred_check_branch
      %241 = sbr.rel (%p238) target = $region48
    $region47: #{_features_neck_call.1} parent=5 // pred_region
      %s242 = ssub.s32 %s13, 1
      %p243 = scmp.lt.s32.totalorder %s18, 1
      %s244 = scalar_select %p243, %s18, 1
      %s245 = smul.addr %s244, 22
      %s246 = smul.addr %s245, 8
      %s247 = scalar_lea.vmem %s0, %s246
      %p248 = pneg %p39
      %p249 = pneg %p36
      %p250 = pneg %p60
      %p251 = pneg %p57
      %p252 = pneg %p81
      %p253 = pneg %p78
      %p254 = pneg %p102
      %p255 = pneg %p99
      %p256 = pneg %p123
      %p257 = pneg %p120
      %p258 = pneg %p144
      %p259 = pneg %p141
      %p260 = pneg %p165
      %p261 = pneg %p162
      %p262 = pneg %p191
      %p263 = pneg %p188
      %p264 = scmp.lt.s32.totalorder %s18, 1
      %s265 = scalar_select %p264, %s18, 1
      %s266 = smul.addr %s265, 22
      %s267 = smul.addr %s266, 8
      %s268 = scalar_lea.vmem %s7, %s267
      %p269 = scmp.lt.s32.totalorder %s18, 1
      %s270 = scalar_select %p269, %s18, 1
      %s271 = smul.addr %s270, 22
      %s272 = smul.addr %s271, 8
      %s273 = scalar_lea.vmem %s0, %s272
      %p274 = scmp.lt.s32.totalorder %s18, 1
      %s275 = scalar_select %p274, %s18, 1
      %s276 = smul.addr %s275, 22
      %s277 = smul.addr %s276, 8
      %s278 = scalar_lea.vmem %s7, %s277
      %vm280 = vcmask 64512
      %281 = vst.msk [vmem:[#allocation2] sm:$0xff] %vm280, 0.0
      %282 = vst.msk [vmem:[#allocation2 + $0x8] sm:$0xff] %vm280, 0.0
      %283 = vst.msk [vmem:[#allocation2 + $0x10] sm:$0xff] %vm280, 0.0
      %284 = vst.msk [vmem:[#allocation2 + $0x18] sm:$0xff] %vm280, 0.0
      %285 = vst.msk [vmem:[#allocation2 + $0x20] sm:$0xff] %vm280, 0.0
      %286 = vst.msk [vmem:[#allocation2 + $0x28] sm:$0xff] %vm280, 0.0
      %287 = vst.msk [vmem:[#allocation2 + $0x30] sm:$0xff] %vm280, 0.0
      %288 = vst.msk [vmem:[#allocation2 + $0x38] sm:$0xff] %vm280, 0.0
      %289 = vst.msk [vmem:[#allocation2 + $0x40] sm:$0xff] %vm280, 0.0
      %290 = vst.msk [vmem:[#allocation2 + $0x48] sm:$0xff] %vm280, 0.0
      %291 = vst.msk [vmem:[#allocation2 + $0x50] sm:$0xff] %vm280, 0.0
      %292 = vst.msk [vmem:[#allocation2 + $0x58] sm:$0xff] %vm280, 0.0
      %293 = vst.msk [vmem:[#allocation2 + $0x60] sm:$0xff] %vm280, 0.0
      %294 = vst.msk [vmem:[#allocation2 + $0x68] sm:$0xff] %vm280, 0.0
      %295 = vst.msk [vmem:[#allocation2 + $0x70] sm:$0xff] %vm280, 0.0
      %296 = vst.msk [vmem:[#allocation2 + $0x78] sm:$0xff] %vm280, 0.0
      %297 = vst.msk [vmem:[#allocation2 + $0x80] sm:$0xff] %vm280, 0.0
      %298 = vst.msk [vmem:[#allocation2 + $0x88] sm:$0xff] %vm280, 0.0
      %299 = vst.msk [vmem:[#allocation2 + $0x90] sm:$0xff] %vm280, 0.0
      %300 = vst.msk [vmem:[#allocation2 + $0x98] sm:$0xff] %vm280, 0.0
      %301 = vst.msk [vmem:[#allocation2 + $0xa0] sm:$0xff] %vm280, 0.0
      %302 = vst.msk [vmem:[#allocation2 + $0xa8] sm:$0xff] %vm280, 0.0
      %vm303 = vcmask 130048
      %304 = vst.msk [vmem:[#allocation3] sm:$0xff] %vm303, 0.0
      %305 = vst.msk [vmem:[#allocation3 + $0x8] sm:$0xff] %vm303, 0.0
      %306 = vst.msk [vmem:[#allocation3 + $0x10] sm:$0xff] %vm303, 0.0
      %307 = vst.msk [vmem:[#allocation3 + $0x18] sm:$0xff] %vm303, 0.0
      %308 = vst.msk [vmem:[#allocation3 + $0x20] sm:$0xff] %vm303, 0.0
      %309 = vst.msk [vmem:[#allocation3 + $0x28] sm:$0xff] %vm303, 0.0
      %310 = vst.msk [vmem:[#allocation3 + $0x30] sm:$0xff] %vm303, 0.0
      %311 = vst.msk [vmem:[#allocation3 + $0x38] sm:$0xff] %vm303, 0.0
      %312 = vst.msk [vmem:[#allocation3 + $0x40] sm:$0xff] %vm303, 0.0
      %313 = vst.msk [vmem:[#allocation3 + $0x48] sm:$0xff] %vm303, 0.0
      %314 = vst.msk [vmem:[#allocation3 + $0x50] sm:$0xff] %vm303, 0.0
      %315 = vst.msk [vmem:[#allocation3 + $0x58] sm:$0xff] %vm303, 0.0
      %316 = vst.msk [vmem:[#allocation3 + $0x60] sm:$0xff] %vm303, 0.0
      %317 = vst.msk [vmem:[#allocation3 + $0x68] sm:$0xff] %vm303, 0.0
      %318 = vst.msk [vmem:[#allocation3 + $0x70] sm:$0xff] %vm303, 0.0
      %319 = vst.msk [vmem:[#allocation3 + $0x78] sm:$0xff] %vm303, 0.0
      %320 = vst.msk [vmem:[#allocation3 + $0x80] sm:$0xff] %vm303, 0.0
      %321 = vst.msk [vmem:[#allocation3 + $0x88] sm:$0xff] %vm303, 0.0
      %322 = vst.msk [vmem:[#allocation3 + $0x90] sm:$0xff] %vm303, 0.0
      %323 = vst.msk [vmem:[#allocation3 + $0x98] sm:$0xff] %vm303, 0.0
      %324 = vst.msk [vmem:[#allocation3 + $0xa0] sm:$0xff] %vm303, 0.0
      %325 = vst.msk [vmem:[#allocation3 + $0xa8] sm:$0xff] %vm303, 0.0
      %v326 = vld [vmem:[%s273] sm:$0xff]
      %v327 = vld [vmem:[%s273 + $0x8] sm:$0xff]
      %v328 = vld [vmem:[%s273 + $0x10] sm:$0xff]
      %v329 = vld [vmem:[%s273 + $0x18] sm:$0xff]
      %v330 = vld [vmem:[%s273 + $0x20] sm:$0xff]
      %v331 = vld [vmem:[%s273 + $0x28] sm:$0xff]
      %v332 = vld [vmem:[%s273 + $0x30] sm:$0xff]
      %v333 = vld [vmem:[%s273 + $0x38] sm:$0xff]
      %v334 = vld [vmem:[%s273 + $0x40] sm:$0xff]
      %v335 = vld [vmem:[%s273 + $0x48] sm:$0xff]
      %v336 = vld [vmem:[%s273 + $0x50] sm:$0xff]
      %v337 = vld [vmem:[%s273 + $0x58] sm:$0xff]
      %v338 = vld [vmem:[%s273 + $0x60] sm:$0xff]
      %v339 = vld [vmem:[%s273 + $0x68] sm:$0xff]
      %v340 = vld [vmem:[%s273 + $0x70] sm:$0xff]
      %v341 = vld [vmem:[%s273 + $0x78] sm:$0xff]
      %v342 = vld [vmem:[%s273 + $0x80] sm:$0xff]
      %v343 = vld [vmem:[%s273 + $0x88] sm:$0xff]
      %v344 = vpack.c.bf16 %v327, %v326
      %v345 = vpack.c.bf16 %v329, %v328
      %v346 = vpack.c.bf16 %v331, %v330
      %v347 = vpack.c.bf16 %v333, %v332
      %v348 = vpack.c.bf16 %v335, %v334
      %v349 = vpack.c.bf16 %v337, %v336
      %v350 = vpack.c.bf16 %v339, %v338
      %v351 = vpack.c.bf16 %v341, %v340
      %v352 = vpack.c.bf16 %v343, %v342
      %v353 = vld [vmem:[%s1] sm:$0xff]
      %v354 = vpack.c.bf16 %v353, %v353
      %v355 = vld [vmem:[%s273 + $0x1] sm:$0xff]
      %v356 = vld [vmem:[%s273 + $0x9] sm:$0xff]
      %v357 = vld [vmem:[%s273 + $0x11] sm:$0xff]
      %v358 = vld [vmem:[%s273 + $0x19] sm:$0xff]
      %v359 = vld [vmem:[%s273 + $0x21] sm:$0xff]
      %v360 = vld [vmem:[%s273 + $0x29] sm:$0xff]
      %v361 = vld [vmem:[%s273 + $0x31] sm:$0xff]
      %v362 = vld [vmem:[%s273 + $0x39] sm:$0xff]
      %v363 = vld [vmem:[%s273 + $0x41] sm:$0xff]
      %v364 = vld [vmem:[%s273 + $0x49] sm:$0xff]
      %v365 = vld [vmem:[%s273 + $0x51] sm:$0xff]
      %v366 = vld [vmem:[%s273 + $0x59] sm:$0xff]
      %v367 = vld [vmem:[%s273 + $0x61] sm:$0xff]
      %v368 = vld [vmem:[%s273 + $0x69] sm:$0xff]
      %v369 = vld [vmem:[%s273 + $0x71] sm:$0xff]
      %v370 = vld [vmem:[%s273 + $0x79] sm:$0xff]
      %v371 = vld [vmem:[%s273 + $0x81] sm:$0xff]
      %v372 = vld [vmem:[%s273 + $0x89] sm:$0xff]
      %v373 = vpack.c.bf16 %v356, %v355
      %v374 = vpack.c.bf16 %v358, %v357
      %v375 = vpack.c.bf16 %v360, %v359
      %v376 = vpack.c.bf16 %v362, %v361
      %v377 = vpack.c.bf16 %v364, %v363
      %v378 = vpack.c.bf16 %v366, %v365
      %v379 = vpack.c.bf16 %v368, %v367
      %v380 = vpack.c.bf16 %v370, %v369
      %v381 = vpack.c.bf16 %v372, %v371
      %v382 = vld [vmem:[%s1 + $0x8] sm:$0xff]
      %v383 = vpack.c.bf16 %v382, %v382
      %v385 = vsel %vm280, %v373, 0
      %v388 = vsel %vm280, %v374, 0
      %v391 = vsel %vm280, %v375, 0
      %v394 = vsel %vm280, %v376, 0
      %v397 = vsel %vm280, %v377, 0
      %v400 = vsel %vm280, %v378, 0
      %v403 = vsel %vm280, %v379, 0
      %v406 = vsel %vm280, %v380, 0
      %v409 = vsel %vm280, %v381, 0
      %vm411 = vcmask 1043456
      %v413 = vsel %vm411, %v383, 0
      %415 = vmatprep.subr.bf16.mxu0 0
      %416 = vmatpush1.bf16.msra.mxu0 0
      %417 = vmatprep.subr.bf16.mxu0 0
      %418 = vmatpush1.bf16.msra.mxu0 0
      %419 = vmatprep.subr.bf16.mxu0 0
      %420 = vmatpush1.bf16.msra.mxu0 0
      %421 = vmatprep.subr.bf16.mxu0 0
      %422 = vmatpush1.bf16.msra.mxu0 0
      %423 = vmatprep.subr.bf16.mxu0 0
      %424 = vmatpush1.bf16.msra.mxu0 0
      %425 = vmatprep.subr.bf16.mxu0 0
      %426 = vmatpush1.bf16.msra.mxu0 0
      %427 = vmatprep.subr.bf16.mxu0 0
      %428 = vmatpush1.bf16.msra.mxu0 0
      %429 = vmatprep.subr.bf16.mxu0 0
      %430 = vmatpush1.bf16.msra.mxu0 %v413
      %431 = vmatprep.subr.bf16.mxu0 0
      %432 = vmatpush2.bf16.msra.mxu0 0
      %433 = vmatprep.subr.bf16.mxu0 0
      %434 = vmatpush2.bf16.msra.mxu0 0
      %435 = vmatprep.subr.bf16.mxu0 0
      %436 = vmatpush2.bf16.msra.mxu0 0
      %437 = vmatprep.subr.bf16.mxu0 0
      %438 = vmatpush2.bf16.msra.mxu0 0
      %439 = vmatprep.subr.bf16.mxu0 0
      %440 = vmatpush2.bf16.msra.mxu0 0
      %441 = vmatprep.subr.bf16.mxu0 0
      %442 = vmatpush2.bf16.msra.mxu0 0
      %443 = vmatprep.subr.bf16.mxu0 0
      %444 = vmatpush2.bf16.msra.mxu0 0
      %445 = vmatprep.subr.bf16.mxu0 0
      %446 = vmatpush2.bf16.msra.mxu0 0
      %447 = vmatprep.mubr.bf16.mxu0 0
      %448 = vmatmul.mubr.bf16.gmra.mxu0 %v385
      %v449 = vpop.f32.mrf.mxu0
      %v450 = vadd.f32 0.0, %v449
      %v451 = vpop.f32.mrf.mxu0
      %v452 = vpop.f32.mrf.mxu0
      %v453 = vadd.f32 0.0, %v452
      %v454 = vpop.f32.mrf.mxu0
      %455 = vmatprep.mubr.bf16.mxu0 0
      %456 = vmatmul.mubr.bf16.gmra.mxu0 %v388
      %v457 = vpop.f32.mrf.mxu0
      %v458 = vadd.f32 0.0, %v457
      %v459 = vpop.f32.mrf.mxu0
      %v460 = vpop.f32.mrf.mxu0
      %v461 = vadd.f32 0.0, %v460
      %v462 = vpop.f32.mrf.mxu0
      %463 = vmatprep.mubr.bf16.mxu0 0
      %464 = vmatmul.mubr.bf16.gmra.mxu0 %v391
      %v465 = vpop.f32.mrf.mxu0
      %v466 = vadd.f32 0.0, %v465
      %v467 = vpop.f32.mrf.mxu0
      %v468 = vpop.f32.mrf.mxu0
      %v469 = vadd.f32 0.0, %v468
      %v470 = vpop.f32.mrf.mxu0
      %471 = vmatprep.mubr.bf16.mxu0 0
      %472 = vmatmul.mubr.bf16.gmra.mxu0 %v394
      %v473 = vpop.f32.mrf.mxu0
      %v474 = vadd.f32 0.0, %v473
      %v475 = vpop.f32.mrf.mxu0
      %v476 = vpop.f32.mrf.mxu0
      %v477 = vadd.f32 0.0, %v476
      %v478 = vpop.f32.mrf.mxu0
      %479 = vmatprep.mubr.bf16.mxu0 0
      %480 = vmatmul.mubr.bf16.gmra.mxu0 %v397
      %v481 = vpop.f32.mrf.mxu0
      %v482 = vadd.f32 0.0, %v481
      %v483 = vpop.f32.mrf.mxu0
      %v484 = vpop.f32.mrf.mxu0
      %v485 = vadd.f32 0.0, %v484
      %v486 = vpop.f32.mrf.mxu0
      %487 = vmatprep.mubr.bf16.mxu0 0
      %488 = vmatmul.mubr.bf16.gmra.mxu0 %v400
      %v489 = vpop.f32.mrf.mxu0
      %v490 = vadd.f32 0.0, %v489
      %v491 = vpop.f32.mrf.mxu0
      %v492 = vpop.f32.mrf.mxu0
      %v493 = vadd.f32 0.0, %v492
      %v494 = vpop.f32.mrf.mxu0
      %495 = vmatprep.mubr.bf16.mxu0 0
      %496 = vmatmul.mubr.bf16.gmra.mxu0 %v403
      %v497 = vpop.f32.mrf.mxu0
      %v498 = vadd.f32 0.0, %v497
      %v499 = vpop.f32.mrf.mxu0
      %v500 = vpop.f32.mrf.mxu0
      %v501 = vadd.f32 0.0, %v500
      %v502 = vpop.f32.mrf.mxu0
      %503 = vmatprep.mubr.bf16.mxu0 0
      %504 = vmatmul.mubr.bf16.gmra.mxu0 %v406
      %v505 = vpop.f32.mrf.mxu0
      %v506 = vadd.f32 0.0, %v505
      %v507 = vpop.f32.mrf.mxu0
      %v508 = vpop.f32.mrf.mxu0
      %v509 = vadd.f32 0.0, %v508
      %v510 = vpop.f32.mrf.mxu0
      %511 = vmatprep.mubr.bf16.mxu0 0
      %512 = vmatmul.mubr.bf16.gmra.mxu0 %v409
      %v513 = vpop.f32.mrf.mxu0
      %v514 = vadd.f32 0.0, %v513
      %v515 = vpop.f32.mrf.mxu0
      %v516 = vpop.f32.mrf.mxu0
      %v517 = vadd.f32 0.0, %v516
      %v518 = vpop.f32.mrf.mxu0
      %519 = vdwg.mxu0
      %v521 = vsel %vm280, %v344, 0
      %v524 = vsel %vm280, %v345, 0
      %v527 = vsel %vm280, %v346, 0
      %v530 = vsel %vm280, %v347, 0
      %v533 = vsel %vm280, %v348, 0
      %v536 = vsel %vm280, %v349, 0
      %v539 = vsel %vm280, %v350, 0
      %v542 = vsel %vm280, %v351, 0
      %v545 = vsel %vm280, %v352, 0
      %v548 = vsel %vm411, %v354, 0
      %550 = vmatprep.subr.bf16.mxu0 0
      %551 = vmatpush1.bf16.msra.mxu0 0
      %552 = vmatprep.subr.bf16.mxu0 0
      %553 = vmatpush1.bf16.msra.mxu0 0
      %554 = vmatprep.subr.bf16.mxu0 0
      %555 = vmatpush1.bf16.msra.mxu0 0
      %556 = vmatprep.subr.bf16.mxu0 0
      %557 = vmatpush1.bf16.msra.mxu0 0
      %558 = vmatprep.subr.bf16.mxu0 0
      %559 = vmatpush1.bf16.msra.mxu0 0
      %560 = vmatprep.subr.bf16.mxu0 0
      %561 = vmatpush1.bf16.msra.mxu0 0
      %562 = vmatprep.subr.bf16.mxu0 0
      %563 = vmatpush1.bf16.msra.mxu0 0
      %564 = vmatprep.subr.bf16.mxu0 0
      %565 = vmatpush1.bf16.msra.mxu0 %v548
      %566 = vmatprep.subr.bf16.mxu0 0
      %567 = vmatpush2.bf16.msra.mxu0 0
      %568 = vmatprep.subr.bf16.mxu0 0
      %569 = vmatpush2.bf16.msra.mxu0 0
      %570 = vmatprep.subr.bf16.mxu0 0
      %571 = vmatpush2.bf16.msra.mxu0 0
      %572 = vmatprep.subr.bf16.mxu0 0
      %573 = vmatpush2.bf16.msra.mxu0 0
      %574 = vmatprep.subr.bf16.mxu0 0
      %575 = vmatpush2.bf16.msra.mxu0 0
      %576 = vmatprep.subr.bf16.mxu0 0
      %577 = vmatpush2.bf16.msra.mxu0 0
      %578 = vmatprep.subr.bf16.mxu0 0
      %579 = vmatpush2.bf16.msra.mxu0 0
      %580 = vmatprep.subr.bf16.mxu0 0
      %581 = vmatpush2.bf16.msra.mxu0 0
      %582 = vmatprep.mubr.bf16.mxu0 0
      %583 = vmatmul.mubr.bf16.gmra.mxu0 %v521
      %v584 = vpop.f32.mrf.mxu0
      %v585 = vadd.f32 %v450, %v584
      %v586 = vpop.f32.mrf.mxu0
      %v587 = vpop.f32.mrf.mxu0
      %v588 = vadd.f32 %v453, %v587
      %v589 = vpop.f32.mrf.mxu0
      %590 = vmatprep.mubr.bf16.mxu0 0
      %591 = vmatmul.mubr.bf16.gmra.mxu0 %v524
      %v592 = vpop.f32.mrf.mxu0
      %v593 = vadd.f32 %v458, %v592
      %v594 = vpop.f32.mrf.mxu0
      %v595 = vpop.f32.mrf.mxu0
      %v596 = vadd.f32 %v461, %v595
      %v597 = vpop.f32.mrf.mxu0
      %598 = vmatprep.mubr.bf16.mxu0 0
      %599 = vmatmul.mubr.bf16.gmra.mxu0 %v527
      %v600 = vpop.f32.mrf.mxu0
      %v601 = vadd.f32 %v466, %v600
      %v602 = vpop.f32.mrf.mxu0
      %v603 = vpop.f32.mrf.mxu0
      %v604 = vadd.f32 %v469, %v603
      %v605 = vpop.f32.mrf.mxu0
      %606 = vmatprep.mubr.bf16.mxu0 0
      %607 = vmatmul.mubr.bf16.gmra.mxu0 %v530
      %v608 = vpop.f32.mrf.mxu0
      %v609 = vadd.f32 %v474, %v608
      %v610 = vpop.f32.mrf.mxu0
      %v611 = vpop.f32.mrf.mxu0
      %v612 = vadd.f32 %v477, %v611
      %v613 = vpop.f32.mrf.mxu0
      %614 = vmatprep.mubr.bf16.mxu0 0
      %615 = vmatmul.mubr.bf16.gmra.mxu0 %v533
      %v616 = vpop.f32.mrf.mxu0
      %v617 = vadd.f32 %v482, %v616
      %v618 = vpop.f32.mrf.mxu0
      %v619 = vpop.f32.mrf.mxu0
      %v620 = vadd.f32 %v485, %v619
      %v621 = vpop.f32.mrf.mxu0
      %622 = vmatprep.mubr.bf16.mxu0 0
      %623 = vmatmul.mubr.bf16.gmra.mxu0 %v536
      %v624 = vpop.f32.mrf.mxu0
      %v625 = vadd.f32 %v490, %v624
      %v626 = vpop.f32.mrf.mxu0
      %v627 = vpop.f32.mrf.mxu0
      %v628 = vadd.f32 %v493, %v627
      %v629 = vpop.f32.mrf.mxu0
      %630 = vmatprep.mubr.bf16.mxu0 0
      %631 = vmatmul.mubr.bf16.gmra.mxu0 %v539
      %v632 = vpop.f32.mrf.mxu0
      %v633 = vadd.f32 %v498, %v632
      %v634 = vpop.f32.mrf.mxu0
      %v635 = vpop.f32.mrf.mxu0
      %v636 = vadd.f32 %v501, %v635
      %v637 = vpop.f32.mrf.mxu0
      %638 = vmatprep.mubr.bf16.mxu0 0
      %639 = vmatmul.mubr.bf16.gmra.mxu0 %v542
      %v640 = vpop.f32.mrf.mxu0
      %v641 = vadd.f32 %v506, %v640
      %v642 = vpop.f32.mrf.mxu0
      %v643 = vpop.f32.mrf.mxu0
      %v644 = vadd.f32 %v509, %v643
      %v645 = vpop.f32.mrf.mxu0
      %646 = vmatprep.mubr.bf16.mxu0 0
      %647 = vmatmul.mubr.bf16.gmra.mxu0 %v545
      %v648 = vpop.f32.mrf.mxu0
      %v649 = vadd.f32 %v514, %v648
      %v650 = vpop.f32.mrf.mxu0
      %v651 = vpop.f32.mrf.mxu0
      %v652 = vadd.f32 %v517, %v651
      %v653 = vpop.f32.mrf.mxu0
      %654 = vdwg.mxu0
      %v655 = vld [vmem:[%s273 + $0x2] sm:$0xff]
      %v656 = vld [vmem:[%s273 + $0xa] sm:$0xff]
      %v657 = vld [vmem:[%s273 + $0x12] sm:$0xff]
      %v658 = vld [vmem:[%s273 + $0x1a] sm:$0xff]
      %v659 = vld [vmem:[%s273 + $0x22] sm:$0xff]
      %v660 = vld [vmem:[%s273 + $0x2a] sm:$0xff]
      %v661 = vld [vmem:[%s273 + $0x32] sm:$0xff]
      %v662 = vld [vmem:[%s273 + $0x3a] sm:$0xff]
      %v663 = vld [vmem:[%s273 + $0x42] sm:$0xff]
      %v664 = vld [vmem:[%s273 + $0x4a] sm:$0xff]
      %v665 = vld [vmem:[%s273 + $0x52] sm:$0xff]
      %v666 = vld [vmem:[%s273 + $0x5a] sm:$0xff]
      %v667 = vld [vmem:[%s273 + $0x62] sm:$0xff]
      %v668 = vld [vmem:[%s273 + $0x6a] sm:$0xff]
      %v669 = vld [vmem:[%s273 + $0x72] sm:$0xff]
      %v670 = vld [vmem:[%s273 + $0x7a] sm:$0xff]
      %v671 = vld [vmem:[%s273 + $0x82] sm:$0xff]
      %v672 = vld [vmem:[%s273 + $0x8a] sm:$0xff]
      %v673 = vpack.c.bf16 %v656, %v655
      %v674 = vpack.c.bf16 %v658, %v657
      %v675 = vpack.c.bf16 %v660, %v659
      %v676 = vpack.c.bf16 %v662, %v661
      %v677 = vpack.c.bf16 %v664, %v663
      %v678 = vpack.c.bf16 %v666, %v665
      %v679 = vpack.c.bf16 %v668, %v667
      %v680 = vpack.c.bf16 %v670, %v669
      %v681 = vpack.c.bf16 %v672, %v671
      %v682 = vld [vmem:[%s1 + $0x10] sm:$0xff]
      %v683 = vpack.c.bf16 %v682, %v682
      %v685 = vsel %vm280, %v673, 0
      %v688 = vsel %vm280, %v674, 0
      %v691 = vsel %vm280, %v675, 0
      %v694 = vsel %vm280, %v676, 0
      %v697 = vsel %vm280, %v677, 0
      %v700 = vsel %vm280, %v678, 0
      %v703 = vsel %vm280, %v679, 0
      %v706 = vsel %vm280, %v680, 0
      %v709 = vsel %vm280, %v681, 0
      %v712 = vsel %vm411, %v683, 0
      %714 = vmatprep.subr.bf16.mxu0 0
      %715 = vmatpush1.bf16.msra.mxu0 0
      %716 = vmatprep.subr.bf16.mxu0 0
      %717 = vmatpush1.bf16.msra.mxu0 0
      %718 = vmatprep.subr.bf16.mxu0 0
      %719 = vmatpush1.bf16.msra.mxu0 0
      %720 = vmatprep.subr.bf16.mxu0 0
      %721 = vmatpush1.bf16.msra.mxu0 0
      %722 = vmatprep.subr.bf16.mxu0 0
      %723 = vmatpush1.bf16.msra.mxu0 0
      %724 = vmatprep.subr.bf16.mxu0 0
      %725 = vmatpush1.bf16.msra.mxu0 0
      %726 = vmatprep.subr.bf16.mxu0 0
      %727 = vmatpush1.bf16.msra.mxu0 0
      %728 = vmatprep.subr.bf16.mxu0 0
      %729 = vmatpush1.bf16.msra.mxu0 %v712
      %730 = vmatprep.subr.bf16.mxu0 0
      %731 = vmatpush2.bf16.msra.mxu0 0
      %732 = vmatprep.subr.bf16.mxu0 0
      %733 = vmatpush2.bf16.msra.mxu0 0
      %734 = vmatprep.subr.bf16.mxu0 0
      %735 = vmatpush2.bf16.msra.mxu0 0
      %736 = vmatprep.subr.bf16.mxu0 0
      %737 = vmatpush2.bf16.msra.mxu0 0
      %738 = vmatprep.subr.bf16.mxu0 0
      %739 = vmatpush2.bf16.msra.mxu0 0
      %740 = vmatprep.subr.bf16.mxu0 0
      %741 = vmatpush2.bf16.msra.mxu0 0
      %742 = vmatprep.subr.bf16.mxu0 0
      %743 = vmatpush2.bf16.msra.mxu0 0
      %744 = vmatprep.subr.bf16.mxu0 0
      %745 = vmatpush2.bf16.msra.mxu0 0
      %746 = vmatprep.mubr.bf16.mxu0 0
      %747 = vmatmul.mubr.bf16.gmra.mxu0 %v685
      %v748 = vpop.f32.mrf.mxu0
      %v749 = vadd.f32 0.0, %v748
      %v750 = vpop.f32.mrf.mxu0
      %v751 = vpop.f32.mrf.mxu0
      %v752 = vadd.f32 0.0, %v751
      %v753 = vpop.f32.mrf.mxu0
      %754 = vmatprep.mubr.bf16.mxu0 0
      %755 = vmatmul.mubr.bf16.gmra.mxu0 %v688
      %v756 = vpop.f32.mrf.mxu0
      %v757 = vadd.f32 0.0, %v756
      %v758 = vpop.f32.mrf.mxu0
      %v759 = vpop.f32.mrf.mxu0
      %v760 = vadd.f32 0.0, %v759
      %v761 = vpop.f32.mrf.mxu0
      %762 = vmatprep.mubr.bf16.mxu0 0
      %763 = vmatmul.mubr.bf16.gmra.mxu0 %v691
      %v764 = vpop.f32.mrf.mxu0
      %v765 = vadd.f32 0.0, %v764
      %v766 = vpop.f32.mrf.mxu0
      %v767 = vpop.f32.mrf.mxu0
      %v768 = vadd.f32 0.0, %v767
      %v769 = vpop.f32.mrf.mxu0
      %770 = vmatprep.mubr.bf16.mxu0 0
      %771 = vmatmul.mubr.bf16.gmra.mxu0 %v694
      %v772 = vpop.f32.mrf.mxu0
      %v773 = vadd.f32 0.0, %v772
      %v774 = vpop.f32.mrf.mxu0
      %v775 = vpop.f32.mrf.mxu0
      %v776 = vadd.f32 0.0, %v775
      %v777 = vpop.f32.mrf.mxu0
      %778 = vmatprep.mubr.bf16.mxu0 0
      %779 = vmatmul.mubr.bf16.gmra.mxu0 %v697
      %v780 = vpop.f32.mrf.mxu0
      %v781 = vadd.f32 0.0, %v780
      %v782 = vpop.f32.mrf.mxu0
      %v783 = vpop.f32.mrf.mxu0
      %v784 = vadd.f32 0.0, %v783
      %v785 = vpop.f32.mrf.mxu0
      %786 = vmatprep.mubr.bf16.mxu0 0
      %787 = vmatmul.mubr.bf16.gmra.mxu0 %v700
      %v788 = vpop.f32.mrf.mxu0
      %v789 = vadd.f32 0.0, %v788
      %v790 = vpop.f32.mrf.mxu0
      %v791 = vpop.f32.mrf.mxu0
      %v792 = vadd.f32 0.0, %v791
      %v793 = vpop.f32.mrf.mxu0
      %794 = vmatprep.mubr.bf16.mxu0 0
      %795 = vmatmul.mubr.bf16.gmra.mxu0 %v703
      %v796 = vpop.f32.mrf.mxu0
      %v797 = vadd.f32 0.0, %v796
      %v798 = vpop.f32.mrf.mxu0
      %v799 = vpop.f32.mrf.mxu0
      %v800 = vadd.f32 0.0, %v799
      %v801 = vpop.f32.mrf.mxu0
      %802 = vmatprep.mubr.bf16.mxu0 0
      %803 = vmatmul.mubr.bf16.gmra.mxu0 %v706
      %v804 = vpop.f32.mrf.mxu0
      %v805 = vadd.f32 0.0, %v804
      %v806 = vpop.f32.mrf.mxu0
      %v807 = vpop.f32.mrf.mxu0
      %v808 = vadd.f32 0.0, %v807
      %v809 = vpop.f32.mrf.mxu0
      %810 = vmatprep.mubr.bf16.mxu0 0
      %811 = vmatmul.mubr.bf16.gmra.mxu0 %v709
      %v812 = vpop.f32.mrf.mxu0
      %v813 = vadd.f32 0.0, %v812
      %v814 = vpop.f32.mrf.mxu0
      %v815 = vpop.f32.mrf.mxu0
      %v816 = vadd.f32 0.0, %v815
      %v817 = vpop.f32.mrf.mxu0
      %818 = vdwg.mxu0
      %v819 = vadd.f32 %v585, %v749
      %v820 = vadd.f32 %v588, %v752
      %v821 = vadd.f32 %v593, %v757
      %v822 = vadd.f32 %v596, %v760
      %v823 = vadd.f32 %v601, %v765
      %v824 = vadd.f32 %v604, %v768
      %v825 = vadd.f32 %v609, %v773
      %v826 = vadd.f32 %v612, %v776
      %v827 = vadd.f32 %v617, %v781
      %v828 = vadd.f32 %v620, %v784
      %v829 = vadd.f32 %v625, %v789
      %v830 = vadd.f32 %v628, %v792
      %v831 = vadd.f32 %v633, %v797
      %v832 = vadd.f32 %v636, %v800
      %v833 = vadd.f32 %v641, %v805
      %v834 = vadd.f32 %v644, %v808
      %v835 = vadd.f32 %v649, %v813
      %v836 = vadd.f32 %v652, %v816
      %v837 = vld [vmem:[%s273 + $0xc] sm:$0xff]
      %v838 = vld [vmem:[%s273 + $0x14] sm:$0xff]
      %v839 = vld [vmem:[%s273 + $0x1c] sm:$0xff]
      %v840 = vld [vmem:[%s273 + $0x24] sm:$0xff]
      %v841 = vld [vmem:[%s273 + $0x2c] sm:$0xff]
      %v842 = vld [vmem:[%s273 + $0x34] sm:$0xff]
      %v843 = vld [vmem:[%s273 + $0x3c] sm:$0xff]
      %v844 = vld [vmem:[%s273 + $0x44] sm:$0xff]
      %v845 = vld [vmem:[%s273 + $0x4c] sm:$0xff]
      %v846 = vld [vmem:[%s273 + $0x54] sm:$0xff]
      %v847 = vld [vmem:[%s273 + $0x5c] sm:$0xff]
      %v848 = vld [vmem:[%s273 + $0x64] sm:$0xff]
      %v849 = vld [vmem:[%s273 + $0x6c] sm:$0xff]
      %v850 = vld [vmem:[%s273 + $0x74] sm:$0xff]
      %v851 = vld [vmem:[%s273 + $0x7c] sm:$0xff]
      %v852 = vld [vmem:[%s273 + $0x84] sm:$0xff]
      %v853 = vld [vmem:[%s273 + $0x8c] sm:$0xff]
      %v854 = vld [vmem:[%s273 + $0x94] sm:$0xff]
      %v855 = vpack.c.bf16 %v838, %v837
      %v856 = vpack.c.bf16 %v840, %v839
      %v857 = vpack.c.bf16 %v842, %v841
      %v858 = vpack.c.bf16 %v844, %v843
      %v859 = vpack.c.bf16 %v846, %v845
      %v860 = vpack.c.bf16 %v848, %v847
      %v861 = vpack.c.bf16 %v850, %v849
      %v862 = vpack.c.bf16 %v852, %v851
      %v863 = vpack.c.bf16 %v854, %v853
      %v864 = vld [vmem:[%s1 + $0x18] sm:$0xff]
      %v865 = vpack.c.bf16 %v864, %v864
      %v867 = vsel %vm280, %v855, 0
      %v870 = vsel %vm280, %v856, 0
      %v873 = vsel %vm280, %v857, 0
      %v876 = vsel %vm280, %v858, 0
      %v879 = vsel %vm280, %v859, 0
      %v882 = vsel %vm280, %v860, 0
      %v885 = vsel %vm280, %v861, 0
      %v888 = vsel %vm280, %v862, 0
      %v891 = vsel %vm280, %v863, 0
      %v894 = vsel %vm411, %v865, 0
      %896 = vmatprep.subr.bf16.mxu0 0
      %897 = vmatpush1.bf16.msra.mxu0 0
      %898 = vmatprep.subr.bf16.mxu0 0
      %899 = vmatpush1.bf16.msra.mxu0 0
      %900 = vmatprep.subr.bf16.mxu0 0
      %901 = vmatpush1.bf16.msra.mxu0 0
      %902 = vmatprep.subr.bf16.mxu0 0
      %903 = vmatpush1.bf16.msra.mxu0 0
      %904 = vmatprep.subr.bf16.mxu0 0
      %905 = vmatpush1.bf16.msra.mxu0 0
      %906 = vmatprep.subr.bf16.mxu0 0
      %907 = vmatpush1.bf16.msra.mxu0 0
      %908 = vmatprep.subr.bf16.mxu0 0
      %909 = vmatpush1.bf16.msra.mxu0 0
      %910 = vmatprep.subr.bf16.mxu0 0
      %911 = vmatpush1.bf16.msra.mxu0 %v894
      %912 = vmatprep.subr.bf16.mxu0 0
      %913 = vmatpush2.bf16.msra.mxu0 0
      %914 = vmatprep.subr.bf16.mxu0 0
      %915 = vmatpush2.bf16.msra.mxu0 0
      %916 = vmatprep.subr.bf16.mxu0 0
      %917 = vmatpush2.bf16.msra.mxu0 0
      %918 = vmatprep.subr.bf16.mxu0 0
      %919 = vmatpush2.bf16.msra.mxu0 0
      %920 = vmatprep.subr.bf16.mxu0 0
      %921 = vmatpush2.bf16.msra.mxu0 0
      %922 = vmatprep.subr.bf16.mxu0 0
      %923 = vmatpush2.bf16.msra.mxu0 0
      %924 = vmatprep.subr.bf16.mxu0 0
      %925 = vmatpush2.bf16.msra.mxu0 0
      %926 = vmatprep.subr.bf16.mxu0 0
      %927 = vmatpush2.bf16.msra.mxu0 0
      %928 = vmatprep.mubr.bf16.mxu0 0
      %929 = vmatmul.mubr.bf16.gmra.mxu0 %v867
      %v930 = vpop.f32.mrf.mxu0
      %v931 = vadd.f32 0.0, %v930
      %v932 = vpop.f32.mrf.mxu0
      %v933 = vpop.f32.mrf.mxu0
      %v934 = vadd.f32 0.0, %v933
      %v935 = vpop.f32.mrf.mxu0
      %936 = vmatprep.mubr.bf16.mxu0 0
      %937 = vmatmul.mubr.bf16.gmra.mxu0 %v870
      %v938 = vpop.f32.mrf.mxu0
      %v939 = vadd.f32 0.0, %v938
      %v940 = vpop.f32.mrf.mxu0
      %v941 = vpop.f32.mrf.mxu0
      %v942 = vadd.f32 0.0, %v941
      %v943 = vpop.f32.mrf.mxu0
      %944 = vmatprep.mubr.bf16.mxu0 0
      %945 = vmatmul.mubr.bf16.gmra.mxu0 %v873
      %v946 = vpop.f32.mrf.mxu0
      %v947 = vadd.f32 0.0, %v946
      %v948 = vpop.f32.mrf.mxu0
      %v949 = vpop.f32.mrf.mxu0
      %v950 = vadd.f32 0.0, %v949
      %v951 = vpop.f32.mrf.mxu0
      %952 = vmatprep.mubr.bf16.mxu0 0
      %953 = vmatmul.mubr.bf16.gmra.mxu0 %v876
      %v954 = vpop.f32.mrf.mxu0
      %v955 = vadd.f32 0.0, %v954
      %v956 = vpop.f32.mrf.mxu0
      %v957 = vpop.f32.mrf.mxu0
      %v958 = vadd.f32 0.0, %v957
      %v959 = vpop.f32.mrf.mxu0
      %960 = vmatprep.mubr.bf16.mxu0 0
      %961 = vmatmul.mubr.bf16.gmra.mxu0 %v879
      %v962 = vpop.f32.mrf.mxu0
      %v963 = vadd.f32 0.0, %v962
      %v964 = vpop.f32.mrf.mxu0
      %v965 = vpop.f32.mrf.mxu0
      %v966 = vadd.f32 0.0, %v965
      %v967 = vpop.f32.mrf.mxu0
      %968 = vmatprep.mubr.bf16.mxu0 0
      %969 = vmatmul.mubr.bf16.gmra.mxu0 %v882
      %v970 = vpop.f32.mrf.mxu0
      %v971 = vadd.f32 0.0, %v970
      %v972 = vpop.f32.mrf.mxu0
      %v973 = vpop.f32.mrf.mxu0
      %v974 = vadd.f32 0.0, %v973
      %v975 = vpop.f32.mrf.mxu0
      %976 = vmatprep.mubr.bf16.mxu0 0
      %977 = vmatmul.mubr.bf16.gmra.mxu0 %v885
      %v978 = vpop.f32.mrf.mxu0
      %v979 = vadd.f32 0.0, %v978
      %v980 = vpop.f32.mrf.mxu0
      %v981 = vpop.f32.mrf.mxu0
      %v982 = vadd.f32 0.0, %v981
      %v983 = vpop.f32.mrf.mxu0
      %984 = vmatprep.mubr.bf16.mxu0 0
      %985 = vmatmul.mubr.bf16.gmra.mxu0 %v888
      %v986 = vpop.f32.mrf.mxu0
      %v987 = vadd.f32 0.0, %v986
      %v988 = vpop.f32.mrf.mxu0
      %v989 = vpop.f32.mrf.mxu0
      %v990 = vadd.f32 0.0, %v989
      %v991 = vpop.f32.mrf.mxu0
      %992 = vmatprep.mubr.bf16.mxu0 0
      %993 = vmatmul.mubr.bf16.gmra.mxu0 %v891
      %v994 = vpop.f32.mrf.mxu0
      %v995 = vadd.f32 0.0, %v994
      %v996 = vpop.f32.mrf.mxu0
      %v997 = vpop.f32.mrf.mxu0
      %v998 = vadd.f32 0.0, %v997
      %v999 = vpop.f32.mrf.mxu0
      %1000 = vdwg.mxu0
      %v1001 = vadd.f32 %v819, %v931
      %v1002 = vadd.f32 %v820, %v934
      %v1003 = vadd.f32 %v821, %v939
      %v1004 = vadd.f32 %v822, %v942
      %v1005 = vadd.f32 %v823, %v947
      %v1006 = vadd.f32 %v824, %v950
      %v1007 = vadd.f32 %v825, %v955
      %v1008 = vadd.f32 %v826, %v958
      %v1009 = vadd.f32 %v827, %v963
      %v1010 = vadd.f32 %v828, %v966
      %v1011 = vadd.f32 %v829, %v971
      %v1012 = vadd.f32 %v830, %v974
      %v1013 = vadd.f32 %v831, %v979
      %v1014 = vadd.f32 %v832, %v982
      %v1015 = vadd.f32 %v833, %v987
      %v1016 = vadd.f32 %v834, %v990
      %v1017 = vadd.f32 %v835, %v995
      %v1018 = vadd.f32 %v836, %v998
      %v1019 = vld [vmem:[%s273 + $0xd] sm:$0xff]
      %v1020 = vld [vmem:[%s273 + $0x15] sm:$0xff]
      %v1021 = vld [vmem:[%s273 + $0x1d] sm:$0xff]
      %v1022 = vld [vmem:[%s273 + $0x25] sm:$0xff]
      %v1023 = vld [vmem:[%s273 + $0x2d] sm:$0xff]
      %v1024 = vld [vmem:[%s273 + $0x35] sm:$0xff]
      %v1025 = vld [vmem:[%s273 + $0x3d] sm:$0xff]
      %v1026 = vld [vmem:[%s273 + $0x45] sm:$0xff]
      %v1027 = vld [vmem:[%s273 + $0x4d] sm:$0xff]
      %v1028 = vld [vmem:[%s273 + $0x55] sm:$0xff]
      %v1029 = vld [vmem:[%s273 + $0x5d] sm:$0xff]
      %v1030 = vld [vmem:[%s273 + $0x65] sm:$0xff]
      %v1031 = vld [vmem:[%s273 + $0x6d] sm:$0xff]
      %v1032 = vld [vmem:[%s273 + $0x75] sm:$0xff]
      %v1033 = vld [vmem:[%s273 + $0x7d] sm:$0xff]
      %v1034 = vld [vmem:[%s273 + $0x85] sm:$0xff]
      %v1035 = vld [vmem:[%s273 + $0x8d] sm:$0xff]
      %v1036 = vld [vmem:[%s273 + $0x95] sm:$0xff]
      %v1037 = vpack.c.bf16 %v1020, %v1019
      %v1038 = vpack.c.bf16 %v1022, %v1021
      %v1039 = vpack.c.bf16 %v1024, %v1023
      %v1040 = vpack.c.bf16 %v1026, %v1025
      %v1041 = vpack.c.bf16 %v1028, %v1027
      %v1042 = vpack.c.bf16 %v1030, %v1029
      %v1043 = vpack.c.bf16 %v1032, %v1031
      %v1044 = vpack.c.bf16 %v1034, %v1033
      %v1045 = vpack.c.bf16 %v1036, %v1035
      %v1046 = vld [vmem:[%s1 + $0x20] sm:$0xff]
      %v1047 = vpack.c.bf16 %v1046, %v1046
      %v1049 = vsel %vm280, %v1037, 0
      %v1052 = vsel %vm280, %v1038, 0
      %v1055 = vsel %vm280, %v1039, 0
      %v1058 = vsel %vm280, %v1040, 0
      %v1061 = vsel %vm280, %v1041, 0
      %v1064 = vsel %vm280, %v1042, 0
      %v1067 = vsel %vm280, %v1043, 0
      %v1070 = vsel %vm280, %v1044, 0
      %v1073 = vsel %vm280, %v1045, 0
      %v1076 = vsel %vm411, %v1047, 0
      %1078 = vmatprep.subr.bf16.mxu0 0
      %1079 = vmatpush1.bf16.msra.mxu0 0
      %1080 = vmatprep.subr.bf16.mxu0 0
      %1081 = vmatpush1.bf16.msra.mxu0 0
      %1082 = vmatprep.subr.bf16.mxu0 0
      %1083 = vmatpush1.bf16.msra.mxu0 0
      %1084 = vmatprep.subr.bf16.mxu0 0
      %1085 = vmatpush1.bf16.msra.mxu0 0
      %1086 = vmatprep.subr.bf16.mxu0 0
      %1087 = vmatpush1.bf16.msra.mxu0 0
      %1088 = vmatprep.subr.bf16.mxu0 0
      %1089 = vmatpush1.bf16.msra.mxu0 0
      %1090 = vmatprep.subr.bf16.mxu0 0
      %1091 = vmatpush1.bf16.msra.mxu0 0
      %1092 = vmatprep.subr.bf16.mxu0 0
      %1093 = vmatpush1.bf16.msra.mxu0 %v1076
      %1094 = vmatprep.subr.bf16.mxu0 0
      %1095 = vmatpush2.bf16.msra.mxu0 0
      %1096 = vmatprep.subr.bf16.mxu0 0
      %1097 = vmatpush2.bf16.msra.mxu0 0
      %1098 = vmatprep.subr.bf16.mxu0 0
      %1099 = vmatpush2.bf16.msra.mxu0 0
      %1100 = vmatprep.subr.bf16.mxu0 0
      %1101 = vmatpush2.bf16.msra.mxu0 0
      %1102 = vmatprep.subr.bf16.mxu0 0
      %1103 = vmatpush2.bf16.msra.mxu0 0
      %1104 = vmatprep.subr.bf16.mxu0 0
      %1105 = vmatpush2.bf16.msra.mxu0 0
      %1106 = vmatprep.subr.bf16.mxu0 0
      %1107 = vmatpush2.bf16.msra.mxu0 0
      %1108 = vmatprep.subr.bf16.mxu0 0
      %1109 = vmatpush2.bf16.msra.mxu0 0
      %1110 = vmatprep.mubr.bf16.mxu0 0
      %1111 = vmatmul.mubr.bf16.gmra.mxu0 %v1049
      %v1112 = vpop.f32.mrf.mxu0
      %v1113 = vadd.f32 0.0, %v1112
      %v1114 = vpop.f32.mrf.mxu0
      %v1115 = vpop.f32.mrf.mxu0
      %v1116 = vadd.f32 0.0, %v1115
      %v1117 = vpop.f32.mrf.mxu0
      %1118 = vmatprep.mubr.bf16.mxu0 0
      %1119 = vmatmul.mubr.bf16.gmra.mxu0 %v1052
      %v1120 = vpop.f32.mrf.mxu0
      %v1121 = vadd.f32 0.0, %v1120
      %v1122 = vpop.f32.mrf.mxu0
      %v1123 = vpop.f32.mrf.mxu0
      %v1124 = vadd.f32 0.0, %v1123
      %v1125 = vpop.f32.mrf.mxu0
      %1126 = vmatprep.mubr.bf16.mxu0 0
      %1127 = vmatmul.mubr.bf16.gmra.mxu0 %v1055
      %v1128 = vpop.f32.mrf.mxu0
      %v1129 = vadd.f32 0.0, %v1128
      %v1130 = vpop.f32.mrf.mxu0
      %v1131 = vpop.f32.mrf.mxu0
      %v1132 = vadd.f32 0.0, %v1131
      %v1133 = vpop.f32.mrf.mxu0
      %1134 = vmatprep.mubr.bf16.mxu0 0
      %1135 = vmatmul.mubr.bf16.gmra.mxu0 %v1058
      %v1136 = vpop.f32.mrf.mxu0
      %v1137 = vadd.f32 0.0, %v1136
      %v1138 = vpop.f32.mrf.mxu0
      %v1139 = vpop.f32.mrf.mxu0
      %v1140 = vadd.f32 0.0, %v1139
      %v1141 = vpop.f32.mrf.mxu0
      %1142 = vmatprep.mubr.bf16.mxu0 0
      %1143 = vmatmul.mubr.bf16.gmra.mxu0 %v1061
      %v1144 = vpop.f32.mrf.mxu0
      %v1145 = vadd.f32 0.0, %v1144
      %v1146 = vpop.f32.mrf.mxu0
      %v1147 = vpop.f32.mrf.mxu0
      %v1148 = vadd.f32 0.0, %v1147
      %v1149 = vpop.f32.mrf.mxu0
      %1150 = vmatprep.mubr.bf16.mxu0 0
      %1151 = vmatmul.mubr.bf16.gmra.mxu0 %v1064
      %v1152 = vpop.f32.mrf.mxu0
      %v1153 = vadd.f32 0.0, %v1152
      %v1154 = vpop.f32.mrf.mxu0
      %v1155 = vpop.f32.mrf.mxu0
      %v1156 = vadd.f32 0.0, %v1155
      %v1157 = vpop.f32.mrf.mxu0
      %1158 = vmatprep.mubr.bf16.mxu0 0
      %1159 = vmatmul.mubr.bf16.gmra.mxu0 %v1067
      %v1160 = vpop.f32.mrf.mxu0
      %v1161 = vadd.f32 0.0, %v1160
      %v1162 = vpop.f32.mrf.mxu0
      %v1163 = vpop.f32.mrf.mxu0
      %v1164 = vadd.f32 0.0, %v1163
      %v1165 = vpop.f32.mrf.mxu0
      %1166 = vmatprep.mubr.bf16.mxu0 0
      %1167 = vmatmul.mubr.bf16.gmra.mxu0 %v1070
      %v1168 = vpop.f32.mrf.mxu0
      %v1169 = vadd.f32 0.0, %v1168
      %v1170 = vpop.f32.mrf.mxu0
      %v1171 = vpop.f32.mrf.mxu0
      %v1172 = vadd.f32 0.0, %v1171
      %v1173 = vpop.f32.mrf.mxu0
      %1174 = vmatprep.mubr.bf16.mxu0 0
      %1175 = vmatmul.mubr.bf16.gmra.mxu0 %v1073
      %v1176 = vpop.f32.mrf.mxu0
      %v1177 = vadd.f32 0.0, %v1176
      %v1178 = vpop.f32.mrf.mxu0
      %v1179 = vpop.f32.mrf.mxu0
      %v1180 = vadd.f32 0.0, %v1179
      %v1181 = vpop.f32.mrf.mxu0
      %1182 = vdwg.mxu0
      %v1183 = vadd.f32 %v1001, %v1113
      %v1184 = vadd.f32 %v1002, %v1116
      %v1185 = vadd.f32 %v1003, %v1121
      %v1186 = vadd.f32 %v1004, %v1124
      %v1187 = vadd.f32 %v1005, %v1129
      %v1188 = vadd.f32 %v1006, %v1132
      %v1189 = vadd.f32 %v1007, %v1137
      %v1190 = vadd.f32 %v1008, %v1140
      %v1191 = vadd.f32 %v1009, %v1145
      %v1192 = vadd.f32 %v1010, %v1148
      %v1193 = vadd.f32 %v1011, %v1153
      %v1194 = vadd.f32 %v1012, %v1156
      %v1195 = vadd.f32 %v1013, %v1161
      %v1196 = vadd.f32 %v1014, %v1164
      %v1197 = vadd.f32 %v1015, %v1169
      %v1198 = vadd.f32 %v1016, %v1172
      %v1199 = vadd.f32 %v1017, %v1177
      %v1200 = vadd.f32 %v1018, %v1180
      %v1201 = vld [vmem:[%s273 + $0xe] sm:$0xff]
      %v1202 = vld [vmem:[%s273 + $0x16] sm:$0xff]
      %v1203 = vld [vmem:[%s273 + $0x1e] sm:$0xff]
      %v1204 = vld [vmem:[%s273 + $0x26] sm:$0xff]
      %v1205 = vld [vmem:[%s273 + $0x2e] sm:$0xff]
      %v1206 = vld [vmem:[%s273 + $0x36] sm:$0xff]
      %v1207 = vld [vmem:[%s273 + $0x3e] sm:$0xff]
      %v1208 = vld [vmem:[%s273 + $0x46] sm:$0xff]
      %v1209 = vld [vmem:[%s273 + $0x4e] sm:$0xff]
      %v1210 = vld [vmem:[%s273 + $0x56] sm:$0xff]
      %v1211 = vld [vmem:[%s273 + $0x5e] sm:$0xff]
      %v1212 = vld [vmem:[%s273 + $0x66] sm:$0xff]
      %v1213 = vld [vmem:[%s273 + $0x6e] sm:$0xff]
      %v1214 = vld [vmem:[%s273 + $0x76] sm:$0xff]
      %v1215 = vld [vmem:[%s273 + $0x7e] sm:$0xff]
      %v1216 = vld [vmem:[%s273 + $0x86] sm:$0xff]
      %v1217 = vld [vmem:[%s273 + $0x8e] sm:$0xff]
      %v1218 = vld [vmem:[%s273 + $0x96] sm:$0xff]
      %v1219 = vpack.c.bf16 %v1202, %v1201
      %v1220 = vpack.c.bf16 %v1204, %v1203
      %v1221 = vpack.c.bf16 %v1206, %v1205
      %v1222 = vpack.c.bf16 %v1208, %v1207
      %v1223 = vpack.c.bf16 %v1210, %v1209
      %v1224 = vpack.c.bf16 %v1212, %v1211
      %v1225 = vpack.c.bf16 %v1214, %v1213
      %v1226 = vpack.c.bf16 %v1216, %v1215
      %v1227 = vpack.c.bf16 %v1218, %v1217
      %v1228 = vld [vmem:[%s1 + $0x28] sm:$0xff]
      %v1229 = vpack.c.bf16 %v1228, %v1228
      %v1231 = vsel %vm280, %v1219, 0
      %v1234 = vsel %vm280, %v1220, 0
      %v1237 = vsel %vm280, %v1221, 0
      %v1240 = vsel %vm280, %v1222, 0
      %v1243 = vsel %vm280, %v1223, 0
      %v1246 = vsel %vm280, %v1224, 0
      %v1249 = vsel %vm280, %v1225, 0
      %v1252 = vsel %vm280, %v1226, 0
      %v1255 = vsel %vm280, %v1227, 0
      %v1258 = vsel %vm411, %v1229, 0
      %1260 = vmatprep.subr.bf16.mxu0 0
      %1261 = vmatpush1.bf16.msra.mxu0 0
      %1262 = vmatprep.subr.bf16.mxu0 0
      %1263 = vmatpush1.bf16.msra.mxu0 0
      %1264 = vmatprep.subr.bf16.mxu0 0
      %1265 = vmatpush1.bf16.msra.mxu0 0
      %1266 = vmatprep.subr.bf16.mxu0 0
      %1267 = vmatpush1.bf16.msra.mxu0 0
      %1268 = vmatprep.subr.bf16.mxu0 0
      %1269 = vmatpush1.bf16.msra.mxu0 0
      %1270 = vmatprep.subr.bf16.mxu0 0
      %1271 = vmatpush1.bf16.msra.mxu0 0
      %1272 = vmatprep.subr.bf16.mxu0 0
      %1273 = vmatpush1.bf16.msra.mxu0 0
      %1274 = vmatprep.subr.bf16.mxu0 0
      %1275 = vmatpush1.bf16.msra.mxu0 %v1258
      %1276 = vmatprep.subr.bf16.mxu0 0
      %1277 = vmatpush2.bf16.msra.mxu0 0
      %1278 = vmatprep.subr.bf16.mxu0 0
      %1279 = vmatpush2.bf16.msra.mxu0 0
      %1280 = vmatprep.subr.bf16.mxu0 0
      %1281 = vmatpush2.bf16.msra.mxu0 0
      %1282 = vmatprep.subr.bf16.mxu0 0
      %1283 = vmatpush2.bf16.msra.mxu0 0
      %1284 = vmatprep.subr.bf16.mxu0 0
      %1285 = vmatpush2.bf16.msra.mxu0 0
      %1286 = vmatprep.subr.bf16.mxu0 0
      %1287 = vmatpush2.bf16.msra.mxu0 0
      %1288 = vmatprep.subr.bf16.mxu0 0
      %1289 = vmatpush2.bf16.msra.mxu0 0
      %1290 = vmatprep.subr.bf16.mxu0 0
      %1291 = vmatpush2.bf16.msra.mxu0 0
      %1292 = vmatprep.mubr.bf16.mxu0 0
      %1293 = vmatmul.mubr.bf16.gmra.mxu0 %v1231
      %v1294 = vpop.f32.mrf.mxu0
      %v1295 = vadd.f32 0.0, %v1294
      %v1296 = vpop.f32.mrf.mxu0
      %v1297 = vpop.f32.mrf.mxu0
      %v1298 = vadd.f32 0.0, %v1297
      %v1299 = vpop.f32.mrf.mxu0
      %1300 = vmatprep.mubr.bf16.mxu0 0
      %1301 = vmatmul.mubr.bf16.gmra.mxu0 %v1234
      %v1302 = vpop.f32.mrf.mxu0
      %v1303 = vadd.f32 0.0, %v1302
      %v1304 = vpop.f32.mrf.mxu0
      %v1305 = vpop.f32.mrf.mxu0
      %v1306 = vadd.f32 0.0, %v1305
      %v1307 = vpop.f32.mrf.mxu0
      %1308 = vmatprep.mubr.bf16.mxu0 0
      %1309 = vmatmul.mubr.bf16.gmra.mxu0 %v1237
      %v1310 = vpop.f32.mrf.mxu0
      %v1311 = vadd.f32 0.0, %v1310
      %v1312 = vpop.f32.mrf.mxu0
      %v1313 = vpop.f32.mrf.mxu0
      %v1314 = vadd.f32 0.0, %v1313
      %v1315 = vpop.f32.mrf.mxu0
      %1316 = vmatprep.mubr.bf16.mxu0 0
      %1317 = vmatmul.mubr.bf16.gmra.mxu0 %v1240
      %v1318 = vpop.f32.mrf.mxu0
      %v1319 = vadd.f32 0.0, %v1318
      %v1320 = vpop.f32.mrf.mxu0
      %v1321 = vpop.f32.mrf.mxu0
      %v1322 = vadd.f32 0.0, %v1321
      %v1323 = vpop.f32.mrf.mxu0
      %1324 = vmatprep.mubr.bf16.mxu0 0
      %1325 = vmatmul.mubr.bf16.gmra.mxu0 %v1243
      %v1326 = vpop.f32.mrf.mxu0
      %v1327 = vadd.f32 0.0, %v1326
      %v1328 = vpop.f32.mrf.mxu0
      %v1329 = vpop.f32.mrf.mxu0
      %v1330 = vadd.f32 0.0, %v1329
      %v1331 = vpop.f32.mrf.mxu0
      %1332 = vmatprep.mubr.bf16.mxu0 0
      %1333 = vmatmul.mubr.bf16.gmra.mxu0 %v1246
      %v1334 = vpop.f32.mrf.mxu0
      %v1335 = vadd.f32 0.0, %v1334
      %v1336 = vpop.f32.mrf.mxu0
      %v1337 = vpop.f32.mrf.mxu0
      %v1338 = vadd.f32 0.0, %v1337
      %v1339 = vpop.f32.mrf.mxu0
      %1340 = vmatprep.mubr.bf16.mxu0 0
      %1341 = vmatmul.mubr.bf16.gmra.mxu0 %v1249
      %v1342 = vpop.f32.mrf.mxu0
      %v1343 = vadd.f32 0.0, %v1342
      %v1344 = vpop.f32.mrf.mxu0
      %v1345 = vpop.f32.mrf.mxu0
      %v1346 = vadd.f32 0.0, %v1345
      %v1347 = vpop.f32.mrf.mxu0
      %1348 = vmatprep.mubr.bf16.mxu0 0
      %1349 = vmatmul.mubr.bf16.gmra.mxu0 %v1252
      %v1350 = vpop.f32.mrf.mxu0
      %v1351 = vadd.f32 0.0, %v1350
      %v1352 = vpop.f32.mrf.mxu0
      %v1353 = vpop.f32.mrf.mxu0
      %v1354 = vadd.f32 0.0, %v1353
      %v1355 = vpop.f32.mrf.mxu0
      %1356 = vmatprep.mubr.bf16.mxu0 0
      %1357 = vmatmul.mubr.bf16.gmra.mxu0 %v1255
      %v1358 = vpop.f32.mrf.mxu0
      %v1359 = vadd.f32 0.0, %v1358
      %v1360 = vpop.f32.mrf.mxu0
      %v1361 = vpop.f32.mrf.mxu0
      %v1362 = vadd.f32 0.0, %v1361
      %v1363 = vpop.f32.mrf.mxu0
      %1364 = vdwg.mxu0
      %v1365 = vadd.f32 %v1183, %v1295
      %v1366 = vadd.f32 %v1184, %v1298
      %v1367 = vadd.f32 %v1185, %v1303
      %v1368 = vadd.f32 %v1186, %v1306
      %v1369 = vadd.f32 %v1187, %v1311
      %v1370 = vadd.f32 %v1188, %v1314
      %v1371 = vadd.f32 %v1189, %v1319
      %v1372 = vadd.f32 %v1190, %v1322
      %v1373 = vadd.f32 %v1191, %v1327
      %v1374 = vadd.f32 %v1192, %v1330
      %v1375 = vadd.f32 %v1193, %v1335
      %v1376 = vadd.f32 %v1194, %v1338
      %v1377 = vadd.f32 %v1195, %v1343
      %v1378 = vadd.f32 %v1196, %v1346
      %v1379 = vadd.f32 %v1197, %v1351
      %v1380 = vadd.f32 %v1198, %v1354
      %v1381 = vadd.f32 %v1199, %v1359
      %v1382 = vadd.f32 %v1200, %v1362
      %v1383 = vld [vmem:[%s273 + $0x18] sm:$0xff]
      %v1384 = vld [vmem:[%s273 + $0x20] sm:$0xff]
      %v1385 = vld [vmem:[%s273 + $0x28] sm:$0xff]
      %v1386 = vld [vmem:[%s273 + $0x30] sm:$0xff]
      %v1387 = vld [vmem:[%s273 + $0x38] sm:$0xff]
      %v1388 = vld [vmem:[%s273 + $0x40] sm:$0xff]
      %v1389 = vld [vmem:[%s273 + $0x48] sm:$0xff]
      %v1390 = vld [vmem:[%s273 + $0x50] sm:$0xff]
      %v1391 = vld [vmem:[%s273 + $0x58] sm:$0xff]
      %v1392 = vld [vmem:[%s273 + $0x60] sm:$0xff]
      %v1393 = vld [vmem:[%s273 + $0x68] sm:$0xff]
      %v1394 = vld [vmem:[%s273 + $0x70] sm:$0xff]
      %v1395 = vld [vmem:[%s273 + $0x78] sm:$0xff]
      %v1396 = vld [vmem:[%s273 + $0x80] sm:$0xff]
      %v1397 = vld [vmem:[%s273 + $0x88] sm:$0xff]
      %v1398 = vld [vmem:[%s273 + $0x90] sm:$0xff]
      %v1399 = vld [vmem:[%s273 + $0x98] sm:$0xff]
      %v1400 = vld [vmem:[%s273 + $0xa0] sm:$0xff]
      %v1401 = vpack.c.bf16 %v1384, %v1383
      %v1402 = vpack.c.bf16 %v1386, %v1385
      %v1403 = vpack.c.bf16 %v1388, %v1387
      %v1404 = vpack.c.bf16 %v1390, %v1389
      %v1405 = vpack.c.bf16 %v1392, %v1391
      %v1406 = vpack.c.bf16 %v1394, %v1393
      %v1407 = vpack.c.bf16 %v1396, %v1395
      %v1408 = vpack.c.bf16 %v1398, %v1397
      %v1409 = vpack.c.bf16 %v1400, %v1399
      %v1410 = vld [vmem:[%s1 + $0x30] sm:$0xff]
      %v1411 = vpack.c.bf16 %v1410, %v1410
      %v1413 = vsel %vm280, %v1401, 0
      %v1416 = vsel %vm280, %v1402, 0
      %v1419 = vsel %vm280, %v1403, 0
      %v1422 = vsel %vm280, %v1404, 0
      %v1425 = vsel %vm280, %v1405, 0
      %v1428 = vsel %vm280, %v1406, 0
      %v1431 = vsel %vm280, %v1407, 0
      %v1434 = vsel %vm280, %v1408, 0
      %v1437 = vsel %vm280, %v1409, 0
      %v1440 = vsel %vm411, %v1411, 0
      %1442 = vmatprep.subr.bf16.mxu0 0
      %1443 = vmatpush1.bf16.msra.mxu0 0
      %1444 = vmatprep.subr.bf16.mxu0 0
      %1445 = vmatpush1.bf16.msra.mxu0 0
      %1446 = vmatprep.subr.bf16.mxu0 0
      %1447 = vmatpush1.bf16.msra.mxu0 0
      %1448 = vmatprep.subr.bf16.mxu0 0
      %1449 = vmatpush1.bf16.msra.mxu0 0
      %1450 = vmatprep.subr.bf16.mxu0 0
      %1451 = vmatpush1.bf16.msra.mxu0 0
      %1452 = vmatprep.subr.bf16.mxu0 0
      %1453 = vmatpush1.bf16.msra.mxu0 0
      %1454 = vmatprep.subr.bf16.mxu0 0
      %1455 = vmatpush1.bf16.msra.mxu0 0
      %1456 = vmatprep.subr.bf16.mxu0 0
      %1457 = vmatpush1.bf16.msra.mxu0 %v1440
      %1458 = vmatprep.subr.bf16.mxu0 0
      %1459 = vmatpush2.bf16.msra.mxu0 0
      %1460 = vmatprep.subr.bf16.mxu0 0
      %1461 = vmatpush2.bf16.msra.mxu0 0
      %1462 = vmatprep.subr.bf16.mxu0 0
      %1463 = vmatpush2.bf16.msra.mxu0 0
      %1464 = vmatprep.subr.bf16.mxu0 0
      %1465 = vmatpush2.bf16.msra.mxu0 0
      %1466 = vmatprep.subr.bf16.mxu0 0
      %1467 = vmatpush2.bf16.msra.mxu0 0
      %1468 = vmatprep.subr.bf16.mxu0 0
      %1469 = vmatpush2.bf16.msra.mxu0 0
      %1470 = vmatprep.subr.bf16.mxu0 0
      %1471 = vmatpush2.bf16.msra.mxu0 0
      %1472 = vmatprep.subr.bf16.mxu0 0
      %1473 = vmatpush2.bf16.msra.mxu0 0
      %1474 = vmatprep.mubr.bf16.mxu0 0
      %1475 = vmatmul.mubr.bf16.gmra.mxu0 %v1413
      %v1476 = vpop.f32.mrf.mxu0
      %v1477 = vadd.f32 0.0, %v1476
      %v1478 = vpop.f32.mrf.mxu0
      %v1479 = vpop.f32.mrf.mxu0
      %v1480 = vadd.f32 0.0, %v1479
      %v1481 = vpop.f32.mrf.mxu0
      %1482 = vmatprep.mubr.bf16.mxu0 0
      %1483 = vmatmul.mubr.bf16.gmra.mxu0 %v1416
      %v1484 = vpop.f32.mrf.mxu0
      %v1485 = vadd.f32 0.0, %v1484
      %v1486 = vpop.f32.mrf.mxu0
      %v1487 = vpop.f32.mrf.mxu0
      %v1488 = vadd.f32 0.0, %v1487
      %v1489 = vpop.f32.mrf.mxu0
      %1490 = vmatprep.mubr.bf16.mxu0 0
      %1491 = vmatmul.mubr.bf16.gmra.mxu0 %v1419
      %v1492 = vpop.f32.mrf.mxu0
      %v1493 = vadd.f32 0.0, %v1492
      %v1494 = vpop.f32.mrf.mxu0
      %v1495 = vpop.f32.mrf.mxu0
      %v1496 = vadd.f32 0.0, %v1495
      %v1497 = vpop.f32.mrf.mxu0
      %1498 = vmatprep.mubr.bf16.mxu0 0
      %1499 = vmatmul.mubr.bf16.gmra.mxu0 %v1422
      %v1500 = vpop.f32.mrf.mxu0
      %v1501 = vadd.f32 0.0, %v1500
      %v1502 = vpop.f32.mrf.mxu0
      %v1503 = vpop.f32.mrf.mxu0
      %v1504 = vadd.f32 0.0, %v1503
      %v1505 = vpop.f32.mrf.mxu0
      %1506 = vmatprep.mubr.bf16.mxu0 0
      %1507 = vmatmul.mubr.bf16.gmra.mxu0 %v1425
      %v1508 = vpop.f32.mrf.mxu0
      %v1509 = vadd.f32 0.0, %v1508
      %v1510 = vpop.f32.mrf.mxu0
      %v1511 = vpop.f32.mrf.mxu0
      %v1512 = vadd.f32 0.0, %v1511
      %v1513 = vpop.f32.mrf.mxu0
      %1514 = vmatprep.mubr.bf16.mxu0 0
      %1515 = vmatmul.mubr.bf16.gmra.mxu0 %v1428
      %v1516 = vpop.f32.mrf.mxu0
      %v1517 = vadd.f32 0.0, %v1516
      %v1518 = vpop.f32.mrf.mxu0
      %v1519 = vpop.f32.mrf.mxu0
      %v1520 = vadd.f32 0.0, %v1519
      %v1521 = vpop.f32.mrf.mxu0
      %1522 = vmatprep.mubr.bf16.mxu0 0
      %1523 = vmatmul.mubr.bf16.gmra.mxu0 %v1431
      %v1524 = vpop.f32.mrf.mxu0
      %v1525 = vadd.f32 0.0, %v1524
      %v1526 = vpop.f32.mrf.mxu0
      %v1527 = vpop.f32.mrf.mxu0
      %v1528 = vadd.f32 0.0, %v1527
      %v1529 = vpop.f32.mrf.mxu0
      %1530 = vmatprep.mubr.bf16.mxu0 0
      %1531 = vmatmul.mubr.bf16.gmra.mxu0 %v1434
      %v1532 = vpop.f32.mrf.mxu0
      %v1533 = vadd.f32 0.0, %v1532
      %v1534 = vpop.f32.mrf.mxu0
      %v1535 = vpop.f32.mrf.mxu0
      %v1536 = vadd.f32 0.0, %v1535
      %v1537 = vpop.f32.mrf.mxu0
      %1538 = vmatprep.mubr.bf16.mxu0 0
      %1539 = vmatmul.mubr.bf16.gmra.mxu0 %v1437
      %v1540 = vpop.f32.mrf.mxu0
      %v1541 = vadd.f32 0.0, %v1540
      %v1542 = vpop.f32.mrf.mxu0
      %v1543 = vpop.f32.mrf.mxu0
      %v1544 = vadd.f32 0.0, %v1543
      %v1545 = vpop.f32.mrf.mxu0
      %1546 = vdwg.mxu0
      %v1547 = vadd.f32 %v1365, %v1477
      %v1548 = vadd.f32 %v1366, %v1480
      %v1549 = vadd.f32 %v1367, %v1485
      %v1550 = vadd.f32 %v1368, %v1488
      %v1551 = vadd.f32 %v1369, %v1493
      %v1552 = vadd.f32 %v1370, %v1496
      %v1553 = vadd.f32 %v1371, %v1501
      %v1554 = vadd.f32 %v1372, %v1504
      %v1555 = vadd.f32 %v1373, %v1509
      %v1556 = vadd.f32 %v1374, %v1512
      %v1557 = vadd.f32 %v1375, %v1517
      %v1558 = vadd.f32 %v1376, %v1520
      %v1559 = vadd.f32 %v1377, %v1525
      %v1560 = vadd.f32 %v1378, %v1528
      %v1561 = vadd.f32 %v1379, %v1533
      %v1562 = vadd.f32 %v1380, %v1536
      %v1563 = vadd.f32 %v1381, %v1541
      %v1564 = vadd.f32 %v1382, %v1544
      %v1565 = vld [vmem:[%s273 + $0x19] sm:$0xff]
      %v1566 = vld [vmem:[%s273 + $0x21] sm:$0xff]
      %v1567 = vld [vmem:[%s273 + $0x29] sm:$0xff]
      %v1568 = vld [vmem:[%s273 + $0x31] sm:$0xff]
      %v1569 = vld [vmem:[%s273 + $0x39] sm:$0xff]
      %v1570 = vld [vmem:[%s273 + $0x41] sm:$0xff]
      %v1571 = vld [vmem:[%s273 + $0x49] sm:$0xff]
      %v1572 = vld [vmem:[%s273 + $0x51] sm:$0xff]
      %v1573 = vld [vmem:[%s273 + $0x59] sm:$0xff]
      %v1574 = vld [vmem:[%s273 + $0x61] sm:$0xff]
      %v1575 = vld [vmem:[%s273 + $0x69] sm:$0xff]
      %v1576 = vld [vmem:[%s273 + $0x71] sm:$0xff]
      %v1577 = vld [vmem:[%s273 + $0x79] sm:$0xff]
      %v1578 = vld [vmem:[%s273 + $0x81] sm:$0xff]
      %v1579 = vld [vmem:[%s273 + $0x89] sm:$0xff]
      %v1580 = vld [vmem:[%s273 + $0x91] sm:$0xff]
      %v1581 = vld [vmem:[%s273 + $0x99] sm:$0xff]
      %v1582 = vld [vmem:[%s273 + $0xa1] sm:$0xff]
      %v1583 = vpack.c.bf16 %v1566, %v1565
      %v1584 = vpack.c.bf16 %v1568, %v1567
      %v1585 = vpack.c.bf16 %v1570, %v1569
      %v1586 = vpack.c.bf16 %v1572, %v1571
      %v1587 = vpack.c.bf16 %v1574, %v1573
      %v1588 = vpack.c.bf16 %v1576, %v1575
      %v1589 = vpack.c.bf16 %v1578, %v1577
      %v1590 = vpack.c.bf16 %v1580, %v1579
      %v1591 = vpack.c.bf16 %v1582, %v1581
      %v1592 = vld [vmem:[%s1 + $0x38] sm:$0xff]
      %v1593 = vpack.c.bf16 %v1592, %v1592
      %v1595 = vsel %vm280, %v1583, 0
      %v1598 = vsel %vm280, %v1584, 0
      %v1601 = vsel %vm280, %v1585, 0
      %v1604 = vsel %vm280, %v1586, 0
      %v1607 = vsel %vm280, %v1587, 0
      %v1610 = vsel %vm280, %v1588, 0
      %v1613 = vsel %vm280, %v1589, 0
      %v1616 = vsel %vm280, %v1590, 0
      %v1619 = vsel %vm280, %v1591, 0
      %v1622 = vsel %vm411, %v1593, 0
      %1624 = vmatprep.subr.bf16.mxu0 0
      %1625 = vmatpush1.bf16.msra.mxu0 0
      %1626 = vmatprep.subr.bf16.mxu0 0
      %1627 = vmatpush1.bf16.msra.mxu0 0
      %1628 = vmatprep.subr.bf16.mxu0 0
      %1629 = vmatpush1.bf16.msra.mxu0 0
      %1630 = vmatprep.subr.bf16.mxu0 0
      %1631 = vmatpush1.bf16.msra.mxu0 0
      %1632 = vmatprep.subr.bf16.mxu0 0
      %1633 = vmatpush1.bf16.msra.mxu0 0
      %1634 = vmatprep.subr.bf16.mxu0 0
      %1635 = vmatpush1.bf16.msra.mxu0 0
      %1636 = vmatprep.subr.bf16.mxu0 0
      %1637 = vmatpush1.bf16.msra.mxu0 0
      %1638 = vmatprep.subr.bf16.mxu0 0
      %1639 = vmatpush1.bf16.msra.mxu0 %v1622
      %1640 = vmatprep.subr.bf16.mxu0 0
      %1641 = vmatpush2.bf16.msra.mxu0 0
      %1642 = vmatprep.subr.bf16.mxu0 0
      %1643 = vmatpush2.bf16.msra.mxu0 0
      %1644 = vmatprep.subr.bf16.mxu0 0
      %1645 = vmatpush2.bf16.msra.mxu0 0
      %1646 = vmatprep.subr.bf16.mxu0 0
      %1647 = vmatpush2.bf16.msra.mxu0 0
      %1648 = vmatprep.subr.bf16.mxu0 0
      %1649 = vmatpush2.bf16.msra.mxu0 0
      %1650 = vmatprep.subr.bf16.mxu0 0
      %1651 = vmatpush2.bf16.msra.mxu0 0
      %1652 = vmatprep.subr.bf16.mxu0 0
      %1653 = vmatpush2.bf16.msra.mxu0 0
      %1654 = vmatprep.subr.bf16.mxu0 0
      %1655 = vmatpush2.bf16.msra.mxu0 0
      %1656 = vmatprep.mubr.bf16.mxu0 0
      %1657 = vmatmul.mubr.bf16.gmra.mxu0 %v1595
      %v1658 = vpop.f32.mrf.mxu0
      %v1659 = vadd.f32 0.0, %v1658
      %v1660 = vpop.f32.mrf.mxu0
      %v1661 = vpop.f32.mrf.mxu0
      %v1662 = vadd.f32 0.0, %v1661
      %v1663 = vpop.f32.mrf.mxu0
      %1664 = vmatprep.mubr.bf16.mxu0 0
      %1665 = vmatmul.mubr.bf16.gmra.mxu0 %v1598
      %v1666 = vpop.f32.mrf.mxu0
      %v1667 = vadd.f32 0.0, %v1666
      %v1668 = vpop.f32.mrf.mxu0
      %v1669 = vpop.f32.mrf.mxu0
      %v1670 = vadd.f32 0.0, %v1669
      %v1671 = vpop.f32.mrf.mxu0
      %1672 = vmatprep.mubr.bf16.mxu0 0
      %1673 = vmatmul.mubr.bf16.gmra.mxu0 %v1601
      %v1674 = vpop.f32.mrf.mxu0
      %v1675 = vadd.f32 0.0, %v1674
      %v1676 = vpop.f32.mrf.mxu0
      %v1677 = vpop.f32.mrf.mxu0
      %v1678 = vadd.f32 0.0, %v1677
      %v1679 = vpop.f32.mrf.mxu0
      %1680 = vmatprep.mubr.bf16.mxu0 0
      %1681 = vmatmul.mubr.bf16.gmra.mxu0 %v1604
      %v1682 = vpop.f32.mrf.mxu0
      %v1683 = vadd.f32 0.0, %v1682
      %v1684 = vpop.f32.mrf.mxu0
      %v1685 = vpop.f32.mrf.mxu0
      %v1686 = vadd.f32 0.0, %v1685
      %v1687 = vpop.f32.mrf.mxu0
      %1688 = vmatprep.mubr.bf16.mxu0 0
      %1689 = vmatmul.mubr.bf16.gmra.mxu0 %v1607
      %v1690 = vpop.f32.mrf.mxu0
      %v1691 = vadd.f32 0.0, %v1690
      %v1692 = vpop.f32.mrf.mxu0
      %v1693 = vpop.f32.mrf.mxu0
      %v1694 = vadd.f32 0.0, %v1693
      %v1695 = vpop.f32.mrf.mxu0
      %1696 = vmatprep.mubr.bf16.mxu0 0
      %1697 = vmatmul.mubr.bf16.gmra.mxu0 %v1610
      %v1698 = vpop.f32.mrf.mxu0
      %v1699 = vadd.f32 0.0, %v1698
      %v1700 = vpop.f32.mrf.mxu0
      %v1701 = vpop.f32.mrf.mxu0
      %v1702 = vadd.f32 0.0, %v1701
      %v1703 = vpop.f32.mrf.mxu0
      %1704 = vmatprep.mubr.bf16.mxu0 0
      %1705 = vmatmul.mubr.bf16.gmra.mxu0 %v1613
      %v1706 = vpop.f32.mrf.mxu0
      %v1707 = vadd.f32 0.0, %v1706
      %v1708 = vpop.f32.mrf.mxu0
      %v1709 = vpop.f32.mrf.mxu0
      %v1710 = vadd.f32 0.0, %v1709
      %v1711 = vpop.f32.mrf.mxu0
      %1712 = vmatprep.mubr.bf16.mxu0 0
      %1713 = vmatmul.mubr.bf16.gmra.mxu0 %v1616
      %v1714 = vpop.f32.mrf.mxu0
      %v1715 = vadd.f32 0.0, %v1714
      %v1716 = vpop.f32.mrf.mxu0
      %v1717 = vpop.f32.mrf.mxu0
      %v1718 = vadd.f32 0.0, %v1717
      %v1719 = vpop.f32.mrf.mxu0
      %1720 = vmatprep.mubr.bf16.mxu0 0
      %1721 = vmatmul.mubr.bf16.gmra.mxu0 %v1619
      %v1722 = vpop.f32.mrf.mxu0
      %v1723 = vadd.f32 0.0, %v1722
      %v1724 = vpop.f32.mrf.mxu0
      %v1725 = vpop.f32.mrf.mxu0
      %v1726 = vadd.f32 0.0, %v1725
      %v1727 = vpop.f32.mrf.mxu0
      %1728 = vdwg.mxu0
      %v1729 = vadd.f32 %v1547, %v1659
      %v1730 = vadd.f32 %v1548, %v1662
      %v1731 = vadd.f32 %v1549, %v1667
      %v1732 = vadd.f32 %v1550, %v1670
      %v1733 = vadd.f32 %v1551, %v1675
      %v1734 = vadd.f32 %v1552, %v1678
      %v1735 = vadd.f32 %v1553, %v1683
      %v1736 = vadd.f32 %v1554, %v1686
      %v1737 = vadd.f32 %v1555, %v1691
      %v1738 = vadd.f32 %v1556, %v1694
      %v1739 = vadd.f32 %v1557, %v1699
      %v1740 = vadd.f32 %v1558, %v1702
      %v1741 = vadd.f32 %v1559, %v1707
      %v1742 = vadd.f32 %v1560, %v1710
      %v1743 = vadd.f32 %v1561, %v1715
      %v1744 = vadd.f32 %v1562, %v1718
      %v1745 = vadd.f32 %v1563, %v1723
      %v1746 = vadd.f32 %v1564, %v1726
      %v1747 = vld [vmem:[%s273 + $0x1a] sm:$0xff]
      %v1748 = vld [vmem:[%s273 + $0x22] sm:$0xff]
      %v1749 = vld [vmem:[%s273 + $0x2a] sm:$0xff]
      %v1750 = vld [vmem:[%s273 + $0x32] sm:$0xff]
      %v1751 = vld [vmem:[%s273 + $0x3a] sm:$0xff]
      %v1752 = vld [vmem:[%s273 + $0x42] sm:$0xff]
      %v1753 = vld [vmem:[%s273 + $0x4a] sm:$0xff]
      %v1754 = vld [vmem:[%s273 + $0x52] sm:$0xff]
      %v1755 = vld [vmem:[%s273 + $0x5a] sm:$0xff]
      %v1756 = vld [vmem:[%s273 + $0x62] sm:$0xff]
      %v1757 = vld [vmem:[%s273 + $0x6a] sm:$0xff]
      %v1758 = vld [vmem:[%s273 + $0x72] sm:$0xff]
      %v1759 = vld [vmem:[%s273 + $0x7a] sm:$0xff]
      %v1760 = vld [vmem:[%s273 + $0x82] sm:$0xff]
      %v1761 = vld [vmem:[%s273 + $0x8a] sm:$0xff]
      %v1762 = vld [vmem:[%s273 + $0x92] sm:$0xff]
      %v1763 = vld [vmem:[%s273 + $0x9a] sm:$0xff]
      %v1764 = vld [vmem:[%s273 + $0xa2] sm:$0xff]
      %v1765 = vpack.c.bf16 %v1748, %v1747
      %v1766 = vpack.c.bf16 %v1750, %v1749
      %v1767 = vpack.c.bf16 %v1752, %v1751
      %v1768 = vpack.c.bf16 %v1754, %v1753
      %v1769 = vpack.c.bf16 %v1756, %v1755
      %v1770 = vpack.c.bf16 %v1758, %v1757
      %v1771 = vpack.c.bf16 %v1760, %v1759
      %v1772 = vpack.c.bf16 %v1762, %v1761
      %v1773 = vpack.c.bf16 %v1764, %v1763
      %v1774 = vld [vmem:[%s1 + $0x40] sm:$0xff]
      %v1775 = vpack.c.bf16 %v1774, %v1774
      %v1777 = vsel %vm280, %v1765, 0
      %v1780 = vsel %vm280, %v1766, 0
      %v1783 = vsel %vm280, %v1767, 0
      %v1786 = vsel %vm280, %v1768, 0
      %v1789 = vsel %vm280, %v1769, 0
      %v1792 = vsel %vm280, %v1770, 0
      %v1795 = vsel %vm280, %v1771, 0
      %v1798 = vsel %vm280, %v1772, 0
      %v1801 = vsel %vm280, %v1773, 0
      %v1804 = vsel %vm411, %v1775, 0
      %1806 = vmatprep.subr.bf16.mxu0 0
      %1807 = vmatpush1.bf16.msra.mxu0 0
      %1808 = vmatprep.subr.bf16.mxu0 0
      %1809 = vmatpush1.bf16.msra.mxu0 0
      %1810 = vmatprep.subr.bf16.mxu0 0
      %1811 = vmatpush1.bf16.msra.mxu0 0
      %1812 = vmatprep.subr.bf16.mxu0 0
      %1813 = vmatpush1.bf16.msra.mxu0 0
      %1814 = vmatprep.subr.bf16.mxu0 0
      %1815 = vmatpush1.bf16.msra.mxu0 0
      %1816 = vmatprep.subr.bf16.mxu0 0
      %1817 = vmatpush1.bf16.msra.mxu0 0
      %1818 = vmatprep.subr.bf16.mxu0 0
      %1819 = vmatpush1.bf16.msra.mxu0 0
      %1820 = vmatprep.subr.bf16.mxu0 0
      %1821 = vmatpush1.bf16.msra.mxu0 %v1804
      %1822 = vmatprep.subr.bf16.mxu0 0
      %1823 = vmatpush2.bf16.msra.mxu0 0
      %1824 = vmatprep.subr.bf16.mxu0 0
      %1825 = vmatpush2.bf16.msra.mxu0 0
      %1826 = vmatprep.subr.bf16.mxu0 0
      %1827 = vmatpush2.bf16.msra.mxu0 0
      %1828 = vmatprep.subr.bf16.mxu0 0
      %1829 = vmatpush2.bf16.msra.mxu0 0
      %1830 = vmatprep.subr.bf16.mxu0 0
      %1831 = vmatpush2.bf16.msra.mxu0 0
      %1832 = vmatprep.subr.bf16.mxu0 0
      %1833 = vmatpush2.bf16.msra.mxu0 0
      %1834 = vmatprep.subr.bf16.mxu0 0
      %1835 = vmatpush2.bf16.msra.mxu0 0
      %1836 = vmatprep.subr.bf16.mxu0 0
      %1837 = vmatpush2.bf16.msra.mxu0 0
      %1838 = vmatprep.mubr.bf16.mxu0 0
      %1839 = vmatmul.mubr.bf16.gmra.mxu0 %v1777
      %v1840 = vpop.f32.mrf.mxu0
      %v1841 = vadd.f32 0.0, %v1840
      %v1842 = vpop.f32.mrf.mxu0
      %v1843 = vpop.f32.mrf.mxu0
      %v1844 = vadd.f32 0.0, %v1843
      %v1845 = vpop.f32.mrf.mxu0
      %1846 = vmatprep.mubr.bf16.mxu0 0
      %1847 = vmatmul.mubr.bf16.gmra.mxu0 %v1780
      %v1848 = vpop.f32.mrf.mxu0
      %v1849 = vadd.f32 0.0, %v1848
      %v1850 = vpop.f32.mrf.mxu0
      %v1851 = vpop.f32.mrf.mxu0
      %v1852 = vadd.f32 0.0, %v1851
      %v1853 = vpop.f32.mrf.mxu0
      %1854 = vmatprep.mubr.bf16.mxu0 0
      %1855 = vmatmul.mubr.bf16.gmra.mxu0 %v1783
      %v1856 = vpop.f32.mrf.mxu0
      %v1857 = vadd.f32 0.0, %v1856
      %v1858 = vpop.f32.mrf.mxu0
      %v1859 = vpop.f32.mrf.mxu0
      %v1860 = vadd.f32 0.0, %v1859
      %v1861 = vpop.f32.mrf.mxu0
      %1862 = vmatprep.mubr.bf16.mxu0 0
      %1863 = vmatmul.mubr.bf16.gmra.mxu0 %v1786
      %v1864 = vpop.f32.mrf.mxu0
      %v1865 = vadd.f32 0.0, %v1864
      %v1866 = vpop.f32.mrf.mxu0
      %v1867 = vpop.f32.mrf.mxu0
      %v1868 = vadd.f32 0.0, %v1867
      %v1869 = vpop.f32.mrf.mxu0
      %1870 = vmatprep.mubr.bf16.mxu0 0
      %1871 = vmatmul.mubr.bf16.gmra.mxu0 %v1789
      %v1872 = vpop.f32.mrf.mxu0
      %v1873 = vadd.f32 0.0, %v1872
      %v1874 = vpop.f32.mrf.mxu0
      %v1875 = vpop.f32.mrf.mxu0
      %v1876 = vadd.f32 0.0, %v1875
      %v1877 = vpop.f32.mrf.mxu0
      %1878 = vmatprep.mubr.bf16.mxu0 0
      %1879 = vmatmul.mubr.bf16.gmra.mxu0 %v1792
      %v1880 = vpop.f32.mrf.mxu0
      %v1881 = vadd.f32 0.0, %v1880
      %v1882 = vpop.f32.mrf.mxu0
      %v1883 = vpop.f32.mrf.mxu0
      %v1884 = vadd.f32 0.0, %v1883
      %v1885 = vpop.f32.mrf.mxu0
      %1886 = vmatprep.mubr.bf16.mxu0 0
      %1887 = vmatmul.mubr.bf16.gmra.mxu0 %v1795
      %v1888 = vpop.f32.mrf.mxu0
      %v1889 = vadd.f32 0.0, %v1888
      %v1890 = vpop.f32.mrf.mxu0
      %v1891 = vpop.f32.mrf.mxu0
      %v1892 = vadd.f32 0.0, %v1891
      %v1893 = vpop.f32.mrf.mxu0
      %1894 = vmatprep.mubr.bf16.mxu0 0
      %1895 = vmatmul.mubr.bf16.gmra.mxu0 %v1798
      %v1896 = vpop.f32.mrf.mxu0
      %v1897 = vadd.f32 0.0, %v1896
      %v1898 = vpop.f32.mrf.mxu0
      %v1899 = vpop.f32.mrf.mxu0
      %v1900 = vadd.f32 0.0, %v1899
      %v1901 = vpop.f32.mrf.mxu0
      %1902 = vmatprep.mubr.bf16.mxu0 0
      %1903 = vmatmul.mubr.bf16.gmra.mxu0 %v1801
      %v1904 = vpop.f32.mrf.mxu0
      %v1905 = vadd.f32 0.0, %v1904
      %v1906 = vpop.f32.mrf.mxu0
      %v1907 = vpop.f32.mrf.mxu0
      %v1908 = vadd.f32 0.0, %v1907
      %v1909 = vpop.f32.mrf.mxu0
      %1910 = vdwg.mxu0
      %v1911 = vadd.f32 %v1729, %v1841
      %v1912 = vadd.f32 %v1730, %v1844
      %v1913 = vadd.f32 %v1731, %v1849
      %v1914 = vadd.f32 %v1732, %v1852
      %v1915 = vadd.f32 %v1733, %v1857
      %v1916 = vadd.f32 %v1734, %v1860
      %v1917 = vadd.f32 %v1735, %v1865
      %v1918 = vadd.f32 %v1736, %v1868
      %v1919 = vadd.f32 %v1737, %v1873
      %v1920 = vadd.f32 %v1738, %v1876
      %v1921 = vadd.f32 %v1739, %v1881
      %v1922 = vadd.f32 %v1740, %v1884
      %v1923 = vadd.f32 %v1741, %v1889
      %v1924 = vadd.f32 %v1742, %v1892
      %v1925 = vadd.f32 %v1743, %v1897
      %v1926 = vadd.f32 %v1744, %v1900
      %v1927 = vadd.f32 %v1745, %v1905
      %v1928 = vadd.f32 %v1746, %v1908
      %v1929 = vld [vmem:[%s2] sm:$0x1]
      %v1931 = vlaneseq
      %v1932 = vshrl.u32 %v1931, 7
      %v1933 = vsub.s32 0, %v1932
      %v1934 = vrot.slane %v1929, %v1933
      %v1936 = vadd.f32 %v1911, %v1934
      %v1937 = vadd.f32 %v1912, %v1934
      %v1938 = vadd.f32 %v1913, %v1934
      %v1939 = vadd.f32 %v1914, %v1934
      %v1940 = vadd.f32 %v1915, %v1934
      %v1941 = vadd.f32 %v1916, %v1934
      %v1942 = vadd.f32 %v1917, %v1934
      %v1943 = vadd.f32 %v1918, %v1934
      %v1944 = vadd.f32 %v1919, %v1934
      %v1945 = vadd.f32 %v1920, %v1934
      %v1946 = vadd.f32 %v1921, %v1934
      %v1947 = vadd.f32 %v1922, %v1934
      %v1948 = vadd.f32 %v1923, %v1934
      %v1949 = vadd.f32 %v1924, %v1934
      %v1950 = vadd.f32 %v1925, %v1934
      %v1951 = vadd.f32 %v1926, %v1934
      %v1952 = vadd.f32 %v1927, %v1934
      %v1953 = vadd.f32 %v1928, %v1934
      %v1954 = vmax.f32 %v1936, 0.0
      %v1955 = vmax.f32 %v1937, 0.0
      %v1956 = vmax.f32 %v1938, 0.0
      %v1957 = vmax.f32 %v1939, 0.0
      %v1958 = vmax.f32 %v1940, 0.0
      %v1959 = vmax.f32 %v1941, 0.0
      %v1960 = vmax.f32 %v1942, 0.0
      %v1961 = vmax.f32 %v1943, 0.0
      %v1962 = vmax.f32 %v1944, 0.0
      %v1963 = vmax.f32 %v1945, 0.0
      %v1964 = vmax.f32 %v1946, 0.0
      %v1965 = vmax.f32 %v1947, 0.0
      %v1966 = vmax.f32 %v1948, 0.0
      %v1967 = vmax.f32 %v1949, 0.0
      %v1968 = vmax.f32 %v1950, 0.0
      %v1969 = vmax.f32 %v1951, 0.0
      %v1970 = vmax.f32 %v1952, 0.0
      %v1971 = vmax.f32 %v1953, 0.0
      %1972 = vst.msk [vmem:[#allocation2] sm:$0xff] %vm280, %v1954
      %1973 = vst.msk [vmem:[#allocation2 + $0x8] sm:$0xff] %vm280, %v1955
      %1974 = vst.msk [vmem:[#allocation2 + $0x10] sm:$0xff] %vm280, %v1956
      %1975 = vst.msk [vmem:[#allocation2 + $0x18] sm:$0xff] %vm280, %v1957
      %1976 = vst.msk [vmem:[#allocation2 + $0x20] sm:$0xff] %vm280, %v1958
      %1977 = vst.msk [vmem:[#allocation2 + $0x28] sm:$0xff] %vm280, %v1959
      %1978 = vst.msk [vmem:[#allocation2 + $0x30] sm:$0xff] %vm280, %v1960
      %1979 = vst.msk [vmem:[#allocation2 + $0x38] sm:$0xff] %vm280, %v1961
      %1980 = vst.msk [vmem:[#allocation2 + $0x40] sm:$0xff] %vm280, %v1962
      %1981 = vst.msk [vmem:[#allocation2 + $0x48] sm:$0xff] %vm280, %v1963
      %1982 = vst.msk [vmem:[#allocation2 + $0x50] sm:$0xff] %vm280, %v1964
      %1983 = vst.msk [vmem:[#allocation2 + $0x58] sm:$0xff] %vm280, %v1965
      %1984 = vst.msk [vmem:[#allocation2 + $0x60] sm:$0xff] %vm280, %v1966
      %1985 = vst.msk [vmem:[#allocation2 + $0x68] sm:$0xff] %vm280, %v1967
      %1986 = vst.msk [vmem:[#allocation2 + $0x70] sm:$0xff] %vm280, %v1968
      %1987 = vst.msk [vmem:[#allocation2 + $0x78] sm:$0xff] %vm280, %v1969
      %1988 = vst.msk [vmem:[#allocation2 + $0x80] sm:$0xff] %vm280, %v1970
      %1989 = vst.msk [vmem:[#allocation2 + $0x88] sm:$0xff] %vm280, %v1971
      %v1990 = vld [vmem:[#allocation2] sm:$0xff]
      %v1991 = vld [vmem:[#allocation2 + $0x8] sm:$0xff]
      %v1992 = vld [vmem:[#allocation2 + $0x10] sm:$0xff]
      %v1993 = vld [vmem:[#allocation2 + $0x18] sm:$0xff]
      %v1994 = vld [vmem:[#allocation2 + $0x20] sm:$0xff]
      %v1995 = vld [vmem:[#allocation2 + $0x28] sm:$0xff]
      %v1996 = vld [vmem:[#allocation2 + $0x30] sm:$0xff]
      %v1997 = vld [vmem:[#allocation2 + $0x38] sm:$0xff]
      %v1998 = vld [vmem:[#allocation2 + $0x40] sm:$0xff]
      %v1999 = vld [vmem:[#allocation2 + $0x48] sm:$0xff]
      %v2000 = vld [vmem:[#allocation2 + $0x50] sm:$0xff]
      %v2001 = vld [vmem:[#allocation2 + $0x58] sm:$0xff]
      %v2002 = vld [vmem:[#allocation2 + $0x60] sm:$0xff]
      %v2003 = vld [vmem:[#allocation2 + $0x68] sm:$0xff]
      %v2004 = vld [vmem:[#allocation2 + $0x70] sm:$0xff]
      %v2005 = vld [vmem:[#allocation2 + $0x78] sm:$0xff]
      %v2006 = vld [vmem:[#allocation2 + $0x80] sm:$0xff]
      %v2007 = vld [vmem:[#allocation2 + $0x88] sm:$0xff]
      %v2008 = vpack.c.bf16 %v1991, %v1990
      %v2009 = vpack.c.bf16 %v1993, %v1992
      %v2010 = vpack.c.bf16 %v1995, %v1994
      %v2011 = vpack.c.bf16 %v1997, %v1996
      %v2012 = vpack.c.bf16 %v1999, %v1998
      %v2013 = vpack.c.bf16 %v2001, %v2000
      %v2014 = vpack.c.bf16 %v2003, %v2002
      %v2015 = vpack.c.bf16 %v2005, %v2004
      %v2016 = vpack.c.bf16 %v2007, %v2006
      %v2017 = vld [vmem:[%s3] sm:$0xff]
      %v2018 = vpack.c.bf16 %v2017, %v2017
      %v2019 = vld [vmem:[#allocation2 + $0x1] sm:$0xff]
      %v2020 = vld [vmem:[#allocation2 + $0x9] sm:$0xff]
      %v2021 = vld [vmem:[#allocation2 + $0x11] sm:$0xff]
      %v2022 = vld [vmem:[#allocation2 + $0x19] sm:$0xff]
      %v2023 = vld [vmem:[#allocation2 + $0x21] sm:$0xff]
      %v2024 = vld [vmem:[#allocation2 + $0x29] sm:$0xff]
      %v2025 = vld [vmem:[#allocation2 + $0x31] sm:$0xff]
      %v2026 = vld [vmem:[#allocation2 + $0x39] sm:$0xff]
      %v2027 = vld [vmem:[#allocation2 + $0x41] sm:$0xff]
      %v2028 = vld [vmem:[#allocation2 + $0x49] sm:$0xff]
      %v2029 = vld [vmem:[#allocation2 + $0x51] sm:$0xff]
      %v2030 = vld [vmem:[#allocation2 + $0x59] sm:$0xff]
      %v2031 = vld [vmem:[#allocation2 + $0x61] sm:$0xff]
      %v2032 = vld [vmem:[#allocation2 + $0x69] sm:$0xff]
      %v2033 = vld [vmem:[#allocation2 + $0x71] sm:$0xff]
      %v2034 = vld [vmem:[#allocation2 + $0x79] sm:$0xff]
      %v2035 = vld [vmem:[#allocation2 + $0x81] sm:$0xff]
      %v2036 = vld [vmem:[#allocation2 + $0x89] sm:$0xff]
      %v2037 = vpack.c.bf16 %v2020, %v2019
      %v2038 = vpack.c.bf16 %v2022, %v2021
      %v2039 = vpack.c.bf16 %v2024, %v2023
      %v2040 = vpack.c.bf16 %v2026, %v2025
      %v2041 = vpack.c.bf16 %v2028, %v2027
      %v2042 = vpack.c.bf16 %v2030, %v2029
      %v2043 = vpack.c.bf16 %v2032, %v2031
      %v2044 = vpack.c.bf16 %v2034, %v2033
      %v2045 = vpack.c.bf16 %v2036, %v2035
      %v2046 = vld [vmem:[%s3 + $0x8] sm:$0xff]
      %v2047 = vpack.c.bf16 %v2046, %v2046
      %v2049 = vsel %vm280, %v2037, 0
      %v2052 = vsel %vm280, %v2038, 0
      %v2055 = vsel %vm280, %v2039, 0
      %v2058 = vsel %vm280, %v2040, 0
      %v2061 = vsel %vm280, %v2041, 0
      %v2064 = vsel %vm280, %v2042, 0
      %v2067 = vsel %vm280, %v2043, 0
      %v2070 = vsel %vm280, %v2044, 0
      %v2073 = vsel %vm280, %v2045, 0
      %v2076 = vsel %vm411, %v2047, 0
      %2078 = vmatprep.subr.bf16.mxu0 0
      %2079 = vmatpush1.bf16.msra.mxu0 0
      %2080 = vmatprep.subr.bf16.mxu0 0
      %2081 = vmatpush1.bf16.msra.mxu0 0
      %2082 = vmatprep.subr.bf16.mxu0 0
      %2083 = vmatpush1.bf16.msra.mxu0 0
      %2084 = vmatprep.subr.bf16.mxu0 0
      %2085 = vmatpush1.bf16.msra.mxu0 0
      %2086 = vmatprep.subr.bf16.mxu0 0
      %2087 = vmatpush1.bf16.msra.mxu0 0
      %2088 = vmatprep.subr.bf16.mxu0 0
      %2089 = vmatpush1.bf16.msra.mxu0 0
      %2090 = vmatprep.subr.bf16.mxu0 0
      %2091 = vmatpush1.bf16.msra.mxu0 0
      %2092 = vmatprep.subr.bf16.mxu0 0
      %2093 = vmatpush1.bf16.msra.mxu0 %v2076
      %2094 = vmatprep.subr.bf16.mxu0 0
      %2095 = vmatpush2.bf16.msra.mxu0 0
      %2096 = vmatprep.subr.bf16.mxu0 0
      %2097 = vmatpush2.bf16.msra.mxu0 0
      %2098 = vmatprep.subr.bf16.mxu0 0
      %2099 = vmatpush2.bf16.msra.mxu0 0
      %2100 = vmatprep.subr.bf16.mxu0 0
      %2101 = vmatpush2.bf16.msra.mxu0 0
      %2102 = vmatprep.subr.bf16.mxu0 0
      %2103 = vmatpush2.bf16.msra.mxu0 0
      %2104 = vmatprep.subr.bf16.mxu0 0
      %2105 = vmatpush2.bf16.msra.mxu0 0
      %2106 = vmatprep.subr.bf16.mxu0 0
      %2107 = vmatpush2.bf16.msra.mxu0 0
      %2108 = vmatprep.subr.bf16.mxu0 0
      %2109 = vmatpush2.bf16.msra.mxu0 0
      %2110 = vmatprep.mubr.bf16.mxu0 0
      %2111 = vmatmul.mubr.bf16.gmra.mxu0 %v2049
      %v2112 = vpop.f32.mrf.mxu0
      %v2113 = vadd.f32 0.0, %v2112
      %v2114 = vpop.f32.mrf.mxu0
      %v2115 = vpop.f32.mrf.mxu0
      %v2116 = vadd.f32 0.0, %v2115
      %v2117 = vpop.f32.mrf.mxu0
      %2118 = vmatprep.mubr.bf16.mxu0 0
      %2119 = vmatmul.mubr.bf16.gmra.mxu0 %v2052
      %v2120 = vpop.f32.mrf.mxu0
      %v2121 = vadd.f32 0.0, %v2120
      %v2122 = vpop.f32.mrf.mxu0
      %v2123 = vpop.f32.mrf.mxu0
      %v2124 = vadd.f32 0.0, %v2123
      %v2125 = vpop.f32.mrf.mxu0
      %2126 = vmatprep.mubr.bf16.mxu0 0
      %2127 = vmatmul.mubr.bf16.gmra.mxu0 %v2055
      %v2128 = vpop.f32.mrf.mxu0
      %v2129 = vadd.f32 0.0, %v2128
      %v2130 = vpop.f32.mrf.mxu0
      %v2131 = vpop.f32.mrf.mxu0
      %v2132 = vadd.f32 0.0, %v2131
      %v2133 = vpop.f32.mrf.mxu0
      %2134 = vmatprep.mubr.bf16.mxu0 0
      %2135 = vmatmul.mubr.bf16.gmra.mxu0 %v2058
      %v2136 = vpop.f32.mrf.mxu0
      %v2137 = vadd.f32 0.0, %v2136
      %v2138 = vpop.f32.mrf.mxu0
      %v2139 = vpop.f32.mrf.mxu0
      %v2140 = vadd.f32 0.0, %v2139
      %v2141 = vpop.f32.mrf.mxu0
      %2142 = vmatprep.mubr.bf16.mxu0 0
      %2143 = vmatmul.mubr.bf16.gmra.mxu0 %v2061
      %v2144 = vpop.f32.mrf.mxu0
      %v2145 = vadd.f32 0.0, %v2144
      %v2146 = vpop.f32.mrf.mxu0
      %v2147 = vpop.f32.mrf.mxu0
      %v2148 = vadd.f32 0.0, %v2147
      %v2149 = vpop.f32.mrf.mxu0
      %2150 = vmatprep.mubr.bf16.mxu0 0
      %2151 = vmatmul.mubr.bf16.gmra.mxu0 %v2064
      %v2152 = vpop.f32.mrf.mxu0
      %v2153 = vadd.f32 0.0, %v2152
      %v2154 = vpop.f32.mrf.mxu0
      %v2155 = vpop.f32.mrf.mxu0
      %v2156 = vadd.f32 0.0, %v2155
      %v2157 = vpop.f32.mrf.mxu0
      %2158 = vmatprep.mubr.bf16.mxu0 0
      %2159 = vmatmul.mubr.bf16.gmra.mxu0 %v2067
      %v2160 = vpop.f32.mrf.mxu0
      %v2161 = vadd.f32 0.0, %v2160
      %v2162 = vpop.f32.mrf.mxu0
      %v2163 = vpop.f32.mrf.mxu0
      %v2164 = vadd.f32 0.0, %v2163
      %v2165 = vpop.f32.mrf.mxu0
      %2166 = vmatprep.mubr.bf16.mxu0 0
      %2167 = vmatmul.mubr.bf16.gmra.mxu0 %v2070
      %v2168 = vpop.f32.mrf.mxu0
      %v2169 = vadd.f32 0.0, %v2168
      %v2170 = vpop.f32.mrf.mxu0
      %v2171 = vpop.f32.mrf.mxu0
      %v2172 = vadd.f32 0.0, %v2171
      %v2173 = vpop.f32.mrf.mxu0
      %2174 = vmatprep.mubr.bf16.mxu0 0
      %2175 = vmatmul.mubr.bf16.gmra.mxu0 %v2073
      %v2176 = vpop.f32.mrf.mxu0
      %v2177 = vadd.f32 0.0, %v2176
      %v2178 = vpop.f32.mrf.mxu0
      %v2179 = vpop.f32.mrf.mxu0
      %v2180 = vadd.f32 0.0, %v2179
      %v2181 = vpop.f32.mrf.mxu0
      %2182 = vdwg.mxu0
      %v2184 = vsel %vm280, %v2008, 0
      %v2187 = vsel %vm280, %v2009, 0
      %v2190 = vsel %vm280, %v2010, 0
      %v2193 = vsel %vm280, %v2011, 0
      %v2196 = vsel %vm280, %v2012, 0
      %v2199 = vsel %vm280, %v2013, 0
      %v2202 = vsel %vm280, %v2014, 0
      %v2205 = vsel %vm280, %v2015, 0
      %v2208 = vsel %vm280, %v2016, 0
      %v2211 = vsel %vm411, %v2018, 0
      %2213 = vmatprep.subr.bf16.mxu0 0
      %2214 = vmatpush1.bf16.msra.mxu0 0
      %2215 = vmatprep.subr.bf16.mxu0 0
      %2216 = vmatpush1.bf16.msra.mxu0 0
      %2217 = vmatprep.subr.bf16.mxu0 0
      %2218 = vmatpush1.bf16.msra.mxu0 0
      %2219 = vmatprep.subr.bf16.mxu0 0
      %2220 = vmatpush1.bf16.msra.mxu0 0
      %2221 = vmatprep.subr.bf16.mxu0 0
      %2222 = vmatpush1.bf16.msra.mxu0 0
      %2223 = vmatprep.subr.bf16.mxu0 0
      %2224 = vmatpush1.bf16.msra.mxu0 0
      %2225 = vmatprep.subr.bf16.mxu0 0
      %2226 = vmatpush1.bf16.msra.mxu0 0
      %2227 = vmatprep.subr.bf16.mxu0 0
      %2228 = vmatpush1.bf16.msra.mxu0 %v2211
      %2229 = vmatprep.subr.bf16.mxu0 0
      %2230 = vmatpush2.bf16.msra.mxu0 0
      %2231 = vmatprep.subr.bf16.mxu0 0
      %2232 = vmatpush2.bf16.msra.mxu0 0
      %2233 = vmatprep.subr.bf16.mxu0 0
      %2234 = vmatpush2.bf16.msra.mxu0 0
      %2235 = vmatprep.subr.bf16.mxu0 0
      %2236 = vmatpush2.bf16.msra.mxu0 0
      %2237 = vmatprep.subr.bf16.mxu0 0
      %2238 = vmatpush2.bf16.msra.mxu0 0
      %2239 = vmatprep.subr.bf16.mxu0 0
      %2240 = vmatpush2.bf16.msra.mxu0 0
      %2241 = vmatprep.subr.bf16.mxu0 0
      %2242 = vmatpush2.bf16.msra.mxu0 0
      %2243 = vmatprep.subr.bf16.mxu0 0
      %2244 = vmatpush2.bf16.msra.mxu0 0
      %2245 = vmatprep.mubr.bf16.mxu0 0
      %2246 = vmatmul.mubr.bf16.gmra.mxu0 %v2184
      %v2247 = vpop.f32.mrf.mxu0
      %v2248 = vadd.f32 %v2113, %v2247
      %v2249 = vpop.f32.mrf.mxu0
      %v2250 = vpop.f32.mrf.mxu0
      %v2251 = vadd.f32 %v2116, %v2250
      %v2252 = vpop.f32.mrf.mxu0
      %2253 = vmatprep.mubr.bf16.mxu0 0
      %2254 = vmatmul.mubr.bf16.gmra.mxu0 %v2187
      %v2255 = vpop.f32.mrf.mxu0
      %v2256 = vadd.f32 %v2121, %v2255
      %v2257 = vpop.f32.mrf.mxu0
      %v2258 = vpop.f32.mrf.mxu0
      %v2259 = vadd.f32 %v2124, %v2258
      %v2260 = vpop.f32.mrf.mxu0
      %2261 = vmatprep.mubr.bf16.mxu0 0
      %2262 = vmatmul.mubr.bf16.gmra.mxu0 %v2190
      %v2263 = vpop.f32.mrf.mxu0
      %v2264 = vadd.f32 %v2129, %v2263
      %v2265 = vpop.f32.mrf.mxu0
      %v2266 = vpop.f32.mrf.mxu0
      %v2267 = vadd.f32 %v2132, %v2266
      %v2268 = vpop.f32.mrf.mxu0
      %2269 = vmatprep.mubr.bf16.mxu0 0
      %2270 = vmatmul.mubr.bf16.gmra.mxu0 %v2193
      %v2271 = vpop.f32.mrf.mxu0
      %v2272 = vadd.f32 %v2137, %v2271
      %v2273 = vpop.f32.mrf.mxu0
      %v2274 = vpop.f32.mrf.mxu0
      %v2275 = vadd.f32 %v2140, %v2274
      %v2276 = vpop.f32.mrf.mxu0
      %2277 = vmatprep.mubr.bf16.mxu0 0
      %2278 = vmatmul.mubr.bf16.gmra.mxu0 %v2196
      %v2279 = vpop.f32.mrf.mxu0
      %v2280 = vadd.f32 %v2145, %v2279
      %v2281 = vpop.f32.mrf.mxu0
      %v2282 = vpop.f32.mrf.mxu0
      %v2283 = vadd.f32 %v2148, %v2282
      %v2284 = vpop.f32.mrf.mxu0
      %2285 = vmatprep.mubr.bf16.mxu0 0
      %2286 = vmatmul.mubr.bf16.gmra.mxu0 %v2199
      %v2287 = vpop.f32.mrf.mxu0
      %v2288 = vadd.f32 %v2153, %v2287
      %v2289 = vpop.f32.mrf.mxu0
      %v2290 = vpop.f32.mrf.mxu0
      %v2291 = vadd.f32 %v2156, %v2290
      %v2292 = vpop.f32.mrf.mxu0
      %2293 = vmatprep.mubr.bf16.mxu0 0
      %2294 = vmatmul.mubr.bf16.gmra.mxu0 %v2202
      %v2295 = vpop.f32.mrf.mxu0
      %v2296 = vadd.f32 %v2161, %v2295
      %v2297 = vpop.f32.mrf.mxu0
      %v2298 = vpop.f32.mrf.mxu0
      %v2299 = vadd.f32 %v2164, %v2298
      %v2300 = vpop.f32.mrf.mxu0
      %2301 = vmatprep.mubr.bf16.mxu0 0
      %2302 = vmatmul.mubr.bf16.gmra.mxu0 %v2205
      %v2303 = vpop.f32.mrf.mxu0
      %v2304 = vadd.f32 %v2169, %v2303
      %v2305 = vpop.f32.mrf.mxu0
      %v2306 = vpop.f32.mrf.mxu0
      %v2307 = vadd.f32 %v2172, %v2306
      %v2308 = vpop.f32.mrf.mxu0
      %2309 = vmatprep.mubr.bf16.mxu0 0
      %2310 = vmatmul.mubr.bf16.gmra.mxu0 %v2208
      %v2311 = vpop.f32.mrf.mxu0
      %v2312 = vadd.f32 %v2177, %v2311
      %v2313 = vpop.f32.mrf.mxu0
      %v2314 = vpop.f32.mrf.mxu0
      %v2315 = vadd.f32 %v2180, %v2314
      %v2316 = vpop.f32.mrf.mxu0
      %2317 = vdwg.mxu0
      %v2318 = vld [vmem:[#allocation2 + $0x2] sm:$0xff]
      %v2319 = vld [vmem:[#allocation2 + $0xa] sm:$0xff]
      %v2320 = vld [vmem:[#allocation2 + $0x12] sm:$0xff]
      %v2321 = vld [vmem:[#allocation2 + $0x1a] sm:$0xff]
      %v2322 = vld [vmem:[#allocation2 + $0x22] sm:$0xff]
      %v2323 = vld [vmem:[#allocation2 + $0x2a] sm:$0xff]
      %v2324 = vld [vmem:[#allocation2 + $0x32] sm:$0xff]
      %v2325 = vld [vmem:[#allocation2 + $0x3a] sm:$0xff]
      %v2326 = vld [vmem:[#allocation2 + $0x42] sm:$0xff]
      %v2327 = vld [vmem:[#allocation2 + $0x4a] sm:$0xff]
      %v2328 = vld [vmem:[#allocation2 + $0x52] sm:$0xff]
      %v2329 = vld [vmem:[#allocation2 + $0x5a] sm:$0xff]
      %v2330 = vld [vmem:[#allocation2 + $0x62] sm:$0xff]
      %v2331 = vld [vmem:[#allocation2 + $0x6a] sm:$0xff]
      %v2332 = vld [vmem:[#allocation2 + $0x72] sm:$0xff]
      %v2333 = vld [vmem:[#allocation2 + $0x7a] sm:$0xff]
      %v2334 = vld [vmem:[#allocation2 + $0x82] sm:$0xff]
      %v2335 = vld [vmem:[#allocation2 + $0x8a] sm:$0xff]
      %v2336 = vpack.c.bf16 %v2319, %v2318
      %v2337 = vpack.c.bf16 %v2321, %v2320
      %v2338 = vpack.c.bf16 %v2323, %v2322
      %v2339 = vpack.c.bf16 %v2325, %v2324
      %v2340 = vpack.c.bf16 %v2327, %v2326
      %v2341 = vpack.c.bf16 %v2329, %v2328
      %v2342 = vpack.c.bf16 %v2331, %v2330
      %v2343 = vpack.c.bf16 %v2333, %v2332
      %v2344 = vpack.c.bf16 %v2335, %v2334
      %v2345 = vld [vmem:[%s3 + $0x10] sm:$0xff]
      %v2346 = vpack.c.bf16 %v2345, %v2345
      %v2348 = vsel %vm280, %v2336, 0
      %v2351 = vsel %vm280, %v2337, 0
      %v2354 = vsel %vm280, %v2338, 0
      %v2357 = vsel %vm280, %v2339, 0
      %v2360 = vsel %vm280, %v2340, 0
      %v2363 = vsel %vm280, %v2341, 0
      %v2366 = vsel %vm280, %v2342, 0
      %v2369 = vsel %vm280, %v2343, 0
      %v2372 = vsel %vm280, %v2344, 0
      %v2375 = vsel %vm411, %v2346, 0
      %2377 = vmatprep.subr.bf16.mxu0 0
      %2378 = vmatpush1.bf16.msra.mxu0 0
      %2379 = vmatprep.subr.bf16.mxu0 0
      %2380 = vmatpush1.bf16.msra.mxu0 0
      %2381 = vmatprep.subr.bf16.mxu0 0
      %2382 = vmatpush1.bf16.msra.mxu0 0
      %2383 = vmatprep.subr.bf16.mxu0 0
      %2384 = vmatpush1.bf16.msra.mxu0 0
      %2385 = vmatprep.subr.bf16.mxu0 0
      %2386 = vmatpush1.bf16.msra.mxu0 0
      %2387 = vmatprep.subr.bf16.mxu0 0
      %2388 = vmatpush1.bf16.msra.mxu0 0
      %2389 = vmatprep.subr.bf16.mxu0 0
      %2390 = vmatpush1.bf16.msra.mxu0 0
      %2391 = vmatprep.subr.bf16.mxu0 0
      %2392 = vmatpush1.bf16.msra.mxu0 %v2375
      %2393 = vmatprep.subr.bf16.mxu0 0
      %2394 = vmatpush2.bf16.msra.mxu0 0
      %2395 = vmatprep.subr.bf16.mxu0 0
      %2396 = vmatpush2.bf16.msra.mxu0 0
      %2397 = vmatprep.subr.bf16.mxu0 0
      %2398 = vmatpush2.bf16.msra.mxu0 0
      %2399 = vmatprep.subr.bf16.mxu0 0
      %2400 = vmatpush2.bf16.msra.mxu0 0
      %2401 = vmatprep.subr.bf16.mxu0 0
      %2402 = vmatpush2.bf16.msra.mxu0 0
      %2403 = vmatprep.subr.bf16.mxu0 0
      %2404 = vmatpush2.bf16.msra.mxu0 0
      %2405 = vmatprep.subr.bf16.mxu0 0
      %2406 = vmatpush2.bf16.msra.mxu0 0
      %2407 = vmatprep.subr.bf16.mxu0 0
      %2408 = vmatpush2.bf16.msra.mxu0 0
      %2409 = vmatprep.mubr.bf16.mxu0 0
      %2410 = vmatmul.mubr.bf16.gmra.mxu0 %v2348
      %v2411 = vpop.f32.mrf.mxu0
      %v2412 = vadd.f32 0.0, %v2411
      %v2413 = vpop.f32.mrf.mxu0
      %v2414 = vpop.f32.mrf.mxu0
      %v2415 = vadd.f32 0.0, %v2414
      %v2416 = vpop.f32.mrf.mxu0
      %2417 = vmatprep.mubr.bf16.mxu0 0
      %2418 = vmatmul.mubr.bf16.gmra.mxu0 %v2351
      %v2419 = vpop.f32.mrf.mxu0
      %v2420 = vadd.f32 0.0, %v2419
      %v2421 = vpop.f32.mrf.mxu0
      %v2422 = vpop.f32.mrf.mxu0
      %v2423 = vadd.f32 0.0, %v2422
      %v2424 = vpop.f32.mrf.mxu0
      %2425 = vmatprep.mubr.bf16.mxu0 0
      %2426 = vmatmul.mubr.bf16.gmra.mxu0 %v2354
      %v2427 = vpop.f32.mrf.mxu0
      %v2428 = vadd.f32 0.0, %v2427
      %v2429 = vpop.f32.mrf.mxu0
      %v2430 = vpop.f32.mrf.mxu0
      %v2431 = vadd.f32 0.0, %v2430
      %v2432 = vpop.f32.mrf.mxu0
      %2433 = vmatprep.mubr.bf16.mxu0 0
      %2434 = vmatmul.mubr.bf16.gmra.mxu0 %v2357
      %v2435 = vpop.f32.mrf.mxu0
      %v2436 = vadd.f32 0.0, %v2435
      %v2437 = vpop.f32.mrf.mxu0
      %v2438 = vpop.f32.mrf.mxu0
      %v2439 = vadd.f32 0.0, %v2438
      %v2440 = vpop.f32.mrf.mxu0
      %2441 = vmatprep.mubr.bf16.mxu0 0
      %2442 = vmatmul.mubr.bf16.gmra.mxu0 %v2360
      %v2443 = vpop.f32.mrf.mxu0
      %v2444 = vadd.f32 0.0, %v2443
      %v2445 = vpop.f32.mrf.mxu0
      %v2446 = vpop.f32.mrf.mxu0
      %v2447 = vadd.f32 0.0, %v2446
      %v2448 = vpop.f32.mrf.mxu0
      %2449 = vmatprep.mubr.bf16.mxu0 0
      %2450 = vmatmul.mubr.bf16.gmra.mxu0 %v2363
      %v2451 = vpop.f32.mrf.mxu0
      %v2452 = vadd.f32 0.0, %v2451
      %v2453 = vpop.f32.mrf.mxu0
      %v2454 = vpop.f32.mrf.mxu0
      %v2455 = vadd.f32 0.0, %v2454
      %v2456 = vpop.f32.mrf.mxu0
      %2457 = vmatprep.mubr.bf16.mxu0 0
      %2458 = vmatmul.mubr.bf16.gmra.mxu0 %v2366
      %v2459 = vpop.f32.mrf.mxu0
      %v2460 = vadd.f32 0.0, %v2459
      %v2461 = vpop.f32.mrf.mxu0
      %v2462 = vpop.f32.mrf.mxu0
      %v2463 = vadd.f32 0.0, %v2462
      %v2464 = vpop.f32.mrf.mxu0
      %2465 = vmatprep.mubr.bf16.mxu0 0
      %2466 = vmatmul.mubr.bf16.gmra.mxu0 %v2369
      %v2467 = vpop.f32.mrf.mxu0
      %v2468 = vadd.f32 0.0, %v2467
      %v2469 = vpop.f32.mrf.mxu0
      %v2470 = vpop.f32.mrf.mxu0
      %v2471 = vadd.f32 0.0, %v2470
      %v2472 = vpop.f32.mrf.mxu0
      %2473 = vmatprep.mubr.bf16.mxu0 0
      %2474 = vmatmul.mubr.bf16.gmra.mxu0 %v2372
      %v2475 = vpop.f32.mrf.mxu0
      %v2476 = vadd.f32 0.0, %v2475
      %v2477 = vpop.f32.mrf.mxu0
      %v2478 = vpop.f32.mrf.mxu0
      %v2479 = vadd.f32 0.0, %v2478
      %v2480 = vpop.f32.mrf.mxu0
      %2481 = vdwg.mxu0
      %v2482 = vadd.f32 %v2248, %v2412
      %v2483 = vadd.f32 %v2251, %v2415
      %v2484 = vadd.f32 %v2256, %v2420
      %v2485 = vadd.f32 %v2259, %v2423
      %v2486 = vadd.f32 %v2264, %v2428
      %v2487 = vadd.f32 %v2267, %v2431
      %v2488 = vadd.f32 %v2272, %v2436
      %v2489 = vadd.f32 %v2275, %v2439
      %v2490 = vadd.f32 %v2280, %v2444
      %v2491 = vadd.f32 %v2283, %v2447
      %v2492 = vadd.f32 %v2288, %v2452
      %v2493 = vadd.f32 %v2291, %v2455
      %v2494 = vadd.f32 %v2296, %v2460
      %v2495 = vadd.f32 %v2299, %v2463
      %v2496 = vadd.f32 %v2304, %v2468
      %v2497 = vadd.f32 %v2307, %v2471
      %v2498 = vadd.f32 %v2312, %v2476
      %v2499 = vadd.f32 %v2315, %v2479
      %v2500 = vld [vmem:[#allocation2 + $0xc] sm:$0xff]
      %v2501 = vld [vmem:[#allocation2 + $0x14] sm:$0xff]
      %v2502 = vld [vmem:[#allocation2 + $0x1c] sm:$0xff]
      %v2503 = vld [vmem:[#allocation2 + $0x24] sm:$0xff]
      %v2504 = vld [vmem:[#allocation2 + $0x2c] sm:$0xff]
      %v2505 = vld [vmem:[#allocation2 + $0x34] sm:$0xff]
      %v2506 = vld [vmem:[#allocation2 + $0x3c] sm:$0xff]
      %v2507 = vld [vmem:[#allocation2 + $0x44] sm:$0xff]
      %v2508 = vld [vmem:[#allocation2 + $0x4c] sm:$0xff]
      %v2509 = vld [vmem:[#allocation2 + $0x54] sm:$0xff]
      %v2510 = vld [vmem:[#allocation2 + $0x5c] sm:$0xff]
      %v2511 = vld [vmem:[#allocation2 + $0x64] sm:$0xff]
      %v2512 = vld [vmem:[#allocation2 + $0x6c] sm:$0xff]
      %v2513 = vld [vmem:[#allocation2 + $0x74] sm:$0xff]
      %v2514 = vld [vmem:[#allocation2 + $0x7c] sm:$0xff]
      %v2515 = vld [vmem:[#allocation2 + $0x84] sm:$0xff]
      %v2516 = vld [vmem:[#allocation2 + $0x8c] sm:$0xff]
      %v2517 = vld [vmem:[#allocation2 + $0x94] sm:$0xff]
      %v2518 = vpack.c.bf16 %v2501, %v2500
      %v2519 = vpack.c.bf16 %v2503, %v2502
      %v2520 = vpack.c.bf16 %v2505, %v2504
      %v2521 = vpack.c.bf16 %v2507, %v2506
      %v2522 = vpack.c.bf16 %v2509, %v2508
      %v2523 = vpack.c.bf16 %v2511, %v2510
      %v2524 = vpack.c.bf16 %v2513, %v2512
      %v2525 = vpack.c.bf16 %v2515, %v2514
      %v2526 = vpack.c.bf16 %v2517, %v2516
      %v2527 = vld [vmem:[%s3 + $0x18] sm:$0xff]
      %v2528 = vpack.c.bf16 %v2527, %v2527
      %v2530 = vsel %vm280, %v2518, 0
      %v2533 = vsel %vm280, %v2519, 0
      %v2536 = vsel %vm280, %v2520, 0
      %v2539 = vsel %vm280, %v2521, 0
      %v2542 = vsel %vm280, %v2522, 0
      %v2545 = vsel %vm280, %v2523, 0
      %v2548 = vsel %vm280, %v2524, 0
      %v2551 = vsel %vm280, %v2525, 0
      %v2554 = vsel %vm280, %v2526, 0
      %v2557 = vsel %vm411, %v2528, 0
      %2559 = vmatprep.subr.bf16.mxu0 0
      %2560 = vmatpush1.bf16.msra.mxu0 0
      %2561 = vmatprep.subr.bf16.mxu0 0
      %2562 = vmatpush1.bf16.msra.mxu0 0
      %2563 = vmatprep.subr.bf16.mxu0 0
      %2564 = vmatpush1.bf16.msra.mxu0 0
      %2565 = vmatprep.subr.bf16.mxu0 0
      %2566 = vmatpush1.bf16.msra.mxu0 0
      %2567 = vmatprep.subr.bf16.mxu0 0
      %2568 = vmatpush1.bf16.msra.mxu0 0
      %2569 = vmatprep.subr.bf16.mxu0 0
      %2570 = vmatpush1.bf16.msra.mxu0 0
      %2571 = vmatprep.subr.bf16.mxu0 0
      %2572 = vmatpush1.bf16.msra.mxu0 0
      %2573 = vmatprep.subr.bf16.mxu0 0
      %2574 = vmatpush1.bf16.msra.mxu0 %v2557
      %2575 = vmatprep.subr.bf16.mxu0 0
      %2576 = vmatpush2.bf16.msra.mxu0 0
      %2577 = vmatprep.subr.bf16.mxu0 0
      %2578 = vmatpush2.bf16.msra.mxu0 0
      %2579 = vmatprep.subr.bf16.mxu0 0
      %2580 = vmatpush2.bf16.msra.mxu0 0
      %2581 = vmatprep.subr.bf16.mxu0 0
      %2582 = vmatpush2.bf16.msra.mxu0 0
      %2583 = vmatprep.subr.bf16.mxu0 0
      %2584 = vmatpush2.bf16.msra.mxu0 0
      %2585 = vmatprep.subr.bf16.mxu0 0
      %2586 = vmatpush2.bf16.msra.mxu0 0
      %2587 = vmatprep.subr.bf16.mxu0 0
      %2588 = vmatpush2.bf16.msra.mxu0 0
      %2589 = vmatprep.subr.bf16.mxu0 0
      %2590 = vmatpush2.bf16.msra.mxu0 0
      %2591 = vmatprep.mubr.bf16.mxu0 0
      %2592 = vmatmul.mubr.bf16.gmra.mxu0 %v2530
      %v2593 = vpop.f32.mrf.mxu0
      %v2594 = vadd.f32 0.0, %v2593
      %v2595 = vpop.f32.mrf.mxu0
      %v2596 = vpop.f32.mrf.mxu0
      %v2597 = vadd.f32 0.0, %v2596
      %v2598 = vpop.f32.mrf.mxu0
      %2599 = vmatprep.mubr.bf16.mxu0 0
      %2600 = vmatmul.mubr.bf16.gmra.mxu0 %v2533
      %v2601 = vpop.f32.mrf.mxu0
      %v2602 = vadd.f32 0.0, %v2601
      %v2603 = vpop.f32.mrf.mxu0
      %v2604 = vpop.f32.mrf.mxu0
      %v2605 = vadd.f32 0.0, %v2604
      %v2606 = vpop.f32.mrf.mxu0
      %2607 = vmatprep.mubr.bf16.mxu0 0
      %2608 = vmatmul.mubr.bf16.gmra.mxu0 %v2536
      %v2609 = vpop.f32.mrf.mxu0
      %v2610 = vadd.f32 0.0, %v2609
      %v2611 = vpop.f32.mrf.mxu0
      %v2612 = vpop.f32.mrf.mxu0
      %v2613 = vadd.f32 0.0, %v2612
      %v2614 = vpop.f32.mrf.mxu0
      %2615 = vmatprep.mubr.bf16.mxu0 0
      %2616 = vmatmul.mubr.bf16.gmra.mxu0 %v2539
      %v2617 = vpop.f32.mrf.mxu0
      %v2618 = vadd.f32 0.0, %v2617
      %v2619 = vpop.f32.mrf.mxu0
      %v2620 = vpop.f32.mrf.mxu0
      %v2621 = vadd.f32 0.0, %v2620
      %v2622 = vpop.f32.mrf.mxu0
      %2623 = vmatprep.mubr.bf16.mxu0 0
      %2624 = vmatmul.mubr.bf16.gmra.mxu0 %v2542
      %v2625 = vpop.f32.mrf.mxu0
      %v2626 = vadd.f32 0.0, %v2625
      %v2627 = vpop.f32.mrf.mxu0
      %v2628 = vpop.f32.mrf.mxu0
      %v2629 = vadd.f32 0.0, %v2628
      %v2630 = vpop.f32.mrf.mxu0
      %2631 = vmatprep.mubr.bf16.mxu0 0
      %2632 = vmatmul.mubr.bf16.gmra.mxu0 %v2545
      %v2633 = vpop.f32.mrf.mxu0
      %v2634 = vadd.f32 0.0, %v2633
      %v2635 = vpop.f32.mrf.mxu0
      %v2636 = vpop.f32.mrf.mxu0
      %v2637 = vadd.f32 0.0, %v2636
      %v2638 = vpop.f32.mrf.mxu0
      %2639 = vmatprep.mubr.bf16.mxu0 0
      %2640 = vmatmul.mubr.bf16.gmra.mxu0 %v2548
      %v2641 = vpop.f32.mrf.mxu0
      %v2642 = vadd.f32 0.0, %v2641
      %v2643 = vpop.f32.mrf.mxu0
      %v2644 = vpop.f32.mrf.mxu0
      %v2645 = vadd.f32 0.0, %v2644
      %v2646 = vpop.f32.mrf.mxu0
      %2647 = vmatprep.mubr.bf16.mxu0 0
      %2648 = vmatmul.mubr.bf16.gmra.mxu0 %v2551
      %v2649 = vpop.f32.mrf.mxu0
      %v2650 = vadd.f32 0.0, %v2649
      %v2651 = vpop.f32.mrf.mxu0
      %v2652 = vpop.f32.mrf.mxu0
      %v2653 = vadd.f32 0.0, %v2652
      %v2654 = vpop.f32.mrf.mxu0
      %2655 = vmatprep.mubr.bf16.mxu0 0
      %2656 = vmatmul.mubr.bf16.gmra.mxu0 %v2554
      %v2657 = vpop.f32.mrf.mxu0
      %v2658 = vadd.f32 0.0, %v2657
      %v2659 = vpop.f32.mrf.mxu0
      %v2660 = vpop.f32.mrf.mxu0
      %v2661 = vadd.f32 0.0, %v2660
      %v2662 = vpop.f32.mrf.mxu0
      %2663 = vdwg.mxu0
      %v2664 = vadd.f32 %v2482, %v2594
      %v2665 = vadd.f32 %v2483, %v2597
      %v2666 = vadd.f32 %v2484, %v2602
      %v2667 = vadd.f32 %v2485, %v2605
      %v2668 = vadd.f32 %v2486, %v2610
      %v2669 = vadd.f32 %v2487, %v2613
      %v2670 = vadd.f32 %v2488, %v2618
      %v2671 = vadd.f32 %v2489, %v2621
      %v2672 = vadd.f32 %v2490, %v2626
      %v2673 = vadd.f32 %v2491, %v2629
      %v2674 = vadd.f32 %v2492, %v2634
      %v2675 = vadd.f32 %v2493, %v2637
      %v2676 = vadd.f32 %v2494, %v2642
      %v2677 = vadd.f32 %v2495, %v2645
      %v2678 = vadd.f32 %v2496, %v2650
      %v2679 = vadd.f32 %v2497, %v2653
      %v2680 = vadd.f32 %v2498, %v2658
      %v2681 = vadd.f32 %v2499, %v2661
      %v2682 = vld [vmem:[#allocation2 + $0xd] sm:$0xff]
      %v2683 = vld [vmem:[#allocation2 + $0x15] sm:$0xff]
      %v2684 = vld [vmem:[#allocation2 + $0x1d] sm:$0xff]
      %v2685 = vld [vmem:[#allocation2 + $0x25] sm:$0xff]
      %v2686 = vld [vmem:[#allocation2 + $0x2d] sm:$0xff]
      %v2687 = vld [vmem:[#allocation2 + $0x35] sm:$0xff]
      %v2688 = vld [vmem:[#allocation2 + $0x3d] sm:$0xff]
      %v2689 = vld [vmem:[#allocation2 + $0x45] sm:$0xff]
      %v2690 = vld [vmem:[#allocation2 + $0x4d] sm:$0xff]
      %v2691 = vld [vmem:[#allocation2 + $0x55] sm:$0xff]
      %v2692 = vld [vmem:[#allocation2 + $0x5d] sm:$0xff]
      %v2693 = vld [vmem:[#allocation2 + $0x65] sm:$0xff]
      %v2694 = vld [vmem:[#allocation2 + $0x6d] sm:$0xff]
      %v2695 = vld [vmem:[#allocation2 + $0x75] sm:$0xff]
      %v2696 = vld [vmem:[#allocation2 + $0x7d] sm:$0xff]
      %v2697 = vld [vmem:[#allocation2 + $0x85] sm:$0xff]
      %v2698 = vld [vmem:[#allocation2 + $0x8d] sm:$0xff]
      %v2699 = vld [vmem:[#allocation2 + $0x95] sm:$0xff]
      %v2700 = vpack.c.bf16 %v2683, %v2682
      %v2701 = vpack.c.bf16 %v2685, %v2684
      %v2702 = vpack.c.bf16 %v2687, %v2686
      %v2703 = vpack.c.bf16 %v2689, %v2688
      %v2704 = vpack.c.bf16 %v2691, %v2690
      %v2705 = vpack.c.bf16 %v2693, %v2692
      %v2706 = vpack.c.bf16 %v2695, %v2694
      %v2707 = vpack.c.bf16 %v2697, %v2696
      %v2708 = vpack.c.bf16 %v2699, %v2698
      %v2709 = vld [vmem:[%s3 + $0x20] sm:$0xff]
      %v2710 = vpack.c.bf16 %v2709, %v2709
      %v2712 = vsel %vm280, %v2700, 0
      %v2715 = vsel %vm280, %v2701, 0
      %v2718 = vsel %vm280, %v2702, 0
      %v2721 = vsel %vm280, %v2703, 0
      %v2724 = vsel %vm280, %v2704, 0
      %v2727 = vsel %vm280, %v2705, 0
      %v2730 = vsel %vm280, %v2706, 0
      %v2733 = vsel %vm280, %v2707, 0
      %v2736 = vsel %vm280, %v2708, 0
      %v2739 = vsel %vm411, %v2710, 0
      %2741 = vmatprep.subr.bf16.mxu0 0
      %2742 = vmatpush1.bf16.msra.mxu0 0
      %2743 = vmatprep.subr.bf16.mxu0 0
      %2744 = vmatpush1.bf16.msra.mxu0 0
      %2745 = vmatprep.subr.bf16.mxu0 0
      %2746 = vmatpush1.bf16.msra.mxu0 0
      %2747 = vmatprep.subr.bf16.mxu0 0
      %2748 = vmatpush1.bf16.msra.mxu0 0
      %2749 = vmatprep.subr.bf16.mxu0 0
      %2750 = vmatpush1.bf16.msra.mxu0 0
      %2751 = vmatprep.subr.bf16.mxu0 0
      %2752 = vmatpush1.bf16.msra.mxu0 0
      %2753 = vmatprep.subr.bf16.mxu0 0
      %2754 = vmatpush1.bf16.msra.mxu0 0
      %2755 = vmatprep.subr.bf16.mxu0 0
      %2756 = vmatpush1.bf16.msra.mxu0 %v2739
      %2757 = vmatprep.subr.bf16.mxu0 0
      %2758 = vmatpush2.bf16.msra.mxu0 0
      %2759 = vmatprep.subr.bf16.mxu0 0
      %2760 = vmatpush2.bf16.msra.mxu0 0
      %2761 = vmatprep.subr.bf16.mxu0 0
      %2762 = vmatpush2.bf16.msra.mxu0 0
      %2763 = vmatprep.subr.bf16.mxu0 0
      %2764 = vmatpush2.bf16.msra.mxu0 0
      %2765 = vmatprep.subr.bf16.mxu0 0
      %2766 = vmatpush2.bf16.msra.mxu0 0
      %2767 = vmatprep.subr.bf16.mxu0 0
      %2768 = vmatpush2.bf16.msra.mxu0 0
      %2769 = vmatprep.subr.bf16.mxu0 0
      %2770 = vmatpush2.bf16.msra.mxu0 0
      %2771 = vmatprep.subr.bf16.mxu0 0
      %2772 = vmatpush2.bf16.msra.mxu0 0
      %2773 = vmatprep.mubr.bf16.mxu0 0
      %2774 = vmatmul.mubr.bf16.gmra.mxu0 %v2712
      %v2775 = vpop.f32.mrf.mxu0
      %v2776 = vadd.f32 0.0, %v2775
      %v2777 = vpop.f32.mrf.mxu0
      %v2778 = vpop.f32.mrf.mxu0
      %v2779 = vadd.f32 0.0, %v2778
      %v2780 = vpop.f32.mrf.mxu0
      %2781 = vmatprep.mubr.bf16.mxu0 0
      %2782 = vmatmul.mubr.bf16.gmra.mxu0 %v2715
      %v2783 = vpop.f32.mrf.mxu0
      %v2784 = vadd.f32 0.0, %v2783
      %v2785 = vpop.f32.mrf.mxu0
      %v2786 = vpop.f32.mrf.mxu0
      %v2787 = vadd.f32 0.0, %v2786
      %v2788 = vpop.f32.mrf.mxu0
      %2789 = vmatprep.mubr.bf16.mxu0 0
      %2790 = vmatmul.mubr.bf16.gmra.mxu0 %v2718
      %v2791 = vpop.f32.mrf.mxu0
      %v2792 = vadd.f32 0.0, %v2791
      %v2793 = vpop.f32.mrf.mxu0
      %v2794 = vpop.f32.mrf.mxu0
      %v2795 = vadd.f32 0.0, %v2794
      %v2796 = vpop.f32.mrf.mxu0
      %2797 = vmatprep.mubr.bf16.mxu0 0
      %2798 = vmatmul.mubr.bf16.gmra.mxu0 %v2721
      %v2799 = vpop.f32.mrf.mxu0
      %v2800 = vadd.f32 0.0, %v2799
      %v2801 = vpop.f32.mrf.mxu0
      %v2802 = vpop.f32.mrf.mxu0
      %v2803 = vadd.f32 0.0, %v2802
      %v2804 = vpop.f32.mrf.mxu0
      %2805 = vmatprep.mubr.bf16.mxu0 0
      %2806 = vmatmul.mubr.bf16.gmra.mxu0 %v2724
      %v2807 = vpop.f32.mrf.mxu0
      %v2808 = vadd.f32 0.0, %v2807
      %v2809 = vpop.f32.mrf.mxu0
      %v2810 = vpop.f32.mrf.mxu0
      %v2811 = vadd.f32 0.0, %v2810
      %v2812 = vpop.f32.mrf.mxu0
      %2813 = vmatprep.mubr.bf16.mxu0 0
      %2814 = vmatmul.mubr.bf16.gmra.mxu0 %v2727
      %v2815 = vpop.f32.mrf.mxu0
      %v2816 = vadd.f32 0.0, %v2815
      %v2817 = vpop.f32.mrf.mxu0
      %v2818 = vpop.f32.mrf.mxu0
      %v2819 = vadd.f32 0.0, %v2818
      %v2820 = vpop.f32.mrf.mxu0
      %2821 = vmatprep.mubr.bf16.mxu0 0
      %2822 = vmatmul.mubr.bf16.gmra.mxu0 %v2730
      %v2823 = vpop.f32.mrf.mxu0
      %v2824 = vadd.f32 0.0, %v2823
      %v2825 = vpop.f32.mrf.mxu0
      %v2826 = vpop.f32.mrf.mxu0
      %v2827 = vadd.f32 0.0, %v2826
      %v2828 = vpop.f32.mrf.mxu0
      %2829 = vmatprep.mubr.bf16.mxu0 0
      %2830 = vmatmul.mubr.bf16.gmra.mxu0 %v2733
      %v2831 = vpop.f32.mrf.mxu0
      %v2832 = vadd.f32 0.0, %v2831
      %v2833 = vpop.f32.mrf.mxu0
      %v2834 = vpop.f32.mrf.mxu0
      %v2835 = vadd.f32 0.0, %v2834
      %v2836 = vpop.f32.mrf.mxu0
      %2837 = vmatprep.mubr.bf16.mxu0 0
      %2838 = vmatmul.mubr.bf16.gmra.mxu0 %v2736
      %v2839 = vpop.f32.mrf.mxu0
      %v2840 = vadd.f32 0.0, %v2839
      %v2841 = vpop.f32.mrf.mxu0
      %v2842 = vpop.f32.mrf.mxu0
      %v2843 = vadd.f32 0.0, %v2842
      %v2844 = vpop.f32.mrf.mxu0
      %2845 = vdwg.mxu0
      %v2846 = vadd.f32 %v2664, %v2776
      %v2847 = vadd.f32 %v2665, %v2779
      %v2848 = vadd.f32 %v2666, %v2784
      %v2849 = vadd.f32 %v2667, %v2787
      %v2850 = vadd.f32 %v2668, %v2792
      %v2851 = vadd.f32 %v2669, %v2795
      %v2852 = vadd.f32 %v2670, %v2800
      %v2853 = vadd.f32 %v2671, %v2803
      %v2854 = vadd.f32 %v2672, %v2808
      %v2855 = vadd.f32 %v2673, %v2811
      %v2856 = vadd.f32 %v2674, %v2816
      %v2857 = vadd.f32 %v2675, %v2819
      %v2858 = vadd.f32 %v2676, %v2824
      %v2859 = vadd.f32 %v2677, %v2827
      %v2860 = vadd.f32 %v2678, %v2832
      %v2861 = vadd.f32 %v2679, %v2835
      %v2862 = vadd.f32 %v2680, %v2840
      %v2863 = vadd.f32 %v2681, %v2843
      %v2864 = vld [vmem:[#allocation2 + $0xe] sm:$0xff]
      %v2865 = vld [vmem:[#allocation2 + $0x16] sm:$0xff]
      %v2866 = vld [vmem:[#allocation2 + $0x1e] sm:$0xff]
      %v2867 = vld [vmem:[#allocation2 + $0x26] sm:$0xff]
      %v2868 = vld [vmem:[#allocation2 + $0x2e] sm:$0xff]
      %v2869 = vld [vmem:[#allocation2 + $0x36] sm:$0xff]
      %v2870 = vld [vmem:[#allocation2 + $0x3e] sm:$0xff]
      %v2871 = vld [vmem:[#allocation2 + $0x46] sm:$0xff]
      %v2872 = vld [vmem:[#allocation2 + $0x4e] sm:$0xff]
      %v2873 = vld [vmem:[#allocation2 + $0x56] sm:$0xff]
      %v2874 = vld [vmem:[#allocation2 + $0x5e] sm:$0xff]
      %v2875 = vld [vmem:[#allocation2 + $0x66] sm:$0xff]
      %v2876 = vld [vmem:[#allocation2 + $0x6e] sm:$0xff]
      %v2877 = vld [vmem:[#allocation2 + $0x76] sm:$0xff]
      %v2878 = vld [vmem:[#allocation2 + $0x7e] sm:$0xff]
      %v2879 = vld [vmem:[#allocation2 + $0x86] sm:$0xff]
      %v2880 = vld [vmem:[#allocation2 + $0x8e] sm:$0xff]
      %v2881 = vld [vmem:[#allocation2 + $0x96] sm:$0xff]
      %v2882 = vpack.c.bf16 %v2865, %v2864
      %v2883 = vpack.c.bf16 %v2867, %v2866
      %v2884 = vpack.c.bf16 %v2869, %v2868
      %v2885 = vpack.c.bf16 %v2871, %v2870
      %v2886 = vpack.c.bf16 %v2873, %v2872
      %v2887 = vpack.c.bf16 %v2875, %v2874
      %v2888 = vpack.c.bf16 %v2877, %v2876
      %v2889 = vpack.c.bf16 %v2879, %v2878
      %v2890 = vpack.c.bf16 %v2881, %v2880
      %v2891 = vld [vmem:[%s3 + $0x28] sm:$0xff]
      %v2892 = vpack.c.bf16 %v2891, %v2891
      %v2894 = vsel %vm280, %v2882, 0
      %v2897 = vsel %vm280, %v2883, 0
      %v2900 = vsel %vm280, %v2884, 0
      %v2903 = vsel %vm280, %v2885, 0
      %v2906 = vsel %vm280, %v2886, 0
      %v2909 = vsel %vm280, %v2887, 0
      %v2912 = vsel %vm280, %v2888, 0
      %v2915 = vsel %vm280, %v2889, 0
      %v2918 = vsel %vm280, %v2890, 0
      %v2921 = vsel %vm411, %v2892, 0
      %2923 = vmatprep.subr.bf16.mxu0 0
      %2924 = vmatpush1.bf16.msra.mxu0 0
      %2925 = vmatprep.subr.bf16.mxu0 0
      %2926 = vmatpush1.bf16.msra.mxu0 0
      %2927 = vmatprep.subr.bf16.mxu0 0
      %2928 = vmatpush1.bf16.msra.mxu0 0
      %2929 = vmatprep.subr.bf16.mxu0 0
      %2930 = vmatpush1.bf16.msra.mxu0 0
      %2931 = vmatprep.subr.bf16.mxu0 0
      %2932 = vmatpush1.bf16.msra.mxu0 0
      %2933 = vmatprep.subr.bf16.mxu0 0
      %2934 = vmatpush1.bf16.msra.mxu0 0
      %2935 = vmatprep.subr.bf16.mxu0 0
      %2936 = vmatpush1.bf16.msra.mxu0 0
      %2937 = vmatprep.subr.bf16.mxu0 0
      %2938 = vmatpush1.bf16.msra.mxu0 %v2921
      %2939 = vmatprep.subr.bf16.mxu0 0
      %2940 = vmatpush2.bf16.msra.mxu0 0
      %2941 = vmatprep.subr.bf16.mxu0 0
      %2942 = vmatpush2.bf16.msra.mxu0 0
      %2943 = vmatprep.subr.bf16.mxu0 0
      %2944 = vmatpush2.bf16.msra.mxu0 0
      %2945 = vmatprep.subr.bf16.mxu0 0
      %2946 = vmatpush2.bf16.msra.mxu0 0
      %2947 = vmatprep.subr.bf16.mxu0 0
      %2948 = vmatpush2.bf16.msra.mxu0 0
      %2949 = vmatprep.subr.bf16.mxu0 0
      %2950 = vmatpush2.bf16.msra.mxu0 0
      %2951 = vmatprep.subr.bf16.mxu0 0
      %2952 = vmatpush2.bf16.msra.mxu0 0
      %2953 = vmatprep.subr.bf16.mxu0 0
      %2954 = vmatpush2.bf16.msra.mxu0 0
      %2955 = vmatprep.mubr.bf16.mxu0 0
      %2956 = vmatmul.mubr.bf16.gmra.mxu0 %v2894
      %v2957 = vpop.f32.mrf.mxu0
      %v2958 = vadd.f32 0.0, %v2957
      %v2959 = vpop.f32.mrf.mxu0
      %v2960 = vpop.f32.mrf.mxu0
      %v2961 = vadd.f32 0.0, %v2960
      %v2962 = vpop.f32.mrf.mxu0
      %2963 = vmatprep.mubr.bf16.mxu0 0
      %2964 = vmatmul.mubr.bf16.gmra.mxu0 %v2897
      %v2965 = vpop.f32.mrf.mxu0
      %v2966 = vadd.f32 0.0, %v2965
      %v2967 = vpop.f32.mrf.mxu0
      %v2968 = vpop.f32.mrf.mxu0
      %v2969 = vadd.f32 0.0, %v2968
      %v2970 = vpop.f32.mrf.mxu0
      %2971 = vmatprep.mubr.bf16.mxu0 0
      %2972 = vmatmul.mubr.bf16.gmra.mxu0 %v2900
      %v2973 = vpop.f32.mrf.mxu0
      %v2974 = vadd.f32 0.0, %v2973
      %v2975 = vpop.f32.mrf.mxu0
      %v2976 = vpop.f32.mrf.mxu0
      %v2977 = vadd.f32 0.0, %v2976
      %v2978 = vpop.f32.mrf.mxu0
      %2979 = vmatprep.mubr.bf16.mxu0 0
      %2980 = vmatmul.mubr.bf16.gmra.mxu0 %v2903
      %v2981 = vpop.f32.mrf.mxu0
      %v2982 = vadd.f32 0.0, %v2981
      %v2983 = vpop.f32.mrf.mxu0
      %v2984 = vpop.f32.mrf.mxu0
      %v2985 = vadd.f32 0.0, %v2984
      %v2986 = vpop.f32.mrf.mxu0
      %2987 = vmatprep.mubr.bf16.mxu0 0
      %2988 = vmatmul.mubr.bf16.gmra.mxu0 %v2906
      %v2989 = vpop.f32.mrf.mxu0
      %v2990 = vadd.f32 0.0, %v2989
      %v2991 = vpop.f32.mrf.mxu0
      %v2992 = vpop.f32.mrf.mxu0
      %v2993 = vadd.f32 0.0, %v2992
      %v2994 = vpop.f32.mrf.mxu0
      %2995 = vmatprep.mubr.bf16.mxu0 0
      %2996 = vmatmul.mubr.bf16.gmra.mxu0 %v2909
      %v2997 = vpop.f32.mrf.mxu0
      %v2998 = vadd.f32 0.0, %v2997
      %v2999 = vpop.f32.mrf.mxu0
      %v3000 = vpop.f32.mrf.mxu0
      %v3001 = vadd.f32 0.0, %v3000
      %v3002 = vpop.f32.mrf.mxu0
      %3003 = vmatprep.mubr.bf16.mxu0 0
      %3004 = vmatmul.mubr.bf16.gmra.mxu0 %v2912
      %v3005 = vpop.f32.mrf.mxu0
      %v3006 = vadd.f32 0.0, %v3005
      %v3007 = vpop.f32.mrf.mxu0
      %v3008 = vpop.f32.mrf.mxu0
      %v3009 = vadd.f32 0.0, %v3008
      %v3010 = vpop.f32.mrf.mxu0
      %3011 = vmatprep.mubr.bf16.mxu0 0
      %3012 = vmatmul.mubr.bf16.gmra.mxu0 %v2915
      %v3013 = vpop.f32.mrf.mxu0
      %v3014 = vadd.f32 0.0, %v3013
      %v3015 = vpop.f32.mrf.mxu0
      %v3016 = vpop.f32.mrf.mxu0
      %v3017 = vadd.f32 0.0, %v3016
      %v3018 = vpop.f32.mrf.mxu0
      %3019 = vmatprep.mubr.bf16.mxu0 0
      %3020 = vmatmul.mubr.bf16.gmra.mxu0 %v2918
      %v3021 = vpop.f32.mrf.mxu0
      %v3022 = vadd.f32 0.0, %v3021
      %v3023 = vpop.f32.mrf.mxu0
      %v3024 = vpop.f32.mrf.mxu0
      %v3025 = vadd.f32 0.0, %v3024
      %v3026 = vpop.f32.mrf.mxu0
      %3027 = vdwg.mxu0
      %v3028 = vadd.f32 %v2846, %v2958
      %v3029 = vadd.f32 %v2847, %v2961
      %v3030 = vadd.f32 %v2848, %v2966
      %v3031 = vadd.f32 %v2849, %v2969
      %v3032 = vadd.f32 %v2850, %v2974
      %v3033 = vadd.f32 %v2851, %v2977
      %v3034 = vadd.f32 %v2852, %v2982
      %v3035 = vadd.f32 %v2853, %v2985
      %v3036 = vadd.f32 %v2854, %v2990
      %v3037 = vadd.f32 %v2855, %v2993
      %v3038 = vadd.f32 %v2856, %v2998
      %v3039 = vadd.f32 %v2857, %v3001
      %v3040 = vadd.f32 %v2858, %v3006
      %v3041 = vadd.f32 %v2859, %v3009
      %v3042 = vadd.f32 %v2860, %v3014
      %v3043 = vadd.f32 %v2861, %v3017
      %v3044 = vadd.f32 %v2862, %v3022
      %v3045 = vadd.f32 %v2863, %v3025
      %v3046 = vld [vmem:[#allocation2 + $0x18] sm:$0xff]
      %v3047 = vld [vmem:[#allocation2 + $0x20] sm:$0xff]
      %v3048 = vld [vmem:[#allocation2 + $0x28] sm:$0xff]
      %v3049 = vld [vmem:[#allocation2 + $0x30] sm:$0xff]
      %v3050 = vld [vmem:[#allocation2 + $0x38] sm:$0xff]
      %v3051 = vld [vmem:[#allocation2 + $0x40] sm:$0xff]
      %v3052 = vld [vmem:[#allocation2 + $0x48] sm:$0xff]
      %v3053 = vld [vmem:[#allocation2 + $0x50] sm:$0xff]
      %v3054 = vld [vmem:[#allocation2 + $0x58] sm:$0xff]
      %v3055 = vld [vmem:[#allocation2 + $0x60] sm:$0xff]
      %v3056 = vld [vmem:[#allocation2 + $0x68] sm:$0xff]
      %v3057 = vld [vmem:[#allocation2 + $0x70] sm:$0xff]
      %v3058 = vld [vmem:[#allocation2 + $0x78] sm:$0xff]
      %v3059 = vld [vmem:[#allocation2 + $0x80] sm:$0xff]
      %v3060 = vld [vmem:[#allocation2 + $0x88] sm:$0xff]
      %v3061 = vld [vmem:[#allocation2 + $0x90] sm:$0xff]
      %v3062 = vld [vmem:[#allocation2 + $0x98] sm:$0xff]
      %v3063 = vld [vmem:[#allocation2 + $0xa0] sm:$0xff]
      %v3064 = vpack.c.bf16 %v3047, %v3046
      %v3065 = vpack.c.bf16 %v3049, %v3048
      %v3066 = vpack.c.bf16 %v3051, %v3050
      %v3067 = vpack.c.bf16 %v3053, %v3052
      %v3068 = vpack.c.bf16 %v3055, %v3054
      %v3069 = vpack.c.bf16 %v3057, %v3056
      %v3070 = vpack.c.bf16 %v3059, %v3058
      %v3071 = vpack.c.bf16 %v3061, %v3060
      %v3072 = vpack.c.bf16 %v3063, %v3062
      %v3073 = vld [vmem:[%s3 + $0x30] sm:$0xff]
      %v3074 = vpack.c.bf16 %v3073, %v3073
      %v3076 = vsel %vm280, %v3064, 0
      %v3079 = vsel %vm280, %v3065, 0
      %v3082 = vsel %vm280, %v3066, 0
      %v3085 = vsel %vm280, %v3067, 0
      %v3088 = vsel %vm280, %v3068, 0
      %v3091 = vsel %vm280, %v3069, 0
      %v3094 = vsel %vm280, %v3070, 0
      %v3097 = vsel %vm280, %v3071, 0
      %v3100 = vsel %vm280, %v3072, 0
      %v3103 = vsel %vm411, %v3074, 0
      %3105 = vmatprep.subr.bf16.mxu0 0
      %3106 = vmatpush1.bf16.msra.mxu0 0
      %3107 = vmatprep.subr.bf16.mxu0 0
      %3108 = vmatpush1.bf16.msra.mxu0 0
      %3109 = vmatprep.subr.bf16.mxu0 0
      %3110 = vmatpush1.bf16.msra.mxu0 0
      %3111 = vmatprep.subr.bf16.mxu0 0
      %3112 = vmatpush1.bf16.msra.mxu0 0
      %3113 = vmatprep.subr.bf16.mxu0 0
      %3114 = vmatpush1.bf16.msra.mxu0 0
      %3115 = vmatprep.subr.bf16.mxu0 0
      %3116 = vmatpush1.bf16.msra.mxu0 0
      %3117 = vmatprep.subr.bf16.mxu0 0
      %3118 = vmatpush1.bf16.msra.mxu0 0
      %3119 = vmatprep.subr.bf16.mxu0 0
      %3120 = vmatpush1.bf16.msra.mxu0 %v3103
      %3121 = vmatprep.subr.bf16.mxu0 0
      %3122 = vmatpush2.bf16.msra.mxu0 0
      %3123 = vmatprep.subr.bf16.mxu0 0
      %3124 = vmatpush2.bf16.msra.mxu0 0
      %3125 = vmatprep.subr.bf16.mxu0 0
      %3126 = vmatpush2.bf16.msra.mxu0 0
      %3127 = vmatprep.subr.bf16.mxu0 0
      %3128 = vmatpush2.bf16.msra.mxu0 0
      %3129 = vmatprep.subr.bf16.mxu0 0
      %3130 = vmatpush2.bf16.msra.mxu0 0
      %3131 = vmatprep.subr.bf16.mxu0 0
      %3132 = vmatpush2.bf16.msra.mxu0 0
      %3133 = vmatprep.subr.bf16.mxu0 0
      %3134 = vmatpush2.bf16.msra.mxu0 0
      %3135 = vmatprep.subr.bf16.mxu0 0
      %3136 = vmatpush2.bf16.msra.mxu0 0
      %3137 = vmatprep.mubr.bf16.mxu0 0
      %3138 = vmatmul.mubr.bf16.gmra.mxu0 %v3076
      %v3139 = vpop.f32.mrf.mxu0
      %v3140 = vadd.f32 0.0, %v3139
      %v3141 = vpop.f32.mrf.mxu0
      %v3142 = vpop.f32.mrf.mxu0
      %v3143 = vadd.f32 0.0, %v3142
      %v3144 = vpop.f32.mrf.mxu0
      %3145 = vmatprep.mubr.bf16.mxu0 0
      %3146 = vmatmul.mubr.bf16.gmra.mxu0 %v3079
      %v3147 = vpop.f32.mrf.mxu0
      %v3148 = vadd.f32 0.0, %v3147
      %v3149 = vpop.f32.mrf.mxu0
      %v3150 = vpop.f32.mrf.mxu0
      %v3151 = vadd.f32 0.0, %v3150
      %v3152 = vpop.f32.mrf.mxu0
      %3153 = vmatprep.mubr.bf16.mxu0 0
      %3154 = vmatmul.mubr.bf16.gmra.mxu0 %v3082
      %v3155 = vpop.f32.mrf.mxu0
      %v3156 = vadd.f32 0.0, %v3155
      %v3157 = vpop.f32.mrf.mxu0
      %v3158 = vpop.f32.mrf.mxu0
      %v3159 = vadd.f32 0.0, %v3158
      %v3160 = vpop.f32.mrf.mxu0
      %3161 = vmatprep.mubr.bf16.mxu0 0
      %3162 = vmatmul.mubr.bf16.gmra.mxu0 %v3085
      %v3163 = vpop.f32.mrf.mxu0
      %v3164 = vadd.f32 0.0, %v3163
      %v3165 = vpop.f32.mrf.mxu0
      %v3166 = vpop.f32.mrf.mxu0
      %v3167 = vadd.f32 0.0, %v3166
      %v3168 = vpop.f32.mrf.mxu0
      %3169 = vmatprep.mubr.bf16.mxu0 0
      %3170 = vmatmul.mubr.bf16.gmra.mxu0 %v3088
      %v3171 = vpop.f32.mrf.mxu0
      %v3172 = vadd.f32 0.0, %v3171
      %v3173 = vpop.f32.mrf.mxu0
      %v3174 = vpop.f32.mrf.mxu0
      %v3175 = vadd.f32 0.0, %v3174
      %v3176 = vpop.f32.mrf.mxu0
      %3177 = vmatprep.mubr.bf16.mxu0 0
      %3178 = vmatmul.mubr.bf16.gmra.mxu0 %v3091
      %v3179 = vpop.f32.mrf.mxu0
      %v3180 = vadd.f32 0.0, %v3179
      %v3181 = vpop.f32.mrf.mxu0
      %v3182 = vpop.f32.mrf.mxu0
      %v3183 = vadd.f32 0.0, %v3182
      %v3184 = vpop.f32.mrf.mxu0
      %3185 = vmatprep.mubr.bf16.mxu0 0
      %3186 = vmatmul.mubr.bf16.gmra.mxu0 %v3094
      %v3187 = vpop.f32.mrf.mxu0
      %v3188 = vadd.f32 0.0, %v3187
      %v3189 = vpop.f32.mrf.mxu0
      %v3190 = vpop.f32.mrf.mxu0
      %v3191 = vadd.f32 0.0, %v3190
      %v3192 = vpop.f32.mrf.mxu0
      %3193 = vmatprep.mubr.bf16.mxu0 0
      %3194 = vmatmul.mubr.bf16.gmra.mxu0 %v3097
      %v3195 = vpop.f32.mrf.mxu0
      %v3196 = vadd.f32 0.0, %v3195
      %v3197 = vpop.f32.mrf.mxu0
      %v3198 = vpop.f32.mrf.mxu0
      %v3199 = vadd.f32 0.0, %v3198
      %v3200 = vpop.f32.mrf.mxu0
      %3201 = vmatprep.mubr.bf16.mxu0 0
      %3202 = vmatmul.mubr.bf16.gmra.mxu0 %v3100
      %v3203 = vpop.f32.mrf.mxu0
      %v3204 = vadd.f32 0.0, %v3203
      %v3205 = vpop.f32.mrf.mxu0
      %v3206 = vpop.f32.mrf.mxu0
      %v3207 = vadd.f32 0.0, %v3206
      %v3208 = vpop.f32.mrf.mxu0
      %3209 = vdwg.mxu0
      %v3210 = vadd.f32 %v3028, %v3140
      %v3211 = vadd.f32 %v3029, %v3143
      %v3212 = vadd.f32 %v3030, %v3148
      %v3213 = vadd.f32 %v3031, %v3151
      %v3214 = vadd.f32 %v3032, %v3156
      %v3215 = vadd.f32 %v3033, %v3159
      %v3216 = vadd.f32 %v3034, %v3164
      %v3217 = vadd.f32 %v3035, %v3167
      %v3218 = vadd.f32 %v3036, %v3172
      %v3219 = vadd.f32 %v3037, %v3175
      %v3220 = vadd.f32 %v3038, %v3180
      %v3221 = vadd.f32 %v3039, %v3183
      %v3222 = vadd.f32 %v3040, %v3188
      %v3223 = vadd.f32 %v3041, %v3191
      %v3224 = vadd.f32 %v3042, %v3196
      %v3225 = vadd.f32 %v3043, %v3199
      %v3226 = vadd.f32 %v3044, %v3204
      %v3227 = vadd.f32 %v3045, %v3207
      %v3228 = vld [vmem:[#allocation2 + $0x19] sm:$0xff]
      %v3229 = vld [vmem:[#allocation2 + $0x21] sm:$0xff]
      %v3230 = vld [vmem:[#allocation2 + $0x29] sm:$0xff]
      %v3231 = vld [vmem:[#allocation2 + $0x31] sm:$0xff]
      %v3232 = vld [vmem:[#allocation2 + $0x39] sm:$0xff]
      %v3233 = vld [vmem:[#allocation2 + $0x41] sm:$0xff]
      %v3234 = vld [vmem:[#allocation2 + $0x49] sm:$0xff]
      %v3235 = vld [vmem:[#allocation2 + $0x51] sm:$0xff]
      %v3236 = vld [vmem:[#allocation2 + $0x59] sm:$0xff]
      %v3237 = vld [vmem:[#allocation2 + $0x61] sm:$0xff]
      %v3238 = vld [vmem:[#allocation2 + $0x69] sm:$0xff]
      %v3239 = vld [vmem:[#allocation2 + $0x71] sm:$0xff]
      %v3240 = vld [vmem:[#allocation2 + $0x79] sm:$0xff]
      %v3241 = vld [vmem:[#allocation2 + $0x81] sm:$0xff]
      %v3242 = vld [vmem:[#allocation2 + $0x89] sm:$0xff]
      %v3243 = vld [vmem:[#allocation2 + $0x91] sm:$0xff]
      %v3244 = vld [vmem:[#allocation2 + $0x99] sm:$0xff]
      %v3245 = vld [vmem:[#allocation2 + $0xa1] sm:$0xff]
      %v3246 = vpack.c.bf16 %v3229, %v3228
      %v3247 = vpack.c.bf16 %v3231, %v3230
      %v3248 = vpack.c.bf16 %v3233, %v3232
      %v3249 = vpack.c.bf16 %v3235, %v3234
      %v3250 = vpack.c.bf16 %v3237, %v3236
      %v3251 = vpack.c.bf16 %v3239, %v3238
      %v3252 = vpack.c.bf16 %v3241, %v3240
      %v3253 = vpack.c.bf16 %v3243, %v3242
      %v3254 = vpack.c.bf16 %v3245, %v3244
      %v3255 = vld [vmem:[%s3 + $0x38] sm:$0xff]
      %v3256 = vpack.c.bf16 %v3255, %v3255
      %v3258 = vsel %vm280, %v3246, 0
      %v3261 = vsel %vm280, %v3247, 0
      %v3264 = vsel %vm280, %v3248, 0
      %v3267 = vsel %vm280, %v3249, 0
      %v3270 = vsel %vm280, %v3250, 0
      %v3273 = vsel %vm280, %v3251, 0
      %v3276 = vsel %vm280, %v3252, 0
      %v3279 = vsel %vm280, %v3253, 0
      %v3282 = vsel %vm280, %v3254, 0
      %v3285 = vsel %vm411, %v3256, 0
      %3287 = vmatprep.subr.bf16.mxu0 0
      %3288 = vmatpush1.bf16.msra.mxu0 0
      %3289 = vmatprep.subr.bf16.mxu0 0
      %3290 = vmatpush1.bf16.msra.mxu0 0
      %3291 = vmatprep.subr.bf16.mxu0 0
      %3292 = vmatpush1.bf16.msra.mxu0 0
      %3293 = vmatprep.subr.bf16.mxu0 0
      %3294 = vmatpush1.bf16.msra.mxu0 0
      %3295 = vmatprep.subr.bf16.mxu0 0
      %3296 = vmatpush1.bf16.msra.mxu0 0
      %3297 = vmatprep.subr.bf16.mxu0 0
      %3298 = vmatpush1.bf16.msra.mxu0 0
      %3299 = vmatprep.subr.bf16.mxu0 0
      %3300 = vmatpush1.bf16.msra.mxu0 0
      %3301 = vmatprep.subr.bf16.mxu0 0
      %3302 = vmatpush1.bf16.msra.mxu0 %v3285
      %3303 = vmatprep.subr.bf16.mxu0 0
      %3304 = vmatpush2.bf16.msra.mxu0 0
      %3305 = vmatprep.subr.bf16.mxu0 0
      %3306 = vmatpush2.bf16.msra.mxu0 0
      %3307 = vmatprep.subr.bf16.mxu0 0
      %3308 = vmatpush2.bf16.msra.mxu0 0
      %3309 = vmatprep.subr.bf16.mxu0 0
      %3310 = vmatpush2.bf16.msra.mxu0 0
      %3311 = vmatprep.subr.bf16.mxu0 0
      %3312 = vmatpush2.bf16.msra.mxu0 0
      %3313 = vmatprep.subr.bf16.mxu0 0
      %3314 = vmatpush2.bf16.msra.mxu0 0
      %3315 = vmatprep.subr.bf16.mxu0 0
      %3316 = vmatpush2.bf16.msra.mxu0 0
      %3317 = vmatprep.subr.bf16.mxu0 0
      %3318 = vmatpush2.bf16.msra.mxu0 0
      %3319 = vmatprep.mubr.bf16.mxu0 0
      %3320 = vmatmul.mubr.bf16.gmra.mxu0 %v3258
      %v3321 = vpop.f32.mrf.mxu0
      %v3322 = vadd.f32 0.0, %v3321
      %v3323 = vpop.f32.mrf.mxu0
      %v3324 = vpop.f32.mrf.mxu0
      %v3325 = vadd.f32 0.0, %v3324
      %v3326 = vpop.f32.mrf.mxu0
      %3327 = vmatprep.mubr.bf16.mxu0 0
      %3328 = vmatmul.mubr.bf16.gmra.mxu0 %v3261
      %v3329 = vpop.f32.mrf.mxu0
      %v3330 = vadd.f32 0.0, %v3329
      %v3331 = vpop.f32.mrf.mxu0
      %v3332 = vpop.f32.mrf.mxu0
      %v3333 = vadd.f32 0.0, %v3332
      %v3334 = vpop.f32.mrf.mxu0
      %3335 = vmatprep.mubr.bf16.mxu0 0
      %3336 = vmatmul.mubr.bf16.gmra.mxu0 %v3264
      %v3337 = vpop.f32.mrf.mxu0
      %v3338 = vadd.f32 0.0, %v3337
      %v3339 = vpop.f32.mrf.mxu0
      %v3340 = vpop.f32.mrf.mxu0
      %v3341 = vadd.f32 0.0, %v3340
      %v3342 = vpop.f32.mrf.mxu0
      %3343 = vmatprep.mubr.bf16.mxu0 0
      %3344 = vmatmul.mubr.bf16.gmra.mxu0 %v3267
      %v3345 = vpop.f32.mrf.mxu0
      %v3346 = vadd.f32 0.0, %v3345
      %v3347 = vpop.f32.mrf.mxu0
      %v3348 = vpop.f32.mrf.mxu0
      %v3349 = vadd.f32 0.0, %v3348
      %v3350 = vpop.f32.mrf.mxu0
      %3351 = vmatprep.mubr.bf16.mxu0 0
      %3352 = vmatmul.mubr.bf16.gmra.mxu0 %v3270
      %v3353 = vpop.f32.mrf.mxu0
      %v3354 = vadd.f32 0.0, %v3353
      %v3355 = vpop.f32.mrf.mxu0
      %v3356 = vpop.f32.mrf.mxu0
      %v3357 = vadd.f32 0.0, %v3356
      %v3358 = vpop.f32.mrf.mxu0
      %3359 = vmatprep.mubr.bf16.mxu0 0
      %3360 = vmatmul.mubr.bf16.gmra.mxu0 %v3273
      %v3361 = vpop.f32.mrf.mxu0
      %v3362 = vadd.f32 0.0, %v3361
      %v3363 = vpop.f32.mrf.mxu0
      %v3364 = vpop.f32.mrf.mxu0
      %v3365 = vadd.f32 0.0, %v3364
      %v3366 = vpop.f32.mrf.mxu0
      %3367 = vmatprep.mubr.bf16.mxu0 0
      %3368 = vmatmul.mubr.bf16.gmra.mxu0 %v3276
      %v3369 = vpop.f32.mrf.mxu0
      %v3370 = vadd.f32 0.0, %v3369
      %v3371 = vpop.f32.mrf.mxu0
      %v3372 = vpop.f32.mrf.mxu0
      %v3373 = vadd.f32 0.0, %v3372
      %v3374 = vpop.f32.mrf.mxu0
      %3375 = vmatprep.mubr.bf16.mxu0 0
      %3376 = vmatmul.mubr.bf16.gmra.mxu0 %v3279
      %v3377 = vpop.f32.mrf.mxu0
      %v3378 = vadd.f32 0.0, %v3377
      %v3379 = vpop.f32.mrf.mxu0
      %v3380 = vpop.f32.mrf.mxu0
      %v3381 = vadd.f32 0.0, %v3380
      %v3382 = vpop.f32.mrf.mxu0
      %3383 = vmatprep.mubr.bf16.mxu0 0
      %3384 = vmatmul.mubr.bf16.gmra.mxu0 %v3282
      %v3385 = vpop.f32.mrf.mxu0
      %v3386 = vadd.f32 0.0, %v3385
      %v3387 = vpop.f32.mrf.mxu0
      %v3388 = vpop.f32.mrf.mxu0
      %v3389 = vadd.f32 0.0, %v3388
      %v3390 = vpop.f32.mrf.mxu0
      %3391 = vdwg.mxu0
      %v3392 = vadd.f32 %v3210, %v3322
      %v3393 = vadd.f32 %v3211, %v3325
      %v3394 = vadd.f32 %v3212, %v3330
      %v3395 = vadd.f32 %v3213, %v3333
      %v3396 = vadd.f32 %v3214, %v3338
      %v3397 = vadd.f32 %v3215, %v3341
      %v3398 = vadd.f32 %v3216, %v3346
      %v3399 = vadd.f32 %v3217, %v3349
      %v3400 = vadd.f32 %v3218, %v3354
      %v3401 = vadd.f32 %v3219, %v3357
      %v3402 = vadd.f32 %v3220, %v3362
      %v3403 = vadd.f32 %v3221, %v3365
      %v3404 = vadd.f32 %v3222, %v3370
      %v3405 = vadd.f32 %v3223, %v3373
      %v3406 = vadd.f32 %v3224, %v3378
      %v3407 = vadd.f32 %v3225, %v3381
      %v3408 = vadd.f32 %v3226, %v3386
      %v3409 = vadd.f32 %v3227, %v3389
      %v3410 = vld [vmem:[#allocation2 + $0x1a] sm:$0xff]
      %v3411 = vld [vmem:[#allocation2 + $0x22] sm:$0xff]
      %v3412 = vld [vmem:[#allocation2 + $0x2a] sm:$0xff]
      %v3413 = vld [vmem:[#allocation2 + $0x32] sm:$0xff]
      %v3414 = vld [vmem:[#allocation2 + $0x3a] sm:$0xff]
      %v3415 = vld [vmem:[#allocation2 + $0x42] sm:$0xff]
      %v3416 = vld [vmem:[#allocation2 + $0x4a] sm:$0xff]
      %v3417 = vld [vmem:[#allocation2 + $0x52] sm:$0xff]
      %v3418 = vld [vmem:[#allocation2 + $0x5a] sm:$0xff]
      %v3419 = vld [vmem:[#allocation2 + $0x62] sm:$0xff]
      %v3420 = vld [vmem:[#allocation2 + $0x6a] sm:$0xff]
      %v3421 = vld [vmem:[#allocation2 + $0x72] sm:$0xff]
      %v3422 = vld [vmem:[#allocation2 + $0x7a] sm:$0xff]
      %v3423 = vld [vmem:[#allocation2 + $0x82] sm:$0xff]
      %v3424 = vld [vmem:[#allocation2 + $0x8a] sm:$0xff]
      %v3425 = vld [vmem:[#allocation2 + $0x92] sm:$0xff]
      %v3426 = vld [vmem:[#allocation2 + $0x9a] sm:$0xff]
      %v3427 = vld [vmem:[#allocation2 + $0xa2] sm:$0xff]
      %v3428 = vpack.c.bf16 %v3411, %v3410
      %v3429 = vpack.c.bf16 %v3413, %v3412
      %v3430 = vpack.c.bf16 %v3415, %v3414
      %v3431 = vpack.c.bf16 %v3417, %v3416
      %v3432 = vpack.c.bf16 %v3419, %v3418
      %v3433 = vpack.c.bf16 %v3421, %v3420
      %v3434 = vpack.c.bf16 %v3423, %v3422
      %v3435 = vpack.c.bf16 %v3425, %v3424
      %v3436 = vpack.c.bf16 %v3427, %v3426
      %v3437 = vld [vmem:[%s3 + $0x40] sm:$0xff]
      %v3438 = vpack.c.bf16 %v3437, %v3437
      %v3440 = vsel %vm280, %v3428, 0
      %v3443 = vsel %vm280, %v3429, 0
      %v3446 = vsel %vm280, %v3430, 0
      %v3449 = vsel %vm280, %v3431, 0
      %v3452 = vsel %vm280, %v3432, 0
      %v3455 = vsel %vm280, %v3433, 0
      %v3458 = vsel %vm280, %v3434, 0
      %v3461 = vsel %vm280, %v3435, 0
      %v3464 = vsel %vm280, %v3436, 0
      %v3467 = vsel %vm411, %v3438, 0
      %3469 = vmatprep.subr.bf16.mxu0 0
      %3470 = vmatpush1.bf16.msra.mxu0 0
      %3471 = vmatprep.subr.bf16.mxu0 0
      %3472 = vmatpush1.bf16.msra.mxu0 0
      %3473 = vmatprep.subr.bf16.mxu0 0
      %3474 = vmatpush1.bf16.msra.mxu0 0
      %3475 = vmatprep.subr.bf16.mxu0 0
      %3476 = vmatpush1.bf16.msra.mxu0 0
      %3477 = vmatprep.subr.bf16.mxu0 0
      %3478 = vmatpush1.bf16.msra.mxu0 0
      %3479 = vmatprep.subr.bf16.mxu0 0
      %3480 = vmatpush1.bf16.msra.mxu0 0
      %3481 = vmatprep.subr.bf16.mxu0 0
      %3482 = vmatpush1.bf16.msra.mxu0 0
      %3483 = vmatprep.subr.bf16.mxu0 0
      %3484 = vmatpush1.bf16.msra.mxu0 %v3467
      %3485 = vmatprep.subr.bf16.mxu0 0
      %3486 = vmatpush2.bf16.msra.mxu0 0
      %3487 = vmatprep.subr.bf16.mxu0 0
      %3488 = vmatpush2.bf16.msra.mxu0 0
      %3489 = vmatprep.subr.bf16.mxu0 0
      %3490 = vmatpush2.bf16.msra.mxu0 0
      %3491 = vmatprep.subr.bf16.mxu0 0
      %3492 = vmatpush2.bf16.msra.mxu0 0
      %3493 = vmatprep.subr.bf16.mxu0 0
      %3494 = vmatpush2.bf16.msra.mxu0 0
      %3495 = vmatprep.subr.bf16.mxu0 0
      %3496 = vmatpush2.bf16.msra.mxu0 0
      %3497 = vmatprep.subr.bf16.mxu0 0
      %3498 = vmatpush2.bf16.msra.mxu0 0
      %3499 = vmatprep.subr.bf16.mxu0 0
      %3500 = vmatpush2.bf16.msra.mxu0 0
      %3501 = vmatprep.mubr.bf16.mxu0 0
      %3502 = vmatmul.mubr.bf16.gmra.mxu0 %v3440
      %v3503 = vpop.f32.mrf.mxu0
      %v3504 = vadd.f32 0.0, %v3503
      %v3505 = vpop.f32.mrf.mxu0
      %v3506 = vpop.f32.mrf.mxu0
      %v3507 = vadd.f32 0.0, %v3506
      %v3508 = vpop.f32.mrf.mxu0
      %3509 = vmatprep.mubr.bf16.mxu0 0
      %3510 = vmatmul.mubr.bf16.gmra.mxu0 %v3443
      %v3511 = vpop.f32.mrf.mxu0
      %v3512 = vadd.f32 0.0, %v3511
      %v3513 = vpop.f32.mrf.mxu0
      %v3514 = vpop.f32.mrf.mxu0
      %v3515 = vadd.f32 0.0, %v3514
      %v3516 = vpop.f32.mrf.mxu0
      %3517 = vmatprep.mubr.bf16.mxu0 0
      %3518 = vmatmul.mubr.bf16.gmra.mxu0 %v3446
      %v3519 = vpop.f32.mrf.mxu0
      %v3520 = vadd.f32 0.0, %v3519
      %v3521 = vpop.f32.mrf.mxu0
      %v3522 = vpop.f32.mrf.mxu0
      %v3523 = vadd.f32 0.0, %v3522
      %v3524 = vpop.f32.mrf.mxu0
      %3525 = vmatprep.mubr.bf16.mxu0 0
      %3526 = vmatmul.mubr.bf16.gmra.mxu0 %v3449
      %v3527 = vpop.f32.mrf.mxu0
      %v3528 = vadd.f32 0.0, %v3527
      %v3529 = vpop.f32.mrf.mxu0
      %v3530 = vpop.f32.mrf.mxu0
      %v3531 = vadd.f32 0.0, %v3530
      %v3532 = vpop.f32.mrf.mxu0
      %3533 = vmatprep.mubr.bf16.mxu0 0
      %3534 = vmatmul.mubr.bf16.gmra.mxu0 %v3452
      %v3535 = vpop.f32.mrf.mxu0
      %v3536 = vadd.f32 0.0, %v3535
      %v3537 = vpop.f32.mrf.mxu0
      %v3538 = vpop.f32.mrf.mxu0
      %v3539 = vadd.f32 0.0, %v3538
      %v3540 = vpop.f32.mrf.mxu0
      %3541 = vmatprep.mubr.bf16.mxu0 0
      %3542 = vmatmul.mubr.bf16.gmra.mxu0 %v3455
      %v3543 = vpop.f32.mrf.mxu0
      %v3544 = vadd.f32 0.0, %v3543
      %v3545 = vpop.f32.mrf.mxu0
      %v3546 = vpop.f32.mrf.mxu0
      %v3547 = vadd.f32 0.0, %v3546
      %v3548 = vpop.f32.mrf.mxu0
      %3549 = vmatprep.mubr.bf16.mxu0 0
      %3550 = vmatmul.mubr.bf16.gmra.mxu0 %v3458
      %v3551 = vpop.f32.mrf.mxu0
      %v3552 = vadd.f32 0.0, %v3551
      %v3553 = vpop.f32.mrf.mxu0
      %v3554 = vpop.f32.mrf.mxu0
      %v3555 = vadd.f32 0.0, %v3554
      %v3556 = vpop.f32.mrf.mxu0
      %3557 = vmatprep.mubr.bf16.mxu0 0
      %3558 = vmatmul.mubr.bf16.gmra.mxu0 %v3461
      %v3559 = vpop.f32.mrf.mxu0
      %v3560 = vadd.f32 0.0, %v3559
      %v3561 = vpop.f32.mrf.mxu0
      %v3562 = vpop.f32.mrf.mxu0
      %v3563 = vadd.f32 0.0, %v3562
      %v3564 = vpop.f32.mrf.mxu0
      %3565 = vmatprep.mubr.bf16.mxu0 0
      %3566 = vmatmul.mubr.bf16.gmra.mxu0 %v3464
      %v3567 = vpop.f32.mrf.mxu0
      %v3568 = vadd.f32 0.0, %v3567
      %v3569 = vpop.f32.mrf.mxu0
      %v3570 = vpop.f32.mrf.mxu0
      %v3571 = vadd.f32 0.0, %v3570
      %v3572 = vpop.f32.mrf.mxu0
      %3573 = vdwg.mxu0
      %v3574 = vadd.f32 %v3392, %v3504
      %v3575 = vadd.f32 %v3393, %v3507
      %v3576 = vadd.f32 %v3394, %v3512
      %v3577 = vadd.f32 %v3395, %v3515
      %v3578 = vadd.f32 %v3396, %v3520
      %v3579 = vadd.f32 %v3397, %v3523
      %v3580 = vadd.f32 %v3398, %v3528
      %v3581 = vadd.f32 %v3399, %v3531
      %v3582 = vadd.f32 %v3400, %v3536
      %v3583 = vadd.f32 %v3401, %v3539
      %v3584 = vadd.f32 %v3402, %v3544
      %v3585 = vadd.f32 %v3403, %v3547
      %v3586 = vadd.f32 %v3404, %v3552
      %v3587 = vadd.f32 %v3405, %v3555
      %v3588 = vadd.f32 %v3406, %v3560
      %v3589 = vadd.f32 %v3407, %v3563
      %v3590 = vadd.f32 %v3408, %v3568
      %v3591 = vadd.f32 %v3409, %v3571
      %v3592 = vld [vmem:[%s4] sm:$0x1]
      %v3594 = vlaneseq
      %v3595 = vshrl.u32 %v3594, 7
      %v3596 = vsub.s32 0, %v3595
      %v3597 = vrot.slane %v3592, %v3596
      %v3599 = vadd.f32 %v3574, %v3597
      %v3600 = vadd.f32 %v3575, %v3597
      %v3601 = vadd.f32 %v3576, %v3597
      %v3602 = vadd.f32 %v3577, %v3597
      %v3603 = vadd.f32 %v3578, %v3597
      %v3604 = vadd.f32 %v3579, %v3597
      %v3605 = vadd.f32 %v3580, %v3597
      %v3606 = vadd.f32 %v3581, %v3597
      %v3607 = vadd.f32 %v3582, %v3597
      %v3608 = vadd.f32 %v3583, %v3597
      %v3609 = vadd.f32 %v3584, %v3597
      %v3610 = vadd.f32 %v3585, %v3597
      %v3611 = vadd.f32 %v3586, %v3597
      %v3612 = vadd.f32 %v3587, %v3597
      %v3613 = vadd.f32 %v3588, %v3597
      %v3614 = vadd.f32 %v3589, %v3597
      %v3615 = vadd.f32 %v3590, %v3597
      %v3616 = vadd.f32 %v3591, %v3597
      %v3617 = vmax.f32 %v3599, 0.0
      %v3618 = vmax.f32 %v3600, 0.0
      %v3619 = vmax.f32 %v3601, 0.0
      %v3620 = vmax.f32 %v3602, 0.0
      %v3621 = vmax.f32 %v3603, 0.0
      %v3622 = vmax.f32 %v3604, 0.0
      %v3623 = vmax.f32 %v3605, 0.0
      %v3624 = vmax.f32 %v3606, 0.0
      %v3625 = vmax.f32 %v3607, 0.0
      %v3626 = vmax.f32 %v3608, 0.0
      %v3627 = vmax.f32 %v3609, 0.0
      %v3628 = vmax.f32 %v3610, 0.0
      %v3629 = vmax.f32 %v3611, 0.0
      %v3630 = vmax.f32 %v3612, 0.0
      %v3631 = vmax.f32 %v3613, 0.0
      %v3632 = vmax.f32 %v3614, 0.0
      %v3633 = vmax.f32 %v3615, 0.0
      %v3634 = vmax.f32 %v3616, 0.0
      %3635 = vst.msk [vmem:[#allocation3] sm:$0xff] %vm303, %v3617
      %3636 = vst.msk [vmem:[#allocation3 + $0x8] sm:$0xff] %vm303, %v3618
      %3637 = vst.msk [vmem:[#allocation3 + $0x10] sm:$0xff] %vm303, %v3619
      %3638 = vst.msk [vmem:[#allocation3 + $0x18] sm:$0xff] %vm303, %v3620
      %3639 = vst.msk [vmem:[#allocation3 + $0x20] sm:$0xff] %vm303, %v3621
      %3640 = vst.msk [vmem:[#allocation3 + $0x28] sm:$0xff] %vm303, %v3622
      %3641 = vst.msk [vmem:[#allocation3 + $0x30] sm:$0xff] %vm303, %v3623
      %3642 = vst.msk [vmem:[#allocation3 + $0x38] sm:$0xff] %vm303, %v3624
      %3643 = vst.msk [vmem:[#allocation3 + $0x40] sm:$0xff] %vm303, %v3625
      %3644 = vst.msk [vmem:[#allocation3 + $0x48] sm:$0xff] %vm303, %v3626
      %3645 = vst.msk [vmem:[#allocation3 + $0x50] sm:$0xff] %vm303, %v3627
      %3646 = vst.msk [vmem:[#allocation3 + $0x58] sm:$0xff] %vm303, %v3628
      %3647 = vst.msk [vmem:[#allocation3 + $0x60] sm:$0xff] %vm303, %v3629
      %3648 = vst.msk [vmem:[#allocation3 + $0x68] sm:$0xff] %vm303, %v3630
      %3649 = vst.msk [vmem:[#allocation3 + $0x70] sm:$0xff] %vm303, %v3631
      %3650 = vst.msk [vmem:[#allocation3 + $0x78] sm:$0xff] %vm303, %v3632
      %3651 = vst.msk [vmem:[#allocation3 + $0x80] sm:$0xff] %vm303, %v3633
      %3652 = vst.msk [vmem:[#allocation3 + $0x88] sm:$0xff] %vm303, %v3634
      %v3653 = vld [vmem:[#allocation3] sm:$0xff]
      %v3654 = vld [vmem:[#allocation3 + $0x8] sm:$0xff]
      %v3655 = vld [vmem:[#allocation3 + $0x10] sm:$0xff]
      %v3656 = vld [vmem:[#allocation3 + $0x18] sm:$0xff]
      %v3657 = vld [vmem:[#allocation3 + $0x20] sm:$0xff]
      %v3658 = vld [vmem:[#allocation3 + $0x28] sm:$0xff]
      %v3659 = vld [vmem:[#allocation3 + $0x30] sm:$0xff]
      %v3660 = vld [vmem:[#allocation3 + $0x38] sm:$0xff]
      %v3661 = vld [vmem:[#allocation3 + $0x40] sm:$0xff]
      %v3662 = vld [vmem:[#allocation3 + $0x48] sm:$0xff]
      %v3663 = vld [vmem:[#allocation3 + $0x50] sm:$0xff]
      %v3664 = vld [vmem:[#allocation3 + $0x58] sm:$0xff]
      %v3665 = vld [vmem:[#allocation3 + $0x60] sm:$0xff]
      %v3666 = vld [vmem:[#allocation3 + $0x68] sm:$0xff]
      %v3667 = vld [vmem:[#allocation3 + $0x70] sm:$0xff]
      %v3668 = vld [vmem:[#allocation3 + $0x78] sm:$0xff]
      %v3669 = vld [vmem:[#allocation3 + $0x80] sm:$0xff]
      %v3670 = vld [vmem:[#allocation3 + $0x88] sm:$0xff]
      %v3671 = vld [vmem:[#allocation3 + $0x90] sm:$0xff]
      %v3672 = vld [vmem:[#allocation3 + $0x98] sm:$0xff]
      %v3673 = vld [vmem:[#allocation3 + $0xa0] sm:$0xff]
      %v3674 = vld [vmem:[#allocation3 + $0xa8] sm:$0xff]
      %v3675 = vpack.c.bf16 %v3654, %v3653
      %v3676 = vpack.c.bf16 %v3656, %v3655
      %v3677 = vpack.c.bf16 %v3658, %v3657
      %v3678 = vpack.c.bf16 %v3660, %v3659
      %v3679 = vpack.c.bf16 %v3662, %v3661
      %v3680 = vpack.c.bf16 %v3664, %v3663
      %v3681 = vpack.c.bf16 %v3666, %v3665
      %v3682 = vpack.c.bf16 %v3668, %v3667
      %v3683 = vpack.c.bf16 %v3670, %v3669
      %v3684 = vpack.c.bf16 %v3672, %v3671
      %v3685 = vpack.c.bf16 %v3674, %v3673
      %v3686 = vld [vmem:[%s5] sm:$0xff]
      %v3687 = vld [vmem:[%s5 + $0x8] sm:$0xff]
      %v3688 = vpack.c.bf16 %v3687, %v3686
      %v3689 = vld [vmem:[%s6] sm:$0x1]
      %v3691 = vlaneseq
      %v3692 = vshrl.u32 %v3691, 7
      %v3693 = vsub.s32 0, %v3692
      %v3694 = vrot.slane %v3689, %v3693
      %v3697 = vsel %vm303, %v3675, 0
      %v3700 = vsel %vm303, %v3676, 0
      %v3703 = vsel %vm303, %v3677, 0
      %v3706 = vsel %vm303, %v3678, 0
      %v3709 = vsel %vm303, %v3679, 0
      %v3712 = vsel %vm303, %v3680, 0
      %v3715 = vsel %vm303, %v3681, 0
      %v3718 = vsel %vm303, %v3682, 0
      %v3721 = vsel %vm303, %v3683, 0
      %v3724 = vsel %vm303, %v3684, 0
      %v3727 = vsel %vm303, %v3685, 0
      %3729 = vmatprep.subr.bf16.mxu0 0
      %3730 = vmatpush1.bf16.msra.mxu0 0
      %3731 = vmatprep.subr.bf16.mxu0 0
      %3732 = vmatpush1.bf16.msra.mxu0 0
      %3733 = vmatprep.subr.bf16.mxu0 0
      %3734 = vmatpush1.bf16.msra.mxu0 0
      %3735 = vmatprep.subr.bf16.mxu0 0
      %3736 = vmatpush1.bf16.msra.mxu0 0
      %3737 = vmatprep.subr.bf16.mxu0 0
      %3738 = vmatpush1.bf16.msra.mxu0 0
      %3739 = vmatprep.subr.bf16.mxu0 0
      %3740 = vmatpush1.bf16.msra.mxu0 0
      %3741 = vmatprep.subr.bf16.mxu0 0
      %3742 = vmatpush1.bf16.msra.mxu0 0
      %3743 = vmatprep.subr.bf16.mxu0 0
      %3744 = vmatpush1.bf16.msra.mxu0 %v3688
      %3745 = vmatprep.subr.bf16.mxu0 0
      %3746 = vmatpush2.bf16.msra.mxu0 0
      %3747 = vmatprep.subr.bf16.mxu0 0
      %3748 = vmatpush2.bf16.msra.mxu0 0
      %3749 = vmatprep.subr.bf16.mxu0 0
      %3750 = vmatpush2.bf16.msra.mxu0 0
      %3751 = vmatprep.subr.bf16.mxu0 0
      %3752 = vmatpush2.bf16.msra.mxu0 0
      %3753 = vmatprep.subr.bf16.mxu0 0
      %3754 = vmatpush2.bf16.msra.mxu0 0
      %3755 = vmatprep.subr.bf16.mxu0 0
      %3756 = vmatpush2.bf16.msra.mxu0 0
      %3757 = vmatprep.subr.bf16.mxu0 0
      %3758 = vmatpush2.bf16.msra.mxu0 0
      %3759 = vmatprep.subr.bf16.mxu0 0
      %3760 = vmatpush2.bf16.msra.mxu0 0
      %3761 = vmatprep.mubr.bf16.mxu0 0
      %3762 = vmatmul.mubr.bf16.gmra.mxu0 %v3697
      %v3763 = vpop.f32.mrf.mxu0
      %v3764 = vadd.f32 %v3694, %v3763
      %v3765 = vpop.f32.mrf.mxu0
      %v3766 = vpop.f32.mrf.mxu0
      %v3767 = vadd.f32 %v3694, %v3766
      %v3768 = vpop.f32.mrf.mxu0
      %3769 = vmatprep.mubr.bf16.mxu0 0
      %3770 = vmatmul.mubr.bf16.gmra.mxu0 %v3700
      %v3771 = vpop.f32.mrf.mxu0
      %v3772 = vadd.f32 %v3694, %v3771
      %v3773 = vpop.f32.mrf.mxu0
      %v3774 = vpop.f32.mrf.mxu0
      %v3775 = vadd.f32 %v3694, %v3774
      %v3776 = vpop.f32.mrf.mxu0
      %3777 = vmatprep.mubr.bf16.mxu0 0
      %3778 = vmatmul.mubr.bf16.gmra.mxu0 %v3703
      %v3779 = vpop.f32.mrf.mxu0
      %v3780 = vadd.f32 %v3694, %v3779
      %v3781 = vpop.f32.mrf.mxu0
      %v3782 = vpop.f32.mrf.mxu0
      %v3783 = vadd.f32 %v3694, %v3782
      %v3784 = vpop.f32.mrf.mxu0
      %3785 = vmatprep.mubr.bf16.mxu0 0
      %3786 = vmatmul.mubr.bf16.gmra.mxu0 %v3706
      %v3787 = vpop.f32.mrf.mxu0
      %v3788 = vadd.f32 %v3694, %v3787
      %v3789 = vpop.f32.mrf.mxu0
      %v3790 = vpop.f32.mrf.mxu0
      %v3791 = vadd.f32 %v3694, %v3790
      %v3792 = vpop.f32.mrf.mxu0
      %3793 = vmatprep.mubr.bf16.mxu0 0
      %3794 = vmatmul.mubr.bf16.gmra.mxu0 %v3709
      %v3795 = vpop.f32.mrf.mxu0
      %v3796 = vadd.f32 %v3694, %v3795
      %v3797 = vpop.f32.mrf.mxu0
      %v3798 = vpop.f32.mrf.mxu0
      %v3799 = vadd.f32 %v3694, %v3798
      %v3800 = vpop.f32.mrf.mxu0
      %3801 = vmatprep.mubr.bf16.mxu0 0
      %3802 = vmatmul.mubr.bf16.gmra.mxu0 %v3712
      %v3803 = vpop.f32.mrf.mxu0
      %v3804 = vadd.f32 %v3694, %v3803
      %v3805 = vpop.f32.mrf.mxu0
      %v3806 = vpop.f32.mrf.mxu0
      %v3807 = vadd.f32 %v3694, %v3806
      %v3808 = vpop.f32.mrf.mxu0
      %3809 = vmatprep.mubr.bf16.mxu0 0
      %3810 = vmatmul.mubr.bf16.gmra.mxu0 %v3715
      %v3811 = vpop.f32.mrf.mxu0
      %v3812 = vadd.f32 %v3694, %v3811
      %v3813 = vpop.f32.mrf.mxu0
      %v3814 = vpop.f32.mrf.mxu0
      %v3815 = vadd.f32 %v3694, %v3814
      %v3816 = vpop.f32.mrf.mxu0
      %3817 = vmatprep.mubr.bf16.mxu0 0
      %3818 = vmatmul.mubr.bf16.gmra.mxu0 %v3718
      %v3819 = vpop.f32.mrf.mxu0
      %v3820 = vadd.f32 %v3694, %v3819
      %v3821 = vpop.f32.mrf.mxu0
      %v3822 = vpop.f32.mrf.mxu0
      %v3823 = vadd.f32 %v3694, %v3822
      %v3824 = vpop.f32.mrf.mxu0
      %3825 = vmatprep.mubr.bf16.mxu0 0
      %3826 = vmatmul.mubr.bf16.gmra.mxu0 %v3721
      %v3827 = vpop.f32.mrf.mxu0
      %v3828 = vadd.f32 %v3694, %v3827
      %v3829 = vpop.f32.mrf.mxu0
      %v3830 = vpop.f32.mrf.mxu0
      %v3831 = vadd.f32 %v3694, %v3830
      %v3832 = vpop.f32.mrf.mxu0
      %3833 = vmatprep.mubr.bf16.mxu0 0
      %3834 = vmatmul.mubr.bf16.gmra.mxu0 %v3724
      %v3835 = vpop.f32.mrf.mxu0
      %v3836 = vadd.f32 %v3694, %v3835
      %v3837 = vpop.f32.mrf.mxu0
      %v3838 = vpop.f32.mrf.mxu0
      %v3839 = vadd.f32 %v3694, %v3838
      %v3840 = vpop.f32.mrf.mxu0
      %3841 = vmatprep.mubr.bf16.mxu0 0
      %3842 = vmatmul.mubr.bf16.gmra.mxu0 %v3727
      %v3843 = vpop.f32.mrf.mxu0
      %v3844 = vadd.f32 %v3694, %v3843
      %v3845 = vpop.f32.mrf.mxu0
      %v3846 = vpop.f32.mrf.mxu0
      %v3847 = vadd.f32 %v3694, %v3846
      %v3848 = vpop.f32.mrf.mxu0
      %3849 = vdwg.mxu0
      %3850 = vst.msk [vmem:[%s278] sm:$0xff] %vm303, %v3764
      %3851 = vst.msk [vmem:[%s278 + $0x8] sm:$0xff] %vm303, %v3767
      %3852 = vst.msk [vmem:[%s278 + $0x10] sm:$0xff] %vm303, %v3772
      %3853 = vst.msk [vmem:[%s278 + $0x18] sm:$0xff] %vm303, %v3775
      %3854 = vst.msk [vmem:[%s278 + $0x20] sm:$0xff] %vm303, %v3780
      %3855 = vst.msk [vmem:[%s278 + $0x28] sm:$0xff] %vm303, %v3783
      %3856 = vst.msk [vmem:[%s278 + $0x30] sm:$0xff] %vm303, %v3788
      %3857 = vst.msk [vmem:[%s278 + $0x38] sm:$0xff] %vm303, %v3791
      %3858 = vst.msk [vmem:[%s278 + $0x40] sm:$0xff] %vm303, %v3796
      %3859 = vst.msk [vmem:[%s278 + $0x48] sm:$0xff] %vm303, %v3799
      %3860 = vst.msk [vmem:[%s278 + $0x50] sm:$0xff] %vm303, %v3804
      %3861 = vst.msk [vmem:[%s278 + $0x58] sm:$0xff] %vm303, %v3807
      %3862 = vst.msk [vmem:[%s278 + $0x60] sm:$0xff] %vm303, %v3812
      %3863 = vst.msk [vmem:[%s278 + $0x68] sm:$0xff] %vm303, %v3815
      %3864 = vst.msk [vmem:[%s278 + $0x70] sm:$0xff] %vm303, %v3820
      %3865 = vst.msk [vmem:[%s278 + $0x78] sm:$0xff] %vm303, %v3823
      %3866 = vst.msk [vmem:[%s278 + $0x80] sm:$0xff] %vm303, %v3828
      %3867 = vst.msk [vmem:[%s278 + $0x88] sm:$0xff] %vm303, %v3831
      %3868 = vst.msk [vmem:[%s278 + $0x90] sm:$0xff] %vm303, %v3836
      %3869 = vst.msk [vmem:[%s278 + $0x98] sm:$0xff] %vm303, %v3839
      %3870 = vst.msk [vmem:[%s278 + $0xa0] sm:$0xff] %vm303, %v3844
      %3871 = vst.msk [vmem:[%s278 + $0xa8] sm:$0xff] %vm303, %v3847
      %p3872 = scmp.lt.s32.totalorder %s18, 1
      %s3873 = scalar_select %p3872, %s18, 1
      %s3874 = smul.addr %s3873, 22
      %s3875 = smul.addr %s3874, 8
      %s3876 = scalar_lea.vmem %s7, %s3875
      // Predicated region
      $region49: #{_features_neck_call.1} parent=47 // pred_check
        %p3877 = pneg %p188
      $region50: #{_features_neck_call.1} parent=47 // pred_check_branch
        %3879 = sbr.rel (%p3877) target = $region52
      $region51: #{_features_neck_call.1} parent=47 // pred_region
        _
      $region52: #{_features_neck_call.1} parent=47 // pred_fallthru
        _
    $region48: #{_features_neck_call.1} parent=5 // pred_fallthru
      _
    %p3880 = scmp.le.s32.totalorder 2, %s13
    // Predicated region
    $region53: #{_features_neck_call.1} parent=5 // pred_check
      %p3881 = pneg %p3880
    $region54: #{_features_neck_call.1} parent=5 // pred_check_branch
      %3883 = sbr.rel (%p3881) target = $region56
    $region55: #{_features_neck_call.1} parent=5 // pred_region
      %s3884 = ssub.s32 %s13, 2
      // Predicated region
      $region57: #{_features_neck_call.1} parent=55 // pred_check
        %p3885 = pneg %p194
      $region58: #{_features_neck_call.1} parent=55 // pred_check_branch
        %3887 = sbr.rel (%p3885) target = $region60
      $region59: #{_features_neck_call.1} parent=55 // pred_region
        %p3888 = scmp.lt.s32.totalorder %s19, 1
        %s3889 = scalar_select %p3888, %s19, 1
        %s3890 = smul.addr %s3889, 22
        %s3891 = smul.addr %s3890, 8
        %s3892 = scalar_lea.vmem %s7, %s3891
      $region60: #{_features_neck_call.1} parent=55 // pred_fallthru
        _
    $region56: #{_features_neck_call.1} parent=5 // pred_fallthru
      _
  $region6: #{_features_neck_call.1} parent=0 // loop_footer
    %s17 = sadd.s32 1, %s13
  $region7: #{_features_neck_call.1} parent=0 // loop_footer_branch
    %12 = sbr.rel target = $region3
  $region8: #{_features_neck_call.1} parent=0 // loop_exit
    _

</llo_original>
